<compile_context>
chip_gen: v7x
topology: tpu7x:2x2x1
jax: 0.10.0
libtpu: 0.0.40
codegen_flags: <defaults>
</compile_context>

<pallas_src>
import functools
import math

import jax
import jax.numpy as jnp
import numpy as np
from jax import lax
from jax.experimental import pallas as pl
from jax.experimental.pallas import tpu as pltpu


def _round_up(x, m):
    return (x + m - 1) // m * m


# ----------------------------- Pallas kernel -----------------------------------
def _lstm_chunk_kernel(gx_ref, whh_ref, len_ref, out_ref, h_sc, c_sc, *,
                       h_pad, tc, emit_seq):
    """One time-chunk of one LSTM layer.

    Grid = (batch_chunks [parallel], time_chunks [arbitrary]).
    gx_ref : (tc, bb, 4*h_pad)  precomputed x-projection + bias (padded per gate)
    whh_ref: (h_pad, 4*h_pad)   recurrent weight, transposed + padded
    len_ref: (bb, 1) int32      true sequence lengths (0 for padded batch rows)
    out_ref: (tc, bb, h_pad) if emit_seq else (bb, h_pad)
    h_sc/c_sc: (bb, h_pad) f32  state carries across time chunks
    """
    t_idx = pl.program_id(1)

    @pl.when(t_idx == 0)
    def _():
        h_sc[...] = jnp.zeros_like(h_sc)
        c_sc[...] = jnp.zeros_like(c_sc)

    whh = whh_ref[...]                         # (h_pad, 4*h_pad), kept in vregs
    lens = len_ref[...]                        # (bb, 1) int32, loaded once/chunk
    t0 = t_idx * tc
    Hp = h_pad

    def sigm(x):
        # logistic via tanh: one EUP op per gate (instead of exp + divide)
        return 0.5 * (jnp.tanh(0.5 * x) + 1.0)

    def step(i, carry):
        h, c = carry
        gates = gx_ref[i] + jnp.dot(h, whh, preferred_element_type=jnp.float32)
        i_g = sigm(gates[:, 0 * Hp:1 * Hp])
        f_g = sigm(gates[:, 1 * Hp:2 * Hp])
        g_g = jnp.tanh(gates[:, 2 * Hp:3 * Hp])
        o_g = sigm(gates[:, 3 * Hp:4 * Hp])
        c_new = f_g * c + i_g * g_g
        h_new = o_g * jnp.tanh(c_new)
        # packed-sequence semantics: no update once t >= length
        valid = lens > (t0 + i)                # (bb, 1) bool
        c = jnp.where(valid, c_new, c)
        h = jnp.where(valid, h_new, h)
        if emit_seq:
            out_ref[i] = h                     # lane-dense (bb, h_pad) store
        return h, c

    h, c = lax.fori_loop(0, tc, step, (h_sc[...], c_sc[...]), unroll=True)
    h_sc[...] = h
    c_sc[...] = c
    if not emit_seq:
        # accumulator output: final masked h == h at t = len-1 after last chunk
        out_ref[...] = h


def _run_layer(gx, whh_p, lens_p, *, h_pad, tc, bb, emit_seq):
    """gx: (T_pad, B_pad, 4*h_pad); whh_p: (h_pad, 4*h_pad); lens_p: (B_pad, 1)."""
    T_pad, B_pad, G = gx.shape
    nt = T_pad // tc
    nb = B_pad // bb

    kernel = functools.partial(_lstm_chunk_kernel, h_pad=h_pad, tc=tc,
                               emit_seq=emit_seq)
    if emit_seq:
        out_shape = jax.ShapeDtypeStruct((T_pad, B_pad, h_pad), jnp.float32)
        out_spec = pl.BlockSpec((tc, bb, h_pad), lambda b, t: (t, b, 0))
    else:
        out_shape = jax.ShapeDtypeStruct((B_pad, h_pad), jnp.float32)
        out_spec = pl.BlockSpec((bb, h_pad), lambda b, t: (b, 0))

    return pl.pallas_call(
        kernel,
        out_shape=out_shape,
        grid_spec=pltpu.PrefetchScalarGridSpec(
            num_scalar_prefetch=0,
            grid=(nb, nt),
            in_specs=[
                pl.BlockSpec((tc, bb, G), lambda b, t: (t, b, 0)),
                pl.BlockSpec((h_pad, G), lambda b, t: (0, 0)),
                pl.BlockSpec((bb, 1), lambda b, t: (b, 0)),
            ],
            out_specs=out_spec,
            scratch_shapes=[
                pltpu.VMEM((bb, h_pad), jnp.float32),   # h carry
                pltpu.VMEM((bb, h_pad), jnp.float32),   # c carry
            ],
        ),
        compiler_params=pltpu.CompilerParams(
            dimension_semantics=("parallel", "arbitrary"),
            vmem_limit_bytes=64 * 1024 * 1024),
    )(gx, whh_p, lens_p)


# ------------------------------ full forward ------------------------------------
def lstm_forward_pallas(x_btd, lengths, params, *, time_chunk=8, batch_chunk=None):
    """x_btd: (B, T, D) f32, lengths: (B,) int.  Returns (B, H): top-layer h at
    t = len[i]-1 for every sequence (PyTorch module forward)."""
    x = jnp.asarray(x_btd, jnp.float32)
    B, T, _ = x.shape
    H = params[0][1].shape[1]

    H_pad = _round_up(H, 128)                  # lane alignment (per gate)
    B_pad = _round_up(B, 8)                    # sublane alignment
    tc = max(1, min(time_chunk, T))
    T_pad = _round_up(T, tc)
    bb = B_pad if batch_chunk is None else batch_chunk
    assert B_pad % bb == 0 and bb % 8 == 0

    # time-major, pad batch/time (padded rows get length 0 -> never updated)
    x_tbd = jnp.transpose(x, (1, 0, 2))                                # (T, B, D)
    x_tbd = jnp.pad(x_tbd, ((0, T_pad - T), (0, B_pad - B), (0, 0)))
    lens = jnp.asarray(lengths, jnp.int32).reshape(-1)
    lens_p = jnp.pad(lens, (0, B_pad - B)).reshape(B_pad, 1)

    num_layers = len(params)
    layer_in = x_tbd                                  # (T_pad, B_pad, d_in|H_pad)
    out = None
    for li, (w_ih, w_hh, b_ih, b_hh) in enumerate(params):
        d_in = w_ih.shape[1]
        # --- hoisted input projection: one big MXU-friendly matmul in XLA ---
        gx = jnp.einsum('tbd,gd->tbg', layer_in[..., :d_in],
                        jnp.asarray(w_ih, jnp.float32))                # (T,B,4H)
        gx = gx + (jnp.asarray(b_ih, jnp.float32)
                   + jnp.asarray(b_hh, jnp.float32))
        # pad gate dim per-gate to H_pad so in-kernel slices are 128-lane aligned;
        # zero bias on padded gate lanes keeps padded h/c exactly zero.
        gx = gx.reshape(T_pad, B_pad, 4, H)
        if H_pad != H:
            gx = jnp.pad(gx, ((0, 0), (0, 0), (0, 0), (0, H_pad - H)))
        gx = gx.reshape(T_pad, B_pad, 4 * H_pad)

        whh_t = jnp.asarray(w_hh, jnp.float32).T.reshape(H, 4, H)      # in,gate,out
        if H_pad != H:
            whh_t = jnp.pad(whh_t, ((0, H_pad - H), (0, 0), (0, H_pad - H)))
        whh_p = whh_t.reshape(H_pad, 4 * H_pad)

        last = li == num_layers - 1
        if last:
            out = _run_layer(gx, whh_p, lens_p, h_pad=H_pad, tc=tc, bb=bb,
                             emit_seq=False)          # (B_pad, H_pad) final h
        else:
            layer_in = _run_layer(gx, whh_p, lens_p, h_pad=H_pad, tc=tc, bb=bb,
                                  emit_seq=True)      # (T_pad, B_pad, H_pad)
    return out[:B, :H]


# ---------------------- pure-JAX reference (for checking) ----------------------
def lstm_forward_ref(x_btd, lengths, params):
    x = jnp.asarray(x_btd, jnp.float32)
    B, T, _ = x.shape
    lens = jnp.asarray(lengths, jnp.int32)
    for (w_ih, w_hh, b_ih, b_hh) in params:
        H = w_hh.shape[1]

        def step(carry, inp):
            h, c = carry
            x_t, t = inp
            gates = x_t @ w_ih.T + h @ w_hh.T + b_ih + b_hh
            i_g = jax.nn.sigmoid(gates[:, 0 * H:1 * H])
            f_g = jax.nn.sigmoid(gates[:, 1 * H:2 * H])
            g_g = jnp.tanh(gates[:, 2 * H:3 * H])
            o_g = jax.nn.sigmoid(gates[:, 3 * H:4 * H])
            c_new = f_g * c + i_g * g_g
            h_new = o_g * jnp.tanh(c_new)
            valid = (lens > t)[:, None]
            c = jnp.where(valid, c_new, c)
            h = jnp.where(valid, h_new, h)
            return (h, c), h

        h0 = jnp.zeros((B, H), jnp.float32)
        c0 = jnp.zeros((B, H), jnp.float32)
        xs = (jnp.transpose(x, (1, 0, 2)), jnp.arange(T))
        _, hs = lax.scan(step, (h0, c0), xs)
        x = jnp.transpose(hs, (1, 0, 2))
    idx = (lens - 1)[:, None, None]
    return jnp.take_along_axis(x, idx, axis=1)[:, 0, :]


# ------------------------------ parameter init ---------------------------------
def init_lstm_params(key, d_model, hidden_size, num_layers):
    """PyTorch nn.LSTM init: U(-1/sqrt(H), 1/sqrt(H)) for all tensors."""
    k = 1.0 / math.sqrt(hidden_size)
    params = []
    for layer in range(num_layers):
        d_in = d_model if layer == 0 else hidden_size
        key, k1, k2, k3, k4 = jax.random.split(key, 5)
        w_ih = jax.random.uniform(k1, (4 * hidden_size, d_in), jnp.float32, -k, k)
        w_hh = jax.random.uniform(k2, (4 * hidden_size, hidden_size), jnp.float32, -k, k)
        b_ih = jax.random.uniform(k3, (4 * hidden_size,), jnp.float32, -k, k)
        b_hh = jax.random.uniform(k4, (4 * hidden_size,), jnp.float32, -k, k)
        params.append((w_ih, w_hh, b_ih, b_hh))
    return params


if __name__ == "__main__":
    B, T, D_MODEL, HIDDEN, NUM_LAYERS = 2, 8, 16, 32, 2

    key = jax.random.PRNGKey(0)
    key, kx = jax.random.split(key)
    x = jax.random.normal(kx, (B, T, D_MODEL), jnp.float32)
    lengths = jnp.array([8, 5], dtype=jnp.int32)        # true sequence lengths

    params = init_lstm_params(key, D_MODEL, HIDDEN, NUM_LAYERS)

    fwd = jax.jit(lstm_forward_pallas)
    out = jax.block_until_ready(fwd(x, lengths, params))

    ref = jax.block_until_ready(lstm_forward_ref(x, lengths, params))
    # tanh-form sigmoid + padded MXU accumulation order => allow a hair of slack
    np.testing.assert_allclose(np.asarray(out), np.asarray(ref),
                               rtol=1e-4, atol=1e-5)
    assert out.shape == (B, HIDDEN)
    print("KERNEL_OK")
</pallas_src>

<mosaic_0001>
module attributes {stable_mosaic.version = 11 : i64} {
  func.func @_lstm_chunk_kernel(%arg0: i32, %arg1: i32, %arg2: memref<8x8x512xf32, #tpu.memory_space<vmem>>, %arg3: memref<128x512xf32, #tpu.memory_space<vmem>>, %arg4: memref<8x1xi32, #tpu.memory_space<vmem>>, %arg5: memref<8x8x128xf32, #tpu.memory_space<vmem>>, %arg6: memref<8x128xf32, #tpu.memory_space<vmem>>, %arg7: memref<8x128xf32, #tpu.memory_space<vmem>>) attributes {dimension_semantics = [#tpu.dimension_semantics<parallel>, #tpu.dimension_semantics<arbitrary>], iteration_bounds = array<i64: 1, 1>, scalar_prefetch = 0 : i64, scratch_operands = 2 : i64, tpu.core_type = #tpu.core_type<tc>, window_params = [{transform_indices = @transform_0, window_bounds = array<i64: 8, 8, 512>}, {pipeline_mode = #tpu.pipeline_mode<synchronous>, transform_indices = @transform_1, window_bounds = array<i64: 128, 512>}, {transform_indices = @transform_2, window_bounds = array<i64: 8, 1>}, {transform_indices = @transform_3, window_bounds = array<i64: 8, 8, 128>}]} {
    %c0_i32 = arith.constant 0 : i32
    %0 = arith.cmpi eq, %arg1, %c0_i32 : i32
    %1 = arith.extui %0 : i1 to i32
    %c0_i32_0 = arith.constant 0 : i32
    %2 = arith.cmpi ne, %1, %c0_i32_0 : i32
    scf.if %2 {
      %cst_125 = arith.constant 0.000000e+00 : f32
      %402 = vector.broadcast %cst_125 : f32 to vector<8x128xf32>
      %c0_126 = arith.constant 0 : index
      %c0_127 = arith.constant 0 : index
      %403 = vector.load %arg6[%c0_126, %c0_127] : memref<8x128xf32, #tpu.memory_space<vmem>>, vector<8x128xf32>
      tpu.vector_store %arg6[%c0_126, %c0_127], %402 {strides = array<i32>} : memref<8x128xf32, #tpu.memory_space<vmem>>, vector<8x128xf32>,
      %cst_128 = arith.constant 0.000000e+00 : f32
      %404 = vector.broadcast %cst_128 : f32 to vector<8x128xf32>
      %c0_129 = arith.constant 0 : index
      %c0_130 = arith.constant 0 : index
      %405 = vector.load %arg7[%c0_129, %c0_130] : memref<8x128xf32, #tpu.memory_space<vmem>>, vector<8x128xf32>
      tpu.vector_store %arg7[%c0_129, %c0_130], %404 {strides = array<i32>} : memref<8x128xf32, #tpu.memory_space<vmem>>, vector<8x128xf32>,
    } else {
    }
    %c0 = arith.constant 0 : index
    %c0_1 = arith.constant 0 : index
    %3 = vector.load %arg3[%c0, %c0_1] : memref<128x512xf32, #tpu.memory_space<vmem>>, vector<128x512xf32>
    %c0_2 = arith.constant 0 : index
    %c0_3 = arith.constant 0 : index
    %4 = vector.load %arg4[%c0_2, %c0_3] : memref<8x1xi32, #tpu.memory_space<vmem>>, vector<8x1xi32>
    %c8_i32 = arith.constant 8 : i32
    %5 = arith.muli %arg1, %c8_i32 : i32
    %c0_4 = arith.constant 0 : index
    %c0_5 = arith.constant 0 : index
    %6 = vector.load %arg6[%c0_4, %c0_5] : memref<8x128xf32, #tpu.memory_space<vmem>>, vector<8x128xf32>
    %c0_6 = arith.constant 0 : index
    %c0_7 = arith.constant 0 : index
    %7 = vector.load %arg7[%c0_6, %c0_7] : memref<8x128xf32, #tpu.memory_space<vmem>>, vector<8x128xf32>
    %c0_i32_8 = arith.constant 0 : i32
    %8 = arith.index_cast %c0_i32_8 : i32 to index
    %c0_9 = arith.constant 0 : index
    %c0_10 = arith.constant 0 : index
    %9 = vector.load %arg2[%8, %c0_9, %c0_10] : memref<8x8x512xf32, #tpu.memory_space<vmem>>, vector<1x8x512xf32>
    %10 = vector.shape_cast %9 : vector<1x8x512xf32> to vector<8x512xf32>
    %cst = arith.constant dense<0.000000e+00> : vector<8x512xf32>
    %11 = tpu.matmul %6, %3, %cst {dimension_numbers = #tpu.dot_dimension_numbers<[1], [0], [0], [1], [0, 0, 1, 1], [], []>} : vector<8x128xf32>, vector<128x512xf32>, vector<8x512xf32> -> vector<8x512xf32>
    %12 = arith.addf %10, %11 : vector<8x512xf32>
    %13 = vector.extract_strided_slice %12 {offsets = [0, 0], sizes = [8, 128], strides = [1, 1]} : vector<8x512xf32> to vector<8x128xf32>
    %cst_11 = arith.constant 5.000000e-01 : f32
    %14 = vector.broadcast %cst_11 : f32 to vector<8x128xf32>
    %15 = arith.mulf %14, %13 : vector<8x128xf32>
    %16 = math.tanh %15 : vector<8x128xf32>
    %cst_12 = arith.constant 1.000000e+00 : f32
    %17 = vector.broadcast %cst_12 : f32 to vector<8x128xf32>
    %18 = arith.addf %16, %17 : vector<8x128xf32>
    %cst_13 = arith.constant 5.000000e-01 : f32
    %19 = vector.broadcast %cst_13 : f32 to vector<8x128xf32>
    %20 = arith.mulf %19, %18 : vector<8x128xf32>
    %21 = vector.extract_strided_slice %12 {offsets = [0, 128], sizes = [8, 128], strides = [1, 1]} : vector<8x512xf32> to vector<8x128xf32>
    %cst_14 = arith.constant 5.000000e-01 : f32
    %22 = vector.broadcast %cst_14 : f32 to vector<8x128xf32>
    %23 = arith.mulf %22, %21 : vector<8x128xf32>
    %24 = math.tanh %23 : vector<8x128xf32>
    %cst_15 = arith.constant 1.000000e+00 : f32
    %25 = vector.broadcast %cst_15 : f32 to vector<8x128xf32>
    %26 = arith.addf %24, %25 : vector<8x128xf32>
    %cst_16 = arith.constant 5.000000e-01 : f32
    %27 = vector.broadcast %cst_16 : f32 to vector<8x128xf32>
    %28 = arith.mulf %27, %26 : vector<8x128xf32>
    %29 = vector.extract_strided_slice %12 {offsets = [0, 256], sizes = [8, 128], strides = [1, 1]} : vector<8x512xf32> to vector<8x128xf32>
    %30 = math.tanh %29 : vector<8x128xf32>
    %31 = vector.extract_strided_slice %12 {offsets = [0, 384], sizes = [8, 128], strides = [1, 1]} : vector<8x512xf32> to vector<8x128xf32>
    %cst_17 = arith.constant 5.000000e-01 : f32
    %32 = vector.broadcast %cst_17 : f32 to vector<8x128xf32>
    %33 = arith.mulf %32, %31 : vector<8x128xf32>
    %34 = math.tanh %33 : vector<8x128xf32>
    %cst_18 = arith.constant 1.000000e+00 : f32
    %35 = vector.broadcast %cst_18 : f32 to vector<8x128xf32>
    %36 = arith.addf %34, %35 : vector<8x128xf32>
    %cst_19 = arith.constant 5.000000e-01 : f32
    %37 = vector.broadcast %cst_19 : f32 to vector<8x128xf32>
    %38 = arith.mulf %37, %36 : vector<8x128xf32>
    %39 = arith.mulf %28, %7 : vector<8x128xf32>
    %40 = arith.mulf %20, %30 : vector<8x128xf32>
    %41 = arith.addf %39, %40 : vector<8x128xf32>
    %42 = math.tanh %41 : vector<8x128xf32>
    %43 = arith.mulf %38, %42 : vector<8x128xf32>
    %44 = arith.addi %5, %c0_i32_8 : i32
    %45 = vector.broadcast %44 : i32 to vector<8x1xi32>
    %46 = arith.cmpi sgt, %4, %45 : vector<8x1xi32>
    %47 = vector.shape_cast %46 : vector<8x1xi1> to vector<8x1xi1>
    %48 = vector.broadcast %47 : vector<8x1xi1> to vector<8x128xi1>
    %49 = arith.select %48, %41, %7 : vector<8x128xi1>, vector<8x128xf32>
    %50 = vector.shape_cast %46 : vector<8x1xi1> to vector<8x1xi1>
    %51 = vector.broadcast %50 : vector<8x1xi1> to vector<8x128xi1>
    %52 = arith.select %51, %43, %6 : vector<8x128xi1>, vector<8x128xf32>
    %53 = arith.index_cast %c0_i32_8 : i32 to index
    %c0_20 = arith.constant 0 : index
    %c0_21 = arith.constant 0 : index
    %54 = vector.load %arg5[%53, %c0_20, %c0_21] : memref<8x8x128xf32, #tpu.memory_space<vmem>>, vector<1x8x128xf32>
    %55 = vector.shape_cast %54 : vector<1x8x128xf32> to vector<8x128xf32>
    %56 = vector.shape_cast %52 : vector<8x128xf32> to vector<1x8x128xf32>
    tpu.vector_store %arg5[%53, %c0_20, %c0_21], %56 {strides = array<i32>} : memref<8x8x128xf32, #tpu.memory_space<vmem>>, vector<1x8x128xf32>,
    %c1_i32 = arith.constant 1 : i32
    %57 = arith.index_cast %c1_i32 : i32 to index
    %c0_22 = arith.constant 0 : index
    %c0_23 = arith.constant 0 : index
    %58 = vector.load %arg2[%57, %c0_22, %c0_23] : memref<8x8x512xf32, #tpu.memory_space<vmem>>, vector<1x8x512xf32>
    %59 = vector.shape_cast %58 : vector<1x8x512xf32> to vector<8x512xf32>
    %cst_24 = arith.constant dense<0.000000e+00> : vector<8x512xf32>
    %60 = tpu.matmul %52, %3, %cst_24 {dimension_numbers = #tpu.dot_dimension_numbers<[1], [0], [0], [1], [0, 0, 1, 1], [], []>} : vector<8x128xf32>, vector<128x512xf32>, vector<8x512xf32> -> vector<8x512xf32>
    %61 = arith.addf %59, %60 : vector<8x512xf32>
    %62 = vector.extract_strided_slice %61 {offsets = [0, 0], sizes = [8, 128], strides = [1, 1]} : vector<8x512xf32> to vector<8x128xf32>
    %cst_25 = arith.constant 5.000000e-01 : f32
    %63 = vector.broadcast %cst_25 : f32 to vector<8x128xf32>
    %64 = arith.mulf %63, %62 : vector<8x128xf32>
    %65 = math.tanh %64 : vector<8x128xf32>
    %cst_26 = arith.constant 1.000000e+00 : f32
    %66 = vector.broadcast %cst_26 : f32 to vector<8x128xf32>
    %67 = arith.addf %65, %66 : vector<8x128xf32>
    %cst_27 = arith.constant 5.000000e-01 : f32
    %68 = vector.broadcast %cst_27 : f32 to vector<8x128xf32>
    %69 = arith.mulf %68, %67 : vector<8x128xf32>
    %70 = vector.extract_strided_slice %61 {offsets = [0, 128], sizes = [8, 128], strides = [1, 1]} : vector<8x512xf32> to vector<8x128xf32>
    %cst_28 = arith.constant 5.000000e-01 : f32
    %71 = vector.broadcast %cst_28 : f32 to vector<8x128xf32>
    %72 = arith.mulf %71, %70 : vector<8x128xf32>
    %73 = math.tanh %72 : vector<8x128xf32>
    %cst_29 = arith.constant 1.000000e+00 : f32
    %74 = vector.broadcast %cst_29 : f32 to vector<8x128xf32>
    %75 = arith.addf %73, %74 : vector<8x128xf32>
    %cst_30 = arith.constant 5.000000e-01 : f32
    %76 = vector.broadcast %cst_30 : f32 to vector<8x128xf32>
    %77 = arith.mulf %76, %75 : vector<8x128xf32>
    %78 = vector.extract_strided_slice %61 {offsets = [0, 256], sizes = [8, 128], strides = [1, 1]} : vector<8x512xf32> to vector<8x128xf32>
    %79 = math.tanh %78 : vector<8x128xf32>
    %80 = vector.extract_strided_slice %61 {offsets = [0, 384], sizes = [8, 128], strides = [1, 1]} : vector<8x512xf32> to vector<8x128xf32>
    %cst_31 = arith.constant 5.000000e-01 : f32
    %81 = vector.broadcast %cst_31 : f32 to vector<8x128xf32>
    %82 = arith.mulf %81, %80 : vector<8x128xf32>
    %83 = math.tanh %82 : vector<8x128xf32>
    %cst_32 = arith.constant 1.000000e+00 : f32
    %84 = vector.broadcast %cst_32 : f32 to vector<8x128xf32>
    %85 = arith.addf %83, %84 : vector<8x128xf32>
    %cst_33 = arith.constant 5.000000e-01 : f32
    %86 = vector.broadcast %cst_33 : f32 to vector<8x128xf32>
    %87 = arith.mulf %86, %85 : vector<8x128xf32>
    %88 = arith.mulf %77, %49 : vector<8x128xf32>
    %89 = arith.mulf %69, %79 : vector<8x128xf32>
    %90 = arith.addf %88, %89 : vector<8x128xf32>
    %91 = math.tanh %90 : vector<8x128xf32>
    %92 = arith.mulf %87, %91 : vector<8x128xf32>
    %93 = arith.addi %5, %c1_i32 : i32
    %94 = vector.broadcast %93 : i32 to vector<8x1xi32>
    %95 = arith.cmpi sgt, %4, %94 : vector<8x1xi32>
    %96 = vector.shape_cast %95 : vector<8x1xi1> to vector<8x1xi1>
    %97 = vector.broadcast %96 : vector<8x1xi1> to vector<8x128xi1>
    %98 = arith.select %97, %90, %49 : vector<8x128xi1>, vector<8x128xf32>
    %99 = vector.shape_cast %95 : vector<8x1xi1> to vector<8x1xi1>
    %100 = vector.broadcast %99 : vector<8x1xi1> to vector<8x128xi1>
    %101 = arith.select %100, %92, %52 : vector<8x128xi1>, vector<8x128xf32>
    %102 = arith.index_cast %c1_i32 : i32 to index
    %c0_34 = arith.constant 0 : index
    %c0_35 = arith.constant 0 : index
    %103 = vector.load %arg5[%102, %c0_34, %c0_35] : memref<8x8x128xf32, #tpu.memory_space<vmem>>, vector<1x8x128xf32>
    %104 = vector.shape_cast %103 : vector<1x8x128xf32> to vector<8x128xf32>
    %105 = vector.shape_cast %101 : vector<8x128xf32> to vector<1x8x128xf32>
    tpu.vector_store %arg5[%102, %c0_34, %c0_35], %105 {strides = array<i32>} : memref<8x8x128xf32, #tpu.memory_space<vmem>>, vector<1x8x128xf32>,
    %c2_i32 = arith.constant 2 : i32
    %106 = arith.index_cast %c2_i32 : i32 to index
    %c0_36 = arith.constant 0 : index
    %c0_37 = arith.constant 0 : index
    %107 = vector.load %arg2[%106, %c0_36, %c0_37] : memref<8x8x512xf32, #tpu.memory_space<vmem>>, vector<1x8x512xf32>
    %108 = vector.shape_cast %107 : vector<1x8x512xf32> to vector<8x512xf32>
    %cst_38 = arith.constant dense<0.000000e+00> : vector<8x512xf32>
    %109 = tpu.matmul %101, %3, %cst_38 {dimension_numbers = #tpu.dot_dimension_numbers<[1], [0], [0], [1], [0, 0, 1, 1], [], []>} : vector<8x128xf32>, vector<128x512xf32>, vector<8x512xf32> -> vector<8x512xf32>
    %110 = arith.addf %108, %109 : vector<8x512xf32>
    %111 = vector.extract_strided_slice %110 {offsets = [0, 0], sizes = [8, 128], strides = [1, 1]} : vector<8x512xf32> to vector<8x128xf32>
    %cst_39 = arith.constant 5.000000e-01 : f32
    %112 = vector.broadcast %cst_39 : f32 to vector<8x128xf32>
    %113 = arith.mulf %112, %111 : vector<8x128xf32>
    %114 = math.tanh %113 : vector<8x128xf32>
    %cst_40 = arith.constant 1.000000e+00 : f32
    %115 = vector.broadcast %cst_40 : f32 to vector<8x128xf32>
    %116 = arith.addf %114, %115 : vector<8x128xf32>
    %cst_41 = arith.constant 5.000000e-01 : f32
    %117 = vector.broadcast %cst_41 : f32 to vector<8x128xf32>
    %118 = arith.mulf %117, %116 : vector<8x128xf32>
    %119 = vector.extract_strided_slice %110 {offsets = [0, 128], sizes = [8, 128], strides = [1, 1]} : vector<8x512xf32> to vector<8x128xf32>
    %cst_42 = arith.constant 5.000000e-01 : f32
    %120 = vector.broadcast %cst_42 : f32 to vector<8x128xf32>
    %121 = arith.mulf %120, %119 : vector<8x128xf32>
    %122 = math.tanh %121 : vector<8x128xf32>
    %cst_43 = arith.constant 1.000000e+00 : f32
    %123 = vector.broadcast %cst_43 : f32 to vector<8x128xf32>
    %124 = arith.addf %122, %123 : vector<8x128xf32>
    %cst_44 = arith.constant 5.000000e-01 : f32
    %125 = vector.broadcast %cst_44 : f32 to vector<8x128xf32>
    %126 = arith.mulf %125, %124 : vector<8x128xf32>
    %127 = vector.extract_strided_slice %110 {offsets = [0, 256], sizes = [8, 128], strides = [1, 1]} : vector<8x512xf32> to vector<8x128xf32>
    %128 = math.tanh %127 : vector<8x128xf32>
    %129 = vector.extract_strided_slice %110 {offsets = [0, 384], sizes = [8, 128], strides = [1, 1]} : vector<8x512xf32> to vector<8x128xf32>
    %cst_45 = arith.constant 5.000000e-01 : f32
    %130 = vector.broadcast %cst_45 : f32 to vector<8x128xf32>
    %131 = arith.mulf %130, %129 : vector<8x128xf32>
    %132 = math.tanh %131 : vector<8x128xf32>
    %cst_46 = arith.constant 1.000000e+00 : f32
    %133 = vector.broadcast %cst_46 : f32 to vector<8x128xf32>
    %134 = arith.addf %132, %133 : vector<8x128xf32>
    %cst_47 = arith.constant 5.000000e-01 : f32
    %135 = vector.broadcast %cst_47 : f32 to vector<8x128xf32>
    %136 = arith.mulf %135, %134 : vector<8x128xf32>
    %137 = arith.mulf %126, %98 : vector<8x128xf32>
    %138 = arith.mulf %118, %128 : vector<8x128xf32>
    %139 = arith.addf %137, %138 : vector<8x128xf32>
    %140 = math.tanh %139 : vector<8x128xf32>
    %141 = arith.mulf %136, %140 : vector<8x128xf32>
    %142 = arith.addi %5, %c2_i32 : i32
    %143 = vector.broadcast %142 : i32 to vector<8x1xi32>
    %144 = arith.cmpi sgt, %4, %143 : vector<8x1xi32>
    %145 = vector.shape_cast %144 : vector<8x1xi1> to vector<8x1xi1>
    %146 = vector.broadcast %145 : vector<8x1xi1> to vector<8x128xi1>
    %147 = arith.select %146, %139, %98 : vector<8x128xi1>, vector<8x128xf32>
    %148 = vector.shape_cast %144 : vector<8x1xi1> to vector<8x1xi1>
    %149 = vector.broadcast %148 : vector<8x1xi1> to vector<8x128xi1>
    %150 = arith.select %149, %141, %101 : vector<8x128xi1>, vector<8x128xf32>
    %151 = arith.index_cast %c2_i32 : i32 to index
    %c0_48 = arith.constant 0 : index
    %c0_49 = arith.constant 0 : index
    %152 = vector.load %arg5[%151, %c0_48, %c0_49] : memref<8x8x128xf32, #tpu.memory_space<vmem>>, vector<1x8x128xf32>
    %153 = vector.shape_cast %152 : vector<1x8x128xf32> to vector<8x128xf32>
    %154 = vector.shape_cast %150 : vector<8x128xf32> to vector<1x8x128xf32>
    tpu.vector_store %arg5[%151, %c0_48, %c0_49], %154 {strides = array<i32>} : memref<8x8x128xf32, #tpu.memory_space<vmem>>, vector<1x8x128xf32>,
    %c3_i32 = arith.constant 3 : i32
    %155 = arith.index_cast %c3_i32 : i32 to index
    %c0_50 = arith.constant 0 : index
    %c0_51 = arith.constant 0 : index
    %156 = vector.load %arg2[%155, %c0_50, %c0_51] : memref<8x8x512xf32, #tpu.memory_space<vmem>>, vector<1x8x512xf32>
    %157 = vector.shape_cast %156 : vector<1x8x512xf32> to vector<8x512xf32>
    %cst_52 = arith.constant dense<0.000000e+00> : vector<8x512xf32>
    %158 = tpu.matmul %150, %3, %cst_52 {dimension_numbers = #tpu.dot_dimension_numbers<[1], [0], [0], [1], [0, 0, 1, 1], [], []>} : vector<8x128xf32>, vector<128x512xf32>, vector<8x512xf32> -> vector<8x512xf32>
    %159 = arith.addf %157, %158 : vector<8x512xf32>
    %160 = vector.extract_strided_slice %159 {offsets = [0, 0], sizes = [8, 128], strides = [1, 1]} : vector<8x512xf32> to vector<8x128xf32>
    %cst_53 = arith.constant 5.000000e-01 : f32
    %161 = vector.broadcast %cst_53 : f32 to vector<8x128xf32>
    %162 = arith.mulf %161, %160 : vector<8x128xf32>
    %163 = math.tanh %162 : vector<8x128xf32>
    %cst_54 = arith.constant 1.000000e+00 : f32
    %164 = vector.broadcast %cst_54 : f32 to vector<8x128xf32>
    %165 = arith.addf %163, %164 : vector<8x128xf32>
    %cst_55 = arith.constant 5.000000e-01 : f32
    %166 = vector.broadcast %cst_55 : f32 to vector<8x128xf32>
    %167 = arith.mulf %166, %165 : vector<8x128xf32>
    %168 = vector.extract_strided_slice %159 {offsets = [0, 128], sizes = [8, 128], strides = [1, 1]} : vector<8x512xf32> to vector<8x128xf32>
    %cst_56 = arith.constant 5.000000e-01 : f32
    %169 = vector.broadcast %cst_56 : f32 to vector<8x128xf32>
    %170 = arith.mulf %169, %168 : vector<8x128xf32>
    %171 = math.tanh %170 : vector<8x128xf32>
    %cst_57 = arith.constant 1.000000e+00 : f32
    %172 = vector.broadcast %cst_57 : f32 to vector<8x128xf32>
    %173 = arith.addf %171, %172 : vector<8x128xf32>
    %cst_58 = arith.constant 5.000000e-01 : f32
    %174 = vector.broadcast %cst_58 : f32 to vector<8x128xf32>
    %175 = arith.mulf %174, %173 : vector<8x128xf32>
    %176 = vector.extract_strided_slice %159 {offsets = [0, 256], sizes = [8, 128], strides = [1, 1]} : vector<8x512xf32> to vector<8x128xf32>
    %177 = math.tanh %176 : vector<8x128xf32>
    %178 = vector.extract_strided_slice %159 {offsets = [0, 384], sizes = [8, 128], strides = [1, 1]} : vector<8x512xf32> to vector<8x128xf32>
    %cst_59 = arith.constant 5.000000e-01 : f32
    %179 = vector.broadcast %cst_59 : f32 to vector<8x128xf32>
    %180 = arith.mulf %179, %178 : vector<8x128xf32>
    %181 = math.tanh %180 : vector<8x128xf32>
    %cst_60 = arith.constant 1.000000e+00 : f32
    %182 = vector.broadcast %cst_60 : f32 to vector<8x128xf32>
    %183 = arith.addf %181, %182 : vector<8x128xf32>
    %cst_61 = arith.constant 5.000000e-01 : f32
    %184 = vector.broadcast %cst_61 : f32 to vector<8x128xf32>
    %185 = arith.mulf %184, %183 : vector<8x128xf32>
    %186 = arith.mulf %175, %147 : vector<8x128xf32>
    %187 = arith.mulf %167, %177 : vector<8x128xf32>
    %188 = arith.addf %186, %187 : vector<8x128xf32>
    %189 = math.tanh %188 : vector<8x128xf32>
    %190 = arith.mulf %185, %189 : vector<8x128xf32>
    %191 = arith.addi %5, %c3_i32 : i32
    %192 = vector.broadcast %191 : i32 to vector<8x1xi32>
    %193 = arith.cmpi sgt, %4, %192 : vector<8x1xi32>
    %194 = vector.shape_cast %193 : vector<8x1xi1> to vector<8x1xi1>
    %195 = vector.broadcast %194 : vector<8x1xi1> to vector<8x128xi1>
    %196 = arith.select %195, %188, %147 : vector<8x128xi1>, vector<8x128xf32>
    %197 = vector.shape_cast %193 : vector<8x1xi1> to vector<8x1xi1>
    %198 = vector.broadcast %197 : vector<8x1xi1> to vector<8x128xi1>
    %199 = arith.select %198, %190, %150 : vector<8x128xi1>, vector<8x128xf32>
    %200 = arith.index_cast %c3_i32 : i32 to index
    %c0_62 = arith.constant 0 : index
    %c0_63 = arith.constant 0 : index
    %201 = vector.load %arg5[%200, %c0_62, %c0_63] : memref<8x8x128xf32, #tpu.memory_space<vmem>>, vector<1x8x128xf32>
    %202 = vector.shape_cast %201 : vector<1x8x128xf32> to vector<8x128xf32>
    %203 = vector.shape_cast %199 : vector<8x128xf32> to vector<1x8x128xf32>
    tpu.vector_store %arg5[%200, %c0_62, %c0_63], %203 {strides = array<i32>} : memref<8x8x128xf32, #tpu.memory_space<vmem>>, vector<1x8x128xf32>,
    %c4_i32 = arith.constant 4 : i32
    %204 = arith.index_cast %c4_i32 : i32 to index
    %c0_64 = arith.constant 0 : index
    %c0_65 = arith.constant 0 : index
    %205 = vector.load %arg2[%204, %c0_64, %c0_65] : memref<8x8x512xf32, #tpu.memory_space<vmem>>, vector<1x8x512xf32>
    %206 = vector.shape_cast %205 : vector<1x8x512xf32> to vector<8x512xf32>
    %cst_66 = arith.constant dense<0.000000e+00> : vector<8x512xf32>
    %207 = tpu.matmul %199, %3, %cst_66 {dimension_numbers = #tpu.dot_dimension_numbers<[1], [0], [0], [1], [0, 0, 1, 1], [], []>} : vector<8x128xf32>, vector<128x512xf32>, vector<8x512xf32> -> vector<8x512xf32>
    %208 = arith.addf %206, %207 : vector<8x512xf32>
    %209 = vector.extract_strided_slice %208 {offsets = [0, 0], sizes = [8, 128], strides = [1, 1]} : vector<8x512xf32> to vector<8x128xf32>
    %cst_67 = arith.constant 5.000000e-01 : f32
    %210 = vector.broadcast %cst_67 : f32 to vector<8x128xf32>
    %211 = arith.mulf %210, %209 : vector<8x128xf32>
    %212 = math.tanh %211 : vector<8x128xf32>
    %cst_68 = arith.constant 1.000000e+00 : f32
    %213 = vector.broadcast %cst_68 : f32 to vector<8x128xf32>
    %214 = arith.addf %212, %213 : vector<8x128xf32>
    %cst_69 = arith.constant 5.000000e-01 : f32
    %215 = vector.broadcast %cst_69 : f32 to vector<8x128xf32>
    %216 = arith.mulf %215, %214 : vector<8x128xf32>
    %217 = vector.extract_strided_slice %208 {offsets = [0, 128], sizes = [8, 128], strides = [1, 1]} : vector<8x512xf32> to vector<8x128xf32>
    %cst_70 = arith.constant 5.000000e-01 : f32
    %218 = vector.broadcast %cst_70 : f32 to vector<8x128xf32>
    %219 = arith.mulf %218, %217 : vector<8x128xf32>
    %220 = math.tanh %219 : vector<8x128xf32>
    %cst_71 = arith.constant 1.000000e+00 : f32
    %221 = vector.broadcast %cst_71 : f32 to vector<8x128xf32>
    %222 = arith.addf %220, %221 : vector<8x128xf32>
    %cst_72 = arith.constant 5.000000e-01 : f32
    %223 = vector.broadcast %cst_72 : f32 to vector<8x128xf32>
    %224 = arith.mulf %223, %222 : vector<8x128xf32>
    %225 = vector.extract_strided_slice %208 {offsets = [0, 256], sizes = [8, 128], strides = [1, 1]} : vector<8x512xf32> to vector<8x128xf32>
    %226 = math.tanh %225 : vector<8x128xf32>
    %227 = vector.extract_strided_slice %208 {offsets = [0, 384], sizes = [8, 128], strides = [1, 1]} : vector<8x512xf32> to vector<8x128xf32>
    %cst_73 = arith.constant 5.000000e-01 : f32
    %228 = vector.broadcast %cst_73 : f32 to vector<8x128xf32>
    %229 = arith.mulf %228, %227 : vector<8x128xf32>
    %230 = math.tanh %229 : vector<8x128xf32>
    %cst_74 = arith.constant 1.000000e+00 : f32
    %231 = vector.broadcast %cst_74 : f32 to vector<8x128xf32>
    %232 = arith.addf %230, %231 : vector<8x128xf32>
    %cst_75 = arith.constant 5.000000e-01 : f32
    %233 = vector.broadcast %cst_75 : f32 to vector<8x128xf32>
    %234 = arith.mulf %233, %232 : vector<8x128xf32>
    %235 = arith.mulf %224, %196 : vector<8x128xf32>
    %236 = arith.mulf %216, %226 : vector<8x128xf32>
    %237 = arith.addf %235, %236 : vector<8x128xf32>
    %238 = math.tanh %237 : vector<8x128xf32>
    %239 = arith.mulf %234, %238 : vector<8x128xf32>
    %240 = arith.addi %5, %c4_i32 : i32
    %241 = vector.broadcast %240 : i32 to vector<8x1xi32>
    %242 = arith.cmpi sgt, %4, %241 : vector<8x1xi32>
    %243 = vector.shape_cast %242 : vector<8x1xi1> to vector<8x1xi1>
    %244 = vector.broadcast %243 : vector<8x1xi1> to vector<8x128xi1>
    %245 = arith.select %244, %237, %196 : vector<8x128xi1>, vector<8x128xf32>
    %246 = vector.shape_cast %242 : vector<8x1xi1> to vector<8x1xi1>
    %247 = vector.broadcast %246 : vector<8x1xi1> to vector<8x128xi1>
    %248 = arith.select %247, %239, %199 : vector<8x128xi1>, vector<8x128xf32>
    %249 = arith.index_cast %c4_i32 : i32 to index
    %c0_76 = arith.constant 0 : index
    %c0_77 = arith.constant 0 : index
    %250 = vector.load %arg5[%249, %c0_76, %c0_77] : memref<8x8x128xf32, #tpu.memory_space<vmem>>, vector<1x8x128xf32>
    %251 = vector.shape_cast %250 : vector<1x8x128xf32> to vector<8x128xf32>
    %252 = vector.shape_cast %248 : vector<8x128xf32> to vector<1x8x128xf32>
    tpu.vector_store %arg5[%249, %c0_76, %c0_77], %252 {strides = array<i32>} : memref<8x8x128xf32, #tpu.memory_space<vmem>>, vector<1x8x128xf32>,
    %c5_i32 = arith.constant 5 : i32
    %253 = arith.index_cast %c5_i32 : i32 to index
    %c0_78 = arith.constant 0 : index
    %c0_79 = arith.constant 0 : index
    %254 = vector.load %arg2[%253, %c0_78, %c0_79] : memref<8x8x512xf32, #tpu.memory_space<vmem>>, vector<1x8x512xf32>
    %255 = vector.shape_cast %254 : vector<1x8x512xf32> to vector<8x512xf32>
    %cst_80 = arith.constant dense<0.000000e+00> : vector<8x512xf32>
    %256 = tpu.matmul %248, %3, %cst_80 {dimension_numbers = #tpu.dot_dimension_numbers<[1], [0], [0], [1], [0, 0, 1, 1], [], []>} : vector<8x128xf32>, vector<128x512xf32>, vector<8x512xf32> -> vector<8x512xf32>
    %257 = arith.addf %255, %256 : vector<8x512xf32>
    %258 = vector.extract_strided_slice %257 {offsets = [0, 0], sizes = [8, 128], strides = [1, 1]} : vector<8x512xf32> to vector<8x128xf32>
    %cst_81 = arith.constant 5.000000e-01 : f32
    %259 = vector.broadcast %cst_81 : f32 to vector<8x128xf32>
    %260 = arith.mulf %259, %258 : vector<8x128xf32>
    %261 = math.tanh %260 : vector<8x128xf32>
    %cst_82 = arith.constant 1.000000e+00 : f32
    %262 = vector.broadcast %cst_82 : f32 to vector<8x128xf32>
    %263 = arith.addf %261, %262 : vector<8x128xf32>
    %cst_83 = arith.constant 5.000000e-01 : f32
    %264 = vector.broadcast %cst_83 : f32 to vector<8x128xf32>
    %265 = arith.mulf %264, %263 : vector<8x128xf32>
    %266 = vector.extract_strided_slice %257 {offsets = [0, 128], sizes = [8, 128], strides = [1, 1]} : vector<8x512xf32> to vector<8x128xf32>
    %cst_84 = arith.constant 5.000000e-01 : f32
    %267 = vector.broadcast %cst_84 : f32 to vector<8x128xf32>
    %268 = arith.mulf %267, %266 : vector<8x128xf32>
    %269 = math.tanh %268 : vector<8x128xf32>
    %cst_85 = arith.constant 1.000000e+00 : f32
    %270 = vector.broadcast %cst_85 : f32 to vector<8x128xf32>
    %271 = arith.addf %269, %270 : vector<8x128xf32>
    %cst_86 = arith.constant 5.000000e-01 : f32
    %272 = vector.broadcast %cst_86 : f32 to vector<8x128xf32>
    %273 = arith.mulf %272, %271 : vector<8x128xf32>
    %274 = vector.extract_strided_slice %257 {offsets = [0, 256], sizes = [8, 128], strides = [1, 1]} : vector<8x512xf32> to vector<8x128xf32>
    %275 = math.tanh %274 : vector<8x128xf32>
    %276 = vector.extract_strided_slice %257 {offsets = [0, 384], sizes = [8, 128], strides = [1, 1]} : vector<8x512xf32> to vector<8x128xf32>
    %cst_87 = arith.constant 5.000000e-01 : f32
    %277 = vector.broadcast %cst_87 : f32 to vector<8x128xf32>
    %278 = arith.mulf %277, %276 : vector<8x128xf32>
    %279 = math.tanh %278 : vector<8x128xf32>
    %cst_88 = arith.constant 1.000000e+00 : f32
    %280 = vector.broadcast %cst_88 : f32 to vector<8x128xf32>
    %281 = arith.addf %279, %280 : vector<8x128xf32>
    %cst_89 = arith.constant 5.000000e-01 : f32
    %282 = vector.broadcast %cst_89 : f32 to vector<8x128xf32>
    %283 = arith.mulf %282, %281 : vector<8x128xf32>
    %284 = arith.mulf %273, %245 : vector<8x128xf32>
    %285 = arith.mulf %265, %275 : vector<8x128xf32>
    %286 = arith.addf %284, %285 : vector<8x128xf32>
    %287 = math.tanh %286 : vector<8x128xf32>
    %288 = arith.mulf %283, %287 : vector<8x128xf32>
    %289 = arith.addi %5, %c5_i32 : i32
    %290 = vector.broadcast %289 : i32 to vector<8x1xi32>
    %291 = arith.cmpi sgt, %4, %290 : vector<8x1xi32>
    %292 = vector.shape_cast %291 : vector<8x1xi1> to vector<8x1xi1>
    %293 = vector.broadcast %292 : vector<8x1xi1> to vector<8x128xi1>
    %294 = arith.select %293, %286, %245 : vector<8x128xi1>, vector<8x128xf32>
    %295 = vector.shape_cast %291 : vector<8x1xi1> to vector<8x1xi1>
    %296 = vector.broadcast %295 : vector<8x1xi1> to vector<8x128xi1>
    %297 = arith.select %296, %288, %248 : vector<8x128xi1>, vector<8x128xf32>
    %298 = arith.index_cast %c5_i32 : i32 to index
    %c0_90 = arith.constant 0 : index
    %c0_91 = arith.constant 0 : index
    %299 = vector.load %arg5[%298, %c0_90, %c0_91] : memref<8x8x128xf32, #tpu.memory_space<vmem>>, vector<1x8x128xf32>
    %300 = vector.shape_cast %299 : vector<1x8x128xf32> to vector<8x128xf32>
    %301 = vector.shape_cast %297 : vector<8x128xf32> to vector<1x8x128xf32>
    tpu.vector_store %arg5[%298, %c0_90, %c0_91], %301 {strides = array<i32>} : memref<8x8x128xf32, #tpu.memory_space<vmem>>, vector<1x8x128xf32>,
    %c6_i32 = arith.constant 6 : i32
    %302 = arith.index_cast %c6_i32 : i32 to index
    %c0_92 = arith.constant 0 : index
    %c0_93 = arith.constant 0 : index
    %303 = vector.load %arg2[%302, %c0_92, %c0_93] : memref<8x8x512xf32, #tpu.memory_space<vmem>>, vector<1x8x512xf32>
    %304 = vector.shape_cast %303 : vector<1x8x512xf32> to vector<8x512xf32>
    %cst_94 = arith.constant dense<0.000000e+00> : vector<8x512xf32>
    %305 = tpu.matmul %297, %3, %cst_94 {dimension_numbers = #tpu.dot_dimension_numbers<[1], [0], [0], [1], [0, 0, 1, 1], [], []>} : vector<8x128xf32>, vector<128x512xf32>, vector<8x512xf32> -> vector<8x512xf32>
    %306 = arith.addf %304, %305 : vector<8x512xf32>
    %307 = vector.extract_strided_slice %306 {offsets = [0, 0], sizes = [8, 128], strides = [1, 1]} : vector<8x512xf32> to vector<8x128xf32>
    %cst_95 = arith.constant 5.000000e-01 : f32
    %308 = vector.broadcast %cst_95 : f32 to vector<8x128xf32>
    %309 = arith.mulf %308, %307 : vector<8x128xf32>
    %310 = math.tanh %309 : vector<8x128xf32>
    %cst_96 = arith.constant 1.000000e+00 : f32
    %311 = vector.broadcast %cst_96 : f32 to vector<8x128xf32>
    %312 = arith.addf %310, %311 : vector<8x128xf32>
    %cst_97 = arith.constant 5.000000e-01 : f32
    %313 = vector.broadcast %cst_97 : f32 to vector<8x128xf32>
    %314 = arith.mulf %313, %312 : vector<8x128xf32>
    %315 = vector.extract_strided_slice %306 {offsets = [0, 128], sizes = [8, 128], strides = [1, 1]} : vector<8x512xf32> to vector<8x128xf32>
    %cst_98 = arith.constant 5.000000e-01 : f32
    %316 = vector.broadcast %cst_98 : f32 to vector<8x128xf32>
    %317 = arith.mulf %316, %315 : vector<8x128xf32>
    %318 = math.tanh %317 : vector<8x128xf32>
    %cst_99 = arith.constant 1.000000e+00 : f32
    %319 = vector.broadcast %cst_99 : f32 to vector<8x128xf32>
    %320 = arith.addf %318, %319 : vector<8x128xf32>
    %cst_100 = arith.constant 5.000000e-01 : f32
    %321 = vector.broadcast %cst_100 : f32 to vector<8x128xf32>
    %322 = arith.mulf %321, %320 : vector<8x128xf32>
    %323 = vector.extract_strided_slice %306 {offsets = [0, 256], sizes = [8, 128], strides = [1, 1]} : vector<8x512xf32> to vector<8x128xf32>
    %324 = math.tanh %323 : vector<8x128xf32>
    %325 = vector.extract_strided_slice %306 {offsets = [0, 384], sizes = [8, 128], strides = [1, 1]} : vector<8x512xf32> to vector<8x128xf32>
    %cst_101 = arith.constant 5.000000e-01 : f32
    %326 = vector.broadcast %cst_101 : f32 to vector<8x128xf32>
    %327 = arith.mulf %326, %325 : vector<8x128xf32>
    %328 = math.tanh %327 : vector<8x128xf32>
    %cst_102 = arith.constant 1.000000e+00 : f32
    %329 = vector.broadcast %cst_102 : f32 to vector<8x128xf32>
    %330 = arith.addf %328, %329 : vector<8x128xf32>
    %cst_103 = arith.constant 5.000000e-01 : f32
    %331 = vector.broadcast %cst_103 : f32 to vector<8x128xf32>
    %332 = arith.mulf %331, %330 : vector<8x128xf32>
    %333 = arith.mulf %322, %294 : vector<8x128xf32>
    %334 = arith.mulf %314, %324 : vector<8x128xf32>
    %335 = arith.addf %333, %334 : vector<8x128xf32>
    %336 = math.tanh %335 : vector<8x128xf32>
    %337 = arith.mulf %332, %336 : vector<8x128xf32>
    %338 = arith.addi %5, %c6_i32 : i32
    %339 = vector.broadcast %338 : i32 to vector<8x1xi32>
    %340 = arith.cmpi sgt, %4, %339 : vector<8x1xi32>
    %341 = vector.shape_cast %340 : vector<8x1xi1> to vector<8x1xi1>
    %342 = vector.broadcast %341 : vector<8x1xi1> to vector<8x128xi1>
    %343 = arith.select %342, %335, %294 : vector<8x128xi1>, vector<8x128xf32>
    %344 = vector.shape_cast %340 : vector<8x1xi1> to vector<8x1xi1>
    %345 = vector.broadcast %344 : vector<8x1xi1> to vector<8x128xi1>
    %346 = arith.select %345, %337, %297 : vector<8x128xi1>, vector<8x128xf32>
    %347 = arith.index_cast %c6_i32 : i32 to index
    %c0_104 = arith.constant 0 : index
    %c0_105 = arith.constant 0 : index
    %348 = vector.load %arg5[%347, %c0_104, %c0_105] : memref<8x8x128xf32, #tpu.memory_space<vmem>>, vector<1x8x128xf32>
    %349 = vector.shape_cast %348 : vector<1x8x128xf32> to vector<8x128xf32>
    %350 = vector.shape_cast %346 : vector<8x128xf32> to vector<1x8x128xf32>
    tpu.vector_store %arg5[%347, %c0_104, %c0_105], %350 {strides = array<i32>} : memref<8x8x128xf32, #tpu.memory_space<vmem>>, vector<1x8x128xf32>,
    %c7_i32 = arith.constant 7 : i32
    %351 = arith.index_cast %c7_i32 : i32 to index
    %c0_106 = arith.constant 0 : index
    %c0_107 = arith.constant 0 : index
    %352 = vector.load %arg2[%351, %c0_106, %c0_107] : memref<8x8x512xf32, #tpu.memory_space<vmem>>, vector<1x8x512xf32>
    %353 = vector.shape_cast %352 : vector<1x8x512xf32> to vector<8x512xf32>
    %cst_108 = arith.constant dense<0.000000e+00> : vector<8x512xf32>
    %354 = tpu.matmul %346, %3, %cst_108 {dimension_numbers = #tpu.dot_dimension_numbers<[1], [0], [0], [1], [0, 0, 1, 1], [], []>} : vector<8x128xf32>, vector<128x512xf32>, vector<8x512xf32> -> vector<8x512xf32>
    %355 = arith.addf %353, %354 : vector<8x512xf32>
    %356 = vector.extract_strided_slice %355 {offsets = [0, 0], sizes = [8, 128], strides = [1, 1]} : vector<8x512xf32> to vector<8x128xf32>
    %cst_109 = arith.constant 5.000000e-01 : f32
    %357 = vector.broadcast %cst_109 : f32 to vector<8x128xf32>
    %358 = arith.mulf %357, %356 : vector<8x128xf32>
    %359 = math.tanh %358 : vector<8x128xf32>
    %cst_110 = arith.constant 1.000000e+00 : f32
    %360 = vector.broadcast %cst_110 : f32 to vector<8x128xf32>
    %361 = arith.addf %359, %360 : vector<8x128xf32>
    %cst_111 = arith.constant 5.000000e-01 : f32
    %362 = vector.broadcast %cst_111 : f32 to vector<8x128xf32>
    %363 = arith.mulf %362, %361 : vector<8x128xf32>
    %364 = vector.extract_strided_slice %355 {offsets = [0, 128], sizes = [8, 128], strides = [1, 1]} : vector<8x512xf32> to vector<8x128xf32>
    %cst_112 = arith.constant 5.000000e-01 : f32
    %365 = vector.broadcast %cst_112 : f32 to vector<8x128xf32>
    %366 = arith.mulf %365, %364 : vector<8x128xf32>
    %367 = math.tanh %366 : vector<8x128xf32>
    %cst_113 = arith.constant 1.000000e+00 : f32
    %368 = vector.broadcast %cst_113 : f32 to vector<8x128xf32>
    %369 = arith.addf %367, %368 : vector<8x128xf32>
    %cst_114 = arith.constant 5.000000e-01 : f32
    %370 = vector.broadcast %cst_114 : f32 to vector<8x128xf32>
    %371 = arith.mulf %370, %369 : vector<8x128xf32>
    %372 = vector.extract_strided_slice %355 {offsets = [0, 256], sizes = [8, 128], strides = [1, 1]} : vector<8x512xf32> to vector<8x128xf32>
    %373 = math.tanh %372 : vector<8x128xf32>
    %374 = vector.extract_strided_slice %355 {offsets = [0, 384], sizes = [8, 128], strides = [1, 1]} : vector<8x512xf32> to vector<8x128xf32>
    %cst_115 = arith.constant 5.000000e-01 : f32
    %375 = vector.broadcast %cst_115 : f32 to vector<8x128xf32>
    %376 = arith.mulf %375, %374 : vector<8x128xf32>
    %377 = math.tanh %376 : vector<8x128xf32>
    %cst_116 = arith.constant 1.000000e+00 : f32
    %378 = vector.broadcast %cst_116 : f32 to vector<8x128xf32>
    %379 = arith.addf %377, %378 : vector<8x128xf32>
    %cst_117 = arith.constant 5.000000e-01 : f32
    %380 = vector.broadcast %cst_117 : f32 to vector<8x128xf32>
    %381 = arith.mulf %380, %379 : vector<8x128xf32>
    %382 = arith.mulf %371, %343 : vector<8x128xf32>
    %383 = arith.mulf %363, %373 : vector<8x128xf32>
    %384 = arith.addf %382, %383 : vector<8x128xf32>
    %385 = math.tanh %384 : vector<8x128xf32>
    %386 = arith.mulf %381, %385 : vector<8x128xf32>
    %387 = arith.addi %5, %c7_i32 : i32
    %388 = vector.broadcast %387 : i32 to vector<8x1xi32>
    %389 = arith.cmpi sgt, %4, %388 : vector<8x1xi32>
    %390 = vector.shape_cast %389 : vector<8x1xi1> to vector<8x1xi1>
    %391 = vector.broadcast %390 : vector<8x1xi1> to vector<8x128xi1>
    %392 = arith.select %391, %384, %343 : vector<8x128xi1>, vector<8x128xf32>
    %393 = vector.shape_cast %389 : vector<8x1xi1> to vector<8x1xi1>
    %394 = vector.broadcast %393 : vector<8x1xi1> to vector<8x128xi1>
    %395 = arith.select %394, %386, %346 : vector<8x128xi1>, vector<8x128xf32>
    %396 = arith.index_cast %c7_i32 : i32 to index
    %c0_118 = arith.constant 0 : index
    %c0_119 = arith.constant 0 : index
    %397 = vector.load %arg5[%396, %c0_118, %c0_119] : memref<8x8x128xf32, #tpu.memory_space<vmem>>, vector<1x8x128xf32>
    %398 = vector.shape_cast %397 : vector<1x8x128xf32> to vector<8x128xf32>
    %399 = vector.shape_cast %395 : vector<8x128xf32> to vector<1x8x128xf32>
    tpu.vector_store %arg5[%396, %c0_118, %c0_119], %399 {strides = array<i32>} : memref<8x8x128xf32, #tpu.memory_space<vmem>>, vector<1x8x128xf32>,
    %c8_i32_120 = arith.constant 8 : i32
    %c0_121 = arith.constant 0 : index
    %c0_122 = arith.constant 0 : index
    %400 = vector.load %arg6[%c0_121, %c0_122] : memref<8x128xf32, #tpu.memory_space<vmem>>, vector<8x128xf32>
    tpu.vector_store %arg6[%c0_121, %c0_122], %395 {strides = array<i32>} : memref<8x128xf32, #tpu.memory_space<vmem>>, vector<8x128xf32>,
    %c0_123 = arith.constant 0 : index
    %c0_124 = arith.constant 0 : index
    %401 = vector.load %arg7[%c0_123, %c0_124] : memref<8x128xf32, #tpu.memory_space<vmem>>, vector<8x128xf32>
    tpu.vector_store %arg7[%c0_123, %c0_124], %392 {strides = array<i32>} : memref<8x128xf32, #tpu.memory_space<vmem>>, vector<8x128xf32>,
    return
  }
  func.func @transform_0(%arg0: i32, %arg1: i32) -> (i32, i32, i32) {
    %c0_i32 = arith.constant 0 : i32
    %c0_i32_0 = arith.constant 0 : i32
    return %arg1, %arg0, %c0_i32 : i32, i32, i32
  }
  func.func @transform_1(%arg0: i32, %arg1: i32) -> (i32, i32) {
    %c0_i32 = arith.constant 0 : i32
    %c0_i32_0 = arith.constant 0 : i32
    %c0_i32_1 = arith.constant 0 : i32
    return %c0_i32, %c0_i32_0 : i32, i32
  }
  func.func @transform_2(%arg0: i32, %arg1: i32) -> (i32, i32) {
    %c0_i32 = arith.constant 0 : i32
    %c0_i32_0 = arith.constant 0 : i32
    return %arg0, %c0_i32 : i32, i32
  }
  func.func @transform_3(%arg0: i32, %arg1: i32) -> (i32, i32, i32) {
    %c0_i32 = arith.constant 0 : i32
    %c0_i32_0 = arith.constant 0 : i32
    return %arg1, %arg0, %c0_i32 : i32, i32, i32
  }
}

module attributes {stable_mosaic.version = 11 : i64} {
  func.func @_lstm_chunk_kernel(%arg0: i32, %arg1: i32, %arg2: memref<8x8x512xf32, #tpu.memory_space<vmem>>, %arg3: memref<128x512xf32, #tpu.memory_space<vmem>>, %arg4: memref<8x1xi32, #tpu.memory_space<vmem>>, %arg5: memref<8x128xf32, #tpu.memory_space<vmem>>, %arg6: memref<8x128xf32, #tpu.memory_space<vmem>>, %arg7: memref<8x128xf32, #tpu.memory_space<vmem>>) attributes {dimension_semantics = [#tpu.dimension_semantics<parallel>, #tpu.dimension_semantics<arbitrary>], iteration_bounds = array<i64: 1, 1>, scalar_prefetch = 0 : i64, scratch_operands = 2 : i64, tpu.core_type = #tpu.core_type<tc>, window_params = [{transform_indices = @transform_0, window_bounds = array<i64: 8, 8, 512>}, {pipeline_mode = #tpu.pipeline_mode<synchronous>, transform_indices = @transform_1, window_bounds = array<i64: 128, 512>}, {transform_indices = @transform_2, window_bounds = array<i64: 8, 1>}, {transform_indices = @transform_3, window_bounds = array<i64: 8, 128>}]} {
    %c0_i32 = arith.constant 0 : i32
    %0 = arith.cmpi eq, %arg1, %c0_i32 : i32
    %1 = arith.extui %0 : i1 to i32
    %c0_i32_0 = arith.constant 0 : i32
    %2 = arith.cmpi ne, %1, %c0_i32_0 : i32
    scf.if %2 {
      %cst_111 = arith.constant 0.000000e+00 : f32
      %371 = vector.broadcast %cst_111 : f32 to vector<8x128xf32>
      %c0_112 = arith.constant 0 : index
      %c0_113 = arith.constant 0 : index
      %372 = vector.load %arg6[%c0_112, %c0_113] : memref<8x128xf32, #tpu.memory_space<vmem>>, vector<8x128xf32>
      tpu.vector_store %arg6[%c0_112, %c0_113], %371 {strides = array<i32>} : memref<8x128xf32, #tpu.memory_space<vmem>>, vector<8x128xf32>,
      %cst_114 = arith.constant 0.000000e+00 : f32
      %373 = vector.broadcast %cst_114 : f32 to vector<8x128xf32>
      %c0_115 = arith.constant 0 : index
      %c0_116 = arith.constant 0 : index
      %374 = vector.load %arg7[%c0_115, %c0_116] : memref<8x128xf32, #tpu.memory_space<vmem>>, vector<8x128xf32>
      tpu.vector_store %arg7[%c0_115, %c0_116], %373 {strides = array<i32>} : memref<8x128xf32, #tpu.memory_space<vmem>>, vector<8x128xf32>,
    } else {
    }
    %c0 = arith.constant 0 : index
    %c0_1 = arith.constant 0 : index
    %3 = vector.load %arg3[%c0, %c0_1] : memref<128x512xf32, #tpu.memory_space<vmem>>, vector<128x512xf32>
    %c0_2 = arith.constant 0 : index
    %c0_3 = arith.constant 0 : index
    %4 = vector.load %arg4[%c0_2, %c0_3] : memref<8x1xi32, #tpu.memory_space<vmem>>, vector<8x1xi32>
    %c8_i32 = arith.constant 8 : i32
    %5 = arith.muli %arg1, %c8_i32 : i32
    %c0_4 = arith.constant 0 : index
    %c0_5 = arith.constant 0 : index
    %6 = vector.load %arg6[%c0_4, %c0_5] : memref<8x128xf32, #tpu.memory_space<vmem>>, vector<8x128xf32>
    %c0_6 = arith.constant 0 : index
    %c0_7 = arith.constant 0 : index
    %7 = vector.load %arg7[%c0_6, %c0_7] : memref<8x128xf32, #tpu.memory_space<vmem>>, vector<8x128xf32>
    %c0_i32_8 = arith.constant 0 : i32
    %8 = arith.index_cast %c0_i32_8 : i32 to index
    %c0_9 = arith.constant 0 : index
    %c0_10 = arith.constant 0 : index
    %9 = vector.load %arg2[%8, %c0_9, %c0_10] : memref<8x8x512xf32, #tpu.memory_space<vmem>>, vector<1x8x512xf32>
    %10 = vector.shape_cast %9 : vector<1x8x512xf32> to vector<8x512xf32>
    %cst = arith.constant dense<0.000000e+00> : vector<8x512xf32>
    %11 = tpu.matmul %6, %3, %cst {dimension_numbers = #tpu.dot_dimension_numbers<[1], [0], [0], [1], [0, 0, 1, 1], [], []>} : vector<8x128xf32>, vector<128x512xf32>, vector<8x512xf32> -> vector<8x512xf32>
    %12 = arith.addf %10, %11 : vector<8x512xf32>
    %13 = vector.extract_strided_slice %12 {offsets = [0, 0], sizes = [8, 128], strides = [1, 1]} : vector<8x512xf32> to vector<8x128xf32>
    %cst_11 = arith.constant 5.000000e-01 : f32
    %14 = vector.broadcast %cst_11 : f32 to vector<8x128xf32>
    %15 = arith.mulf %14, %13 : vector<8x128xf32>
    %16 = math.tanh %15 : vector<8x128xf32>
    %cst_12 = arith.constant 1.000000e+00 : f32
    %17 = vector.broadcast %cst_12 : f32 to vector<8x128xf32>
    %18 = arith.addf %16, %17 : vector<8x128xf32>
    %cst_13 = arith.constant 5.000000e-01 : f32
    %19 = vector.broadcast %cst_13 : f32 to vector<8x128xf32>
    %20 = arith.mulf %19, %18 : vector<8x128xf32>
    %21 = vector.extract_strided_slice %12 {offsets = [0, 128], sizes = [8, 128], strides = [1, 1]} : vector<8x512xf32> to vector<8x128xf32>
    %cst_14 = arith.constant 5.000000e-01 : f32
    %22 = vector.broadcast %cst_14 : f32 to vector<8x128xf32>
    %23 = arith.mulf %22, %21 : vector<8x128xf32>
    %24 = math.tanh %23 : vector<8x128xf32>
    %cst_15 = arith.constant 1.000000e+00 : f32
    %25 = vector.broadcast %cst_15 : f32 to vector<8x128xf32>
    %26 = arith.addf %24, %25 : vector<8x128xf32>
    %cst_16 = arith.constant 5.000000e-01 : f32
    %27 = vector.broadcast %cst_16 : f32 to vector<8x128xf32>
    %28 = arith.mulf %27, %26 : vector<8x128xf32>
    %29 = vector.extract_strided_slice %12 {offsets = [0, 256], sizes = [8, 128], strides = [1, 1]} : vector<8x512xf32> to vector<8x128xf32>
    %30 = math.tanh %29 : vector<8x128xf32>
    %31 = vector.extract_strided_slice %12 {offsets = [0, 384], sizes = [8, 128], strides = [1, 1]} : vector<8x512xf32> to vector<8x128xf32>
    %cst_17 = arith.constant 5.000000e-01 : f32
    %32 = vector.broadcast %cst_17 : f32 to vector<8x128xf32>
    %33 = arith.mulf %32, %31 : vector<8x128xf32>
    %34 = math.tanh %33 : vector<8x128xf32>
    %cst_18 = arith.constant 1.000000e+00 : f32
    %35 = vector.broadcast %cst_18 : f32 to vector<8x128xf32>
    %36 = arith.addf %34, %35 : vector<8x128xf32>
    %cst_19 = arith.constant 5.000000e-01 : f32
    %37 = vector.broadcast %cst_19 : f32 to vector<8x128xf32>
    %38 = arith.mulf %37, %36 : vector<8x128xf32>
    %39 = arith.mulf %28, %7 : vector<8x128xf32>
    %40 = arith.mulf %20, %30 : vector<8x128xf32>
    %41 = arith.addf %39, %40 : vector<8x128xf32>
    %42 = math.tanh %41 : vector<8x128xf32>
    %43 = arith.mulf %38, %42 : vector<8x128xf32>
    %44 = arith.addi %5, %c0_i32_8 : i32
    %45 = vector.broadcast %44 : i32 to vector<8x1xi32>
    %46 = arith.cmpi sgt, %4, %45 : vector<8x1xi32>
    %47 = vector.shape_cast %46 : vector<8x1xi1> to vector<8x1xi1>
    %48 = vector.broadcast %47 : vector<8x1xi1> to vector<8x128xi1>
    %49 = arith.select %48, %41, %7 : vector<8x128xi1>, vector<8x128xf32>
    %50 = vector.shape_cast %46 : vector<8x1xi1> to vector<8x1xi1>
    %51 = vector.broadcast %50 : vector<8x1xi1> to vector<8x128xi1>
    %52 = arith.select %51, %43, %6 : vector<8x128xi1>, vector<8x128xf32>
    %c1_i32 = arith.constant 1 : i32
    %53 = arith.index_cast %c1_i32 : i32 to index
    %c0_20 = arith.constant 0 : index
    %c0_21 = arith.constant 0 : index
    %54 = vector.load %arg2[%53, %c0_20, %c0_21] : memref<8x8x512xf32, #tpu.memory_space<vmem>>, vector<1x8x512xf32>
    %55 = vector.shape_cast %54 : vector<1x8x512xf32> to vector<8x512xf32>
    %cst_22 = arith.constant dense<0.000000e+00> : vector<8x512xf32>
    %56 = tpu.matmul %52, %3, %cst_22 {dimension_numbers = #tpu.dot_dimension_numbers<[1], [0], [0], [1], [0, 0, 1, 1], [], []>} : vector<8x128xf32>, vector<128x512xf32>, vector<8x512xf32> -> vector<8x512xf32>
    %57 = arith.addf %55, %56 : vector<8x512xf32>
    %58 = vector.extract_strided_slice %57 {offsets = [0, 0], sizes = [8, 128], strides = [1, 1]} : vector<8x512xf32> to vector<8x128xf32>
    %cst_23 = arith.constant 5.000000e-01 : f32
    %59 = vector.broadcast %cst_23 : f32 to vector<8x128xf32>
    %60 = arith.mulf %59, %58 : vector<8x128xf32>
    %61 = math.tanh %60 : vector<8x128xf32>
    %cst_24 = arith.constant 1.000000e+00 : f32
    %62 = vector.broadcast %cst_24 : f32 to vector<8x128xf32>
    %63 = arith.addf %61, %62 : vector<8x128xf32>
    %cst_25 = arith.constant 5.000000e-01 : f32
    %64 = vector.broadcast %cst_25 : f32 to vector<8x128xf32>
    %65 = arith.mulf %64, %63 : vector<8x128xf32>
    %66 = vector.extract_strided_slice %57 {offsets = [0, 128], sizes = [8, 128], strides = [1, 1]} : vector<8x512xf32> to vector<8x128xf32>
    %cst_26 = arith.constant 5.000000e-01 : f32
    %67 = vector.broadcast %cst_26 : f32 to vector<8x128xf32>
    %68 = arith.mulf %67, %66 : vector<8x128xf32>
    %69 = math.tanh %68 : vector<8x128xf32>
    %cst_27 = arith.constant 1.000000e+00 : f32
    %70 = vector.broadcast %cst_27 : f32 to vector<8x128xf32>
    %71 = arith.addf %69, %70 : vector<8x128xf32>
    %cst_28 = arith.constant 5.000000e-01 : f32
    %72 = vector.broadcast %cst_28 : f32 to vector<8x128xf32>
    %73 = arith.mulf %72, %71 : vector<8x128xf32>
    %74 = vector.extract_strided_slice %57 {offsets = [0, 256], sizes = [8, 128], strides = [1, 1]} : vector<8x512xf32> to vector<8x128xf32>
    %75 = math.tanh %74 : vector<8x128xf32>
    %76 = vector.extract_strided_slice %57 {offsets = [0, 384], sizes = [8, 128], strides = [1, 1]} : vector<8x512xf32> to vector<8x128xf32>
    %cst_29 = arith.constant 5.000000e-01 : f32
    %77 = vector.broadcast %cst_29 : f32 to vector<8x128xf32>
    %78 = arith.mulf %77, %76 : vector<8x128xf32>
    %79 = math.tanh %78 : vector<8x128xf32>
    %cst_30 = arith.constant 1.000000e+00 : f32
    %80 = vector.broadcast %cst_30 : f32 to vector<8x128xf32>
    %81 = arith.addf %79, %80 : vector<8x128xf32>
    %cst_31 = arith.constant 5.000000e-01 : f32
    %82 = vector.broadcast %cst_31 : f32 to vector<8x128xf32>
    %83 = arith.mulf %82, %81 : vector<8x128xf32>
    %84 = arith.mulf %73, %49 : vector<8x128xf32>
    %85 = arith.mulf %65, %75 : vector<8x128xf32>
    %86 = arith.addf %84, %85 : vector<8x128xf32>
    %87 = math.tanh %86 : vector<8x128xf32>
    %88 = arith.mulf %83, %87 : vector<8x128xf32>
    %89 = arith.addi %5, %c1_i32 : i32
    %90 = vector.broadcast %89 : i32 to vector<8x1xi32>
    %91 = arith.cmpi sgt, %4, %90 : vector<8x1xi32>
    %92 = vector.shape_cast %91 : vector<8x1xi1> to vector<8x1xi1>
    %93 = vector.broadcast %92 : vector<8x1xi1> to vector<8x128xi1>
    %94 = arith.select %93, %86, %49 : vector<8x128xi1>, vector<8x128xf32>
    %95 = vector.shape_cast %91 : vector<8x1xi1> to vector<8x1xi1>
    %96 = vector.broadcast %95 : vector<8x1xi1> to vector<8x128xi1>
    %97 = arith.select %96, %88, %52 : vector<8x128xi1>, vector<8x128xf32>
    %c2_i32 = arith.constant 2 : i32
    %98 = arith.index_cast %c2_i32 : i32 to index
    %c0_32 = arith.constant 0 : index
    %c0_33 = arith.constant 0 : index
    %99 = vector.load %arg2[%98, %c0_32, %c0_33] : memref<8x8x512xf32, #tpu.memory_space<vmem>>, vector<1x8x512xf32>
    %100 = vector.shape_cast %99 : vector<1x8x512xf32> to vector<8x512xf32>
    %cst_34 = arith.constant dense<0.000000e+00> : vector<8x512xf32>
    %101 = tpu.matmul %97, %3, %cst_34 {dimension_numbers = #tpu.dot_dimension_numbers<[1], [0], [0], [1], [0, 0, 1, 1], [], []>} : vector<8x128xf32>, vector<128x512xf32>, vector<8x512xf32> -> vector<8x512xf32>
    %102 = arith.addf %100, %101 : vector<8x512xf32>
    %103 = vector.extract_strided_slice %102 {offsets = [0, 0], sizes = [8, 128], strides = [1, 1]} : vector<8x512xf32> to vector<8x128xf32>
    %cst_35 = arith.constant 5.000000e-01 : f32
    %104 = vector.broadcast %cst_35 : f32 to vector<8x128xf32>
    %105 = arith.mulf %104, %103 : vector<8x128xf32>
    %106 = math.tanh %105 : vector<8x128xf32>
    %cst_36 = arith.constant 1.000000e+00 : f32
    %107 = vector.broadcast %cst_36 : f32 to vector<8x128xf32>
    %108 = arith.addf %106, %107 : vector<8x128xf32>
    %cst_37 = arith.constant 5.000000e-01 : f32
    %109 = vector.broadcast %cst_37 : f32 to vector<8x128xf32>
    %110 = arith.mulf %109, %108 : vector<8x128xf32>
    %111 = vector.extract_strided_slice %102 {offsets = [0, 128], sizes = [8, 128], strides = [1, 1]} : vector<8x512xf32> to vector<8x128xf32>
    %cst_38 = arith.constant 5.000000e-01 : f32
    %112 = vector.broadcast %cst_38 : f32 to vector<8x128xf32>
    %113 = arith.mulf %112, %111 : vector<8x128xf32>
    %114 = math.tanh %113 : vector<8x128xf32>
    %cst_39 = arith.constant 1.000000e+00 : f32
    %115 = vector.broadcast %cst_39 : f32 to vector<8x128xf32>
    %116 = arith.addf %114, %115 : vector<8x128xf32>
    %cst_40 = arith.constant 5.000000e-01 : f32
    %117 = vector.broadcast %cst_40 : f32 to vector<8x128xf32>
    %118 = arith.mulf %117, %116 : vector<8x128xf32>
    %119 = vector.extract_strided_slice %102 {offsets = [0, 256], sizes = [8, 128], strides = [1, 1]} : vector<8x512xf32> to vector<8x128xf32>
    %120 = math.tanh %119 : vector<8x128xf32>
    %121 = vector.extract_strided_slice %102 {offsets = [0, 384], sizes = [8, 128], strides = [1, 1]} : vector<8x512xf32> to vector<8x128xf32>
    %cst_41 = arith.constant 5.000000e-01 : f32
    %122 = vector.broadcast %cst_41 : f32 to vector<8x128xf32>
    %123 = arith.mulf %122, %121 : vector<8x128xf32>
    %124 = math.tanh %123 : vector<8x128xf32>
    %cst_42 = arith.constant 1.000000e+00 : f32
    %125 = vector.broadcast %cst_42 : f32 to vector<8x128xf32>
    %126 = arith.addf %124, %125 : vector<8x128xf32>
    %cst_43 = arith.constant 5.000000e-01 : f32
    %127 = vector.broadcast %cst_43 : f32 to vector<8x128xf32>
    %128 = arith.mulf %127, %126 : vector<8x128xf32>
    %129 = arith.mulf %118, %94 : vector<8x128xf32>
    %130 = arith.mulf %110, %120 : vector<8x128xf32>
    %131 = arith.addf %129, %130 : vector<8x128xf32>
    %132 = math.tanh %131 : vector<8x128xf32>
    %133 = arith.mulf %128, %132 : vector<8x128xf32>
    %134 = arith.addi %5, %c2_i32 : i32
    %135 = vector.broadcast %134 : i32 to vector<8x1xi32>
    %136 = arith.cmpi sgt, %4, %135 : vector<8x1xi32>
    %137 = vector.shape_cast %136 : vector<8x1xi1> to vector<8x1xi1>
    %138 = vector.broadcast %137 : vector<8x1xi1> to vector<8x128xi1>
    %139 = arith.select %138, %131, %94 : vector<8x128xi1>, vector<8x128xf32>
    %140 = vector.shape_cast %136 : vector<8x1xi1> to vector<8x1xi1>
    %141 = vector.broadcast %140 : vector<8x1xi1> to vector<8x128xi1>
    %142 = arith.select %141, %133, %97 : vector<8x128xi1>, vector<8x128xf32>
    %c3_i32 = arith.constant 3 : i32
    %143 = arith.index_cast %c3_i32 : i32 to index
    %c0_44 = arith.constant 0 : index
    %c0_45 = arith.constant 0 : index
    %144 = vector.load %arg2[%143, %c0_44, %c0_45] : memref<8x8x512xf32, #tpu.memory_space<vmem>>, vector<1x8x512xf32>
    %145 = vector.shape_cast %144 : vector<1x8x512xf32> to vector<8x512xf32>
    %cst_46 = arith.constant dense<0.000000e+00> : vector<8x512xf32>
    %146 = tpu.matmul %142, %3, %cst_46 {dimension_numbers = #tpu.dot_dimension_numbers<[1], [0], [0], [1], [0, 0, 1, 1], [], []>} : vector<8x128xf32>, vector<128x512xf32>, vector<8x512xf32> -> vector<8x512xf32>
    %147 = arith.addf %145, %146 : vector<8x512xf32>
    %148 = vector.extract_strided_slice %147 {offsets = [0, 0], sizes = [8, 128], strides = [1, 1]} : vector<8x512xf32> to vector<8x128xf32>
    %cst_47 = arith.constant 5.000000e-01 : f32
    %149 = vector.broadcast %cst_47 : f32 to vector<8x128xf32>
    %150 = arith.mulf %149, %148 : vector<8x128xf32>
    %151 = math.tanh %150 : vector<8x128xf32>
    %cst_48 = arith.constant 1.000000e+00 : f32
    %152 = vector.broadcast %cst_48 : f32 to vector<8x128xf32>
    %153 = arith.addf %151, %152 : vector<8x128xf32>
    %cst_49 = arith.constant 5.000000e-01 : f32
    %154 = vector.broadcast %cst_49 : f32 to vector<8x128xf32>
    %155 = arith.mulf %154, %153 : vector<8x128xf32>
    %156 = vector.extract_strided_slice %147 {offsets = [0, 128], sizes = [8, 128], strides = [1, 1]} : vector<8x512xf32> to vector<8x128xf32>
    %cst_50 = arith.constant 5.000000e-01 : f32
    %157 = vector.broadcast %cst_50 : f32 to vector<8x128xf32>
    %158 = arith.mulf %157, %156 : vector<8x128xf32>
    %159 = math.tanh %158 : vector<8x128xf32>
    %cst_51 = arith.constant 1.000000e+00 : f32
    %160 = vector.broadcast %cst_51 : f32 to vector<8x128xf32>
    %161 = arith.addf %159, %160 : vector<8x128xf32>
    %cst_52 = arith.constant 5.000000e-01 : f32
    %162 = vector.broadcast %cst_52 : f32 to vector<8x128xf32>
    %163 = arith.mulf %162, %161 : vector<8x128xf32>
    %164 = vector.extract_strided_slice %147 {offsets = [0, 256], sizes = [8, 128], strides = [1, 1]} : vector<8x512xf32> to vector<8x128xf32>
    %165 = math.tanh %164 : vector<8x128xf32>
    %166 = vector.extract_strided_slice %147 {offsets = [0, 384], sizes = [8, 128], strides = [1, 1]} : vector<8x512xf32> to vector<8x128xf32>
    %cst_53 = arith.constant 5.000000e-01 : f32
    %167 = vector.broadcast %cst_53 : f32 to vector<8x128xf32>
    %168 = arith.mulf %167, %166 : vector<8x128xf32>
    %169 = math.tanh %168 : vector<8x128xf32>
    %cst_54 = arith.constant 1.000000e+00 : f32
    %170 = vector.broadcast %cst_54 : f32 to vector<8x128xf32>
    %171 = arith.addf %169, %170 : vector<8x128xf32>
    %cst_55 = arith.constant 5.000000e-01 : f32
    %172 = vector.broadcast %cst_55 : f32 to vector<8x128xf32>
    %173 = arith.mulf %172, %171 : vector<8x128xf32>
    %174 = arith.mulf %163, %139 : vector<8x128xf32>
    %175 = arith.mulf %155, %165 : vector<8x128xf32>
    %176 = arith.addf %174, %175 : vector<8x128xf32>
    %177 = math.tanh %176 : vector<8x128xf32>
    %178 = arith.mulf %173, %177 : vector<8x128xf32>
    %179 = arith.addi %5, %c3_i32 : i32
    %180 = vector.broadcast %179 : i32 to vector<8x1xi32>
    %181 = arith.cmpi sgt, %4, %180 : vector<8x1xi32>
    %182 = vector.shape_cast %181 : vector<8x1xi1> to vector<8x1xi1>
    %183 = vector.broadcast %182 : vector<8x1xi1> to vector<8x128xi1>
    %184 = arith.select %183, %176, %139 : vector<8x128xi1>, vector<8x128xf32>
    %185 = vector.shape_cast %181 : vector<8x1xi1> to vector<8x1xi1>
    %186 = vector.broadcast %185 : vector<8x1xi1> to vector<8x128xi1>
    %187 = arith.select %186, %178, %142 : vector<8x128xi1>, vector<8x128xf32>
    %c4_i32 = arith.constant 4 : i32
    %188 = arith.index_cast %c4_i32 : i32 to index
    %c0_56 = arith.constant 0 : index
    %c0_57 = arith.constant 0 : index
    %189 = vector.load %arg2[%188, %c0_56, %c0_57] : memref<8x8x512xf32, #tpu.memory_space<vmem>>, vector<1x8x512xf32>
    %190 = vector.shape_cast %189 : vector<1x8x512xf32> to vector<8x512xf32>
    %cst_58 = arith.constant dense<0.000000e+00> : vector<8x512xf32>
    %191 = tpu.matmul %187, %3, %cst_58 {dimension_numbers = #tpu.dot_dimension_numbers<[1], [0], [0], [1], [0, 0, 1, 1], [], []>} : vector<8x128xf32>, vector<128x512xf32>, vector<8x512xf32> -> vector<8x512xf32>
    %192 = arith.addf %190, %191 : vector<8x512xf32>
    %193 = vector.extract_strided_slice %192 {offsets = [0, 0], sizes = [8, 128], strides = [1, 1]} : vector<8x512xf32> to vector<8x128xf32>
    %cst_59 = arith.constant 5.000000e-01 : f32
    %194 = vector.broadcast %cst_59 : f32 to vector<8x128xf32>
    %195 = arith.mulf %194, %193 : vector<8x128xf32>
    %196 = math.tanh %195 : vector<8x128xf32>
    %cst_60 = arith.constant 1.000000e+00 : f32
    %197 = vector.broadcast %cst_60 : f32 to vector<8x128xf32>
    %198 = arith.addf %196, %197 : vector<8x128xf32>
    %cst_61 = arith.constant 5.000000e-01 : f32
    %199 = vector.broadcast %cst_61 : f32 to vector<8x128xf32>
    %200 = arith.mulf %199, %198 : vector<8x128xf32>
    %201 = vector.extract_strided_slice %192 {offsets = [0, 128], sizes = [8, 128], strides = [1, 1]} : vector<8x512xf32> to vector<8x128xf32>
    %cst_62 = arith.constant 5.000000e-01 : f32
    %202 = vector.broadcast %cst_62 : f32 to vector<8x128xf32>
    %203 = arith.mulf %202, %201 : vector<8x128xf32>
    %204 = math.tanh %203 : vector<8x128xf32>
    %cst_63 = arith.constant 1.000000e+00 : f32
    %205 = vector.broadcast %cst_63 : f32 to vector<8x128xf32>
    %206 = arith.addf %204, %205 : vector<8x128xf32>
    %cst_64 = arith.constant 5.000000e-01 : f32
    %207 = vector.broadcast %cst_64 : f32 to vector<8x128xf32>
    %208 = arith.mulf %207, %206 : vector<8x128xf32>
    %209 = vector.extract_strided_slice %192 {offsets = [0, 256], sizes = [8, 128], strides = [1, 1]} : vector<8x512xf32> to vector<8x128xf32>
    %210 = math.tanh %209 : vector<8x128xf32>
    %211 = vector.extract_strided_slice %192 {offsets = [0, 384], sizes = [8, 128], strides = [1, 1]} : vector<8x512xf32> to vector<8x128xf32>
    %cst_65 = arith.constant 5.000000e-01 : f32
    %212 = vector.broadcast %cst_65 : f32 to vector<8x128xf32>
    %213 = arith.mulf %212, %211 : vector<8x128xf32>
    %214 = math.tanh %213 : vector<8x128xf32>
    %cst_66 = arith.constant 1.000000e+00 : f32
    %215 = vector.broadcast %cst_66 : f32 to vector<8x128xf32>
    %216 = arith.addf %214, %215 : vector<8x128xf32>
    %cst_67 = arith.constant 5.000000e-01 : f32
    %217 = vector.broadcast %cst_67 : f32 to vector<8x128xf32>
    %218 = arith.mulf %217, %216 : vector<8x128xf32>
    %219 = arith.mulf %208, %184 : vector<8x128xf32>
    %220 = arith.mulf %200, %210 : vector<8x128xf32>
    %221 = arith.addf %219, %220 : vector<8x128xf32>
    %222 = math.tanh %221 : vector<8x128xf32>
    %223 = arith.mulf %218, %222 : vector<8x128xf32>
    %224 = arith.addi %5, %c4_i32 : i32
    %225 = vector.broadcast %224 : i32 to vector<8x1xi32>
    %226 = arith.cmpi sgt, %4, %225 : vector<8x1xi32>
    %227 = vector.shape_cast %226 : vector<8x1xi1> to vector<8x1xi1>
    %228 = vector.broadcast %227 : vector<8x1xi1> to vector<8x128xi1>
    %229 = arith.select %228, %221, %184 : vector<8x128xi1>, vector<8x128xf32>
    %230 = vector.shape_cast %226 : vector<8x1xi1> to vector<8x1xi1>
    %231 = vector.broadcast %230 : vector<8x1xi1> to vector<8x128xi1>
    %232 = arith.select %231, %223, %187 : vector<8x128xi1>, vector<8x128xf32>
    %c5_i32 = arith.constant 5 : i32
    %233 = arith.index_cast %c5_i32 : i32 to index
    %c0_68 = arith.constant 0 : index
    %c0_69 = arith.constant 0 : index
    %234 = vector.load %arg2[%233, %c0_68, %c0_69] : memref<8x8x512xf32, #tpu.memory_space<vmem>>, vector<1x8x512xf32>
    %235 = vector.shape_cast %234 : vector<1x8x512xf32> to vector<8x512xf32>
    %cst_70 = arith.constant dense<0.000000e+00> : vector<8x512xf32>
    %236 = tpu.matmul %232, %3, %cst_70 {dimension_numbers = #tpu.dot_dimension_numbers<[1], [0], [0], [1], [0, 0, 1, 1], [], []>} : vector<8x128xf32>, vector<128x512xf32>, vector<8x512xf32> -> vector<8x512xf32>
    %237 = arith.addf %235, %236 : vector<8x512xf32>
    %238 = vector.extract_strided_slice %237 {offsets = [0, 0], sizes = [8, 128], strides = [1, 1]} : vector<8x512xf32> to vector<8x128xf32>
    %cst_71 = arith.constant 5.000000e-01 : f32
    %239 = vector.broadcast %cst_71 : f32 to vector<8x128xf32>
    %240 = arith.mulf %239, %238 : vector<8x128xf32>
    %241 = math.tanh %240 : vector<8x128xf32>
    %cst_72 = arith.constant 1.000000e+00 : f32
    %242 = vector.broadcast %cst_72 : f32 to vector<8x128xf32>
    %243 = arith.addf %241, %242 : vector<8x128xf32>
    %cst_73 = arith.constant 5.000000e-01 : f32
    %244 = vector.broadcast %cst_73 : f32 to vector<8x128xf32>
    %245 = arith.mulf %244, %243 : vector<8x128xf32>
    %246 = vector.extract_strided_slice %237 {offsets = [0, 128], sizes = [8, 128], strides = [1, 1]} : vector<8x512xf32> to vector<8x128xf32>
    %cst_74 = arith.constant 5.000000e-01 : f32
    %247 = vector.broadcast %cst_74 : f32 to vector<8x128xf32>
    %248 = arith.mulf %247, %246 : vector<8x128xf32>
    %249 = math.tanh %248 : vector<8x128xf32>
    %cst_75 = arith.constant 1.000000e+00 : f32
    %250 = vector.broadcast %cst_75 : f32 to vector<8x128xf32>
    %251 = arith.addf %249, %250 : vector<8x128xf32>
    %cst_76 = arith.constant 5.000000e-01 : f32
    %252 = vector.broadcast %cst_76 : f32 to vector<8x128xf32>
    %253 = arith.mulf %252, %251 : vector<8x128xf32>
    %254 = vector.extract_strided_slice %237 {offsets = [0, 256], sizes = [8, 128], strides = [1, 1]} : vector<8x512xf32> to vector<8x128xf32>
    %255 = math.tanh %254 : vector<8x128xf32>
    %256 = vector.extract_strided_slice %237 {offsets = [0, 384], sizes = [8, 128], strides = [1, 1]} : vector<8x512xf32> to vector<8x128xf32>
    %cst_77 = arith.constant 5.000000e-01 : f32
    %257 = vector.broadcast %cst_77 : f32 to vector<8x128xf32>
    %258 = arith.mulf %257, %256 : vector<8x128xf32>
    %259 = math.tanh %258 : vector<8x128xf32>
    %cst_78 = arith.constant 1.000000e+00 : f32
    %260 = vector.broadcast %cst_78 : f32 to vector<8x128xf32>
    %261 = arith.addf %259, %260 : vector<8x128xf32>
    %cst_79 = arith.constant 5.000000e-01 : f32
    %262 = vector.broadcast %cst_79 : f32 to vector<8x128xf32>
    %263 = arith.mulf %262, %261 : vector<8x128xf32>
    %264 = arith.mulf %253, %229 : vector<8x128xf32>
    %265 = arith.mulf %245, %255 : vector<8x128xf32>
    %266 = arith.addf %264, %265 : vector<8x128xf32>
    %267 = math.tanh %266 : vector<8x128xf32>
    %268 = arith.mulf %263, %267 : vector<8x128xf32>
    %269 = arith.addi %5, %c5_i32 : i32
    %270 = vector.broadcast %269 : i32 to vector<8x1xi32>
    %271 = arith.cmpi sgt, %4, %270 : vector<8x1xi32>
    %272 = vector.shape_cast %271 : vector<8x1xi1> to vector<8x1xi1>
    %273 = vector.broadcast %272 : vector<8x1xi1> to vector<8x128xi1>
    %274 = arith.select %273, %266, %229 : vector<8x128xi1>, vector<8x128xf32>
    %275 = vector.shape_cast %271 : vector<8x1xi1> to vector<8x1xi1>
    %276 = vector.broadcast %275 : vector<8x1xi1> to vector<8x128xi1>
    %277 = arith.select %276, %268, %232 : vector<8x128xi1>, vector<8x128xf32>
    %c6_i32 = arith.constant 6 : i32
    %278 = arith.index_cast %c6_i32 : i32 to index
    %c0_80 = arith.constant 0 : index
    %c0_81 = arith.constant 0 : index
    %279 = vector.load %arg2[%278, %c0_80, %c0_81] : memref<8x8x512xf32, #tpu.memory_space<vmem>>, vector<1x8x512xf32>
    %280 = vector.shape_cast %279 : vector<1x8x512xf32> to vector<8x512xf32>
    %cst_82 = arith.constant dense<0.000000e+00> : vector<8x512xf32>
    %281 = tpu.matmul %277, %3, %cst_82 {dimension_numbers = #tpu.dot_dimension_numbers<[1], [0], [0], [1], [0, 0, 1, 1], [], []>} : vector<8x128xf32>, vector<128x512xf32>, vector<8x512xf32> -> vector<8x512xf32>
    %282 = arith.addf %280, %281 : vector<8x512xf32>
    %283 = vector.extract_strided_slice %282 {offsets = [0, 0], sizes = [8, 128], strides = [1, 1]} : vector<8x512xf32> to vector<8x128xf32>
    %cst_83 = arith.constant 5.000000e-01 : f32
    %284 = vector.broadcast %cst_83 : f32 to vector<8x128xf32>
    %285 = arith.mulf %284, %283 : vector<8x128xf32>
    %286 = math.tanh %285 : vector<8x128xf32>
    %cst_84 = arith.constant 1.000000e+00 : f32
    %287 = vector.broadcast %cst_84 : f32 to vector<8x128xf32>
    %288 = arith.addf %286, %287 : vector<8x128xf32>
    %cst_85 = arith.constant 5.000000e-01 : f32
    %289 = vector.broadcast %cst_85 : f32 to vector<8x128xf32>
    %290 = arith.mulf %289, %288 : vector<8x128xf32>
    %291 = vector.extract_strided_slice %282 {offsets = [0, 128], sizes = [8, 128], strides = [1, 1]} : vector<8x512xf32> to vector<8x128xf32>
    %cst_86 = arith.constant 5.000000e-01 : f32
    %292 = vector.broadcast %cst_86 : f32 to vector<8x128xf32>
    %293 = arith.mulf %292, %291 : vector<8x128xf32>
    %294 = math.tanh %293 : vector<8x128xf32>
    %cst_87 = arith.constant 1.000000e+00 : f32
    %295 = vector.broadcast %cst_87 : f32 to vector<8x128xf32>
    %296 = arith.addf %294, %295 : vector<8x128xf32>
    %cst_88 = arith.constant 5.000000e-01 : f32
    %297 = vector.broadcast %cst_88 : f32 to vector<8x128xf32>
    %298 = arith.mulf %297, %296 : vector<8x128xf32>
    %299 = vector.extract_strided_slice %282 {offsets = [0, 256], sizes = [8, 128], strides = [1, 1]} : vector<8x512xf32> to vector<8x128xf32>
    %300 = math.tanh %299 : vector<8x128xf32>
    %301 = vector.extract_strided_slice %282 {offsets = [0, 384], sizes = [8, 128], strides = [1, 1]} : vector<8x512xf32> to vector<8x128xf32>
    %cst_89 = arith.constant 5.000000e-01 : f32
    %302 = vector.broadcast %cst_89 : f32 to vector<8x128xf32>
    %303 = arith.mulf %302, %301 : vector<8x128xf32>
    %304 = math.tanh %303 : vector<8x128xf32>
    %cst_90 = arith.constant 1.000000e+00 : f32
    %305 = vector.broadcast %cst_90 : f32 to vector<8x128xf32>
    %306 = arith.addf %304, %305 : vector<8x128xf32>
    %cst_91 = arith.constant 5.000000e-01 : f32
    %307 = vector.broadcast %cst_91 : f32 to vector<8x128xf32>
    %308 = arith.mulf %307, %306 : vector<8x128xf32>
    %309 = arith.mulf %298, %274 : vector<8x128xf32>
    %310 = arith.mulf %290, %300 : vector<8x128xf32>
    %311 = arith.addf %309, %310 : vector<8x128xf32>
    %312 = math.tanh %311 : vector<8x128xf32>
    %313 = arith.mulf %308, %312 : vector<8x128xf32>
    %314 = arith.addi %5, %c6_i32 : i32
    %315 = vector.broadcast %314 : i32 to vector<8x1xi32>
    %316 = arith.cmpi sgt, %4, %315 : vector<8x1xi32>
    %317 = vector.shape_cast %316 : vector<8x1xi1> to vector<8x1xi1>
    %318 = vector.broadcast %317 : vector<8x1xi1> to vector<8x128xi1>
    %319 = arith.select %318, %311, %274 : vector<8x128xi1>, vector<8x128xf32>
    %320 = vector.shape_cast %316 : vector<8x1xi1> to vector<8x1xi1>
    %321 = vector.broadcast %320 : vector<8x1xi1> to vector<8x128xi1>
    %322 = arith.select %321, %313, %277 : vector<8x128xi1>, vector<8x128xf32>
    %c7_i32 = arith.constant 7 : i32
    %323 = arith.index_cast %c7_i32 : i32 to index
    %c0_92 = arith.constant 0 : index
    %c0_93 = arith.constant 0 : index
    %324 = vector.load %arg2[%323, %c0_92, %c0_93] : memref<8x8x512xf32, #tpu.memory_space<vmem>>, vector<1x8x512xf32>
    %325 = vector.shape_cast %324 : vector<1x8x512xf32> to vector<8x512xf32>
    %cst_94 = arith.constant dense<0.000000e+00> : vector<8x512xf32>
    %326 = tpu.matmul %322, %3, %cst_94 {dimension_numbers = #tpu.dot_dimension_numbers<[1], [0], [0], [1], [0, 0, 1, 1], [], []>} : vector<8x128xf32>, vector<128x512xf32>, vector<8x512xf32> -> vector<8x512xf32>
    %327 = arith.addf %325, %326 : vector<8x512xf32>
    %328 = vector.extract_strided_slice %327 {offsets = [0, 0], sizes = [8, 128], strides = [1, 1]} : vector<8x512xf32> to vector<8x128xf32>
    %cst_95 = arith.constant 5.000000e-01 : f32
    %329 = vector.broadcast %cst_95 : f32 to vector<8x128xf32>
    %330 = arith.mulf %329, %328 : vector<8x128xf32>
    %331 = math.tanh %330 : vector<8x128xf32>
    %cst_96 = arith.constant 1.000000e+00 : f32
    %332 = vector.broadcast %cst_96 : f32 to vector<8x128xf32>
    %333 = arith.addf %331, %332 : vector<8x128xf32>
    %cst_97 = arith.constant 5.000000e-01 : f32
    %334 = vector.broadcast %cst_97 : f32 to vector<8x128xf32>
    %335 = arith.mulf %334, %333 : vector<8x128xf32>
    %336 = vector.extract_strided_slice %327 {offsets = [0, 128], sizes = [8, 128], strides = [1, 1]} : vector<8x512xf32> to vector<8x128xf32>
    %cst_98 = arith.constant 5.000000e-01 : f32
    %337 = vector.broadcast %cst_98 : f32 to vector<8x128xf32>
    %338 = arith.mulf %337, %336 : vector<8x128xf32>
    %339 = math.tanh %338 : vector<8x128xf32>
    %cst_99 = arith.constant 1.000000e+00 : f32
    %340 = vector.broadcast %cst_99 : f32 to vector<8x128xf32>
    %341 = arith.addf %339, %340 : vector<8x128xf32>
    %cst_100 = arith.constant 5.000000e-01 : f32
    %342 = vector.broadcast %cst_100 : f32 to vector<8x128xf32>
    %343 = arith.mulf %342, %341 : vector<8x128xf32>
    %344 = vector.extract_strided_slice %327 {offsets = [0, 256], sizes = [8, 128], strides = [1, 1]} : vector<8x512xf32> to vector<8x128xf32>
    %345 = math.tanh %344 : vector<8x128xf32>
    %346 = vector.extract_strided_slice %327 {offsets = [0, 384], sizes = [8, 128], strides = [1, 1]} : vector<8x512xf32> to vector<8x128xf32>
    %cst_101 = arith.constant 5.000000e-01 : f32
    %347 = vector.broadcast %cst_101 : f32 to vector<8x128xf32>
    %348 = arith.mulf %347, %346 : vector<8x128xf32>
    %349 = math.tanh %348 : vector<8x128xf32>
    %cst_102 = arith.constant 1.000000e+00 : f32
    %350 = vector.broadcast %cst_102 : f32 to vector<8x128xf32>
    %351 = arith.addf %349, %350 : vector<8x128xf32>
    %cst_103 = arith.constant 5.000000e-01 : f32
    %352 = vector.broadcast %cst_103 : f32 to vector<8x128xf32>
    %353 = arith.mulf %352, %351 : vector<8x128xf32>
    %354 = arith.mulf %343, %319 : vector<8x128xf32>
    %355 = arith.mulf %335, %345 : vector<8x128xf32>
    %356 = arith.addf %354, %355 : vector<8x128xf32>
    %357 = math.tanh %356 : vector<8x128xf32>
    %358 = arith.mulf %353, %357 : vector<8x128xf32>
    %359 = arith.addi %5, %c7_i32 : i32
    %360 = vector.broadcast %359 : i32 to vector<8x1xi32>
    %361 = arith.cmpi sgt, %4, %360 : vector<8x1xi32>
    %362 = vector.shape_cast %361 : vector<8x1xi1> to vector<8x1xi1>
    %363 = vector.broadcast %362 : vector<8x1xi1> to vector<8x128xi1>
    %364 = arith.select %363, %356, %319 : vector<8x128xi1>, vector<8x128xf32>
    %365 = vector.shape_cast %361 : vector<8x1xi1> to vector<8x1xi1>
    %366 = vector.broadcast %365 : vector<8x1xi1> to vector<8x128xi1>
    %367 = arith.select %366, %358, %322 : vector<8x128xi1>, vector<8x128xf32>
    %c8_i32_104 = arith.constant 8 : i32
    %c0_105 = arith.constant 0 : index
    %c0_106 = arith.constant 0 : index
    %368 = vector.load %arg6[%c0_105, %c0_106] : memref<8x128xf32, #tpu.memory_space<vmem>>, vector<8x128xf32>
    tpu.vector_store %arg6[%c0_105, %c0_106], %367 {strides = array<i32>} : memref<8x128xf32, #tpu.memory_space<vmem>>, vector<8x128xf32>,
    %c0_107 = arith.constant 0 : index
    %c0_108 = arith.constant 0 : index
    %369 = vector.load %arg7[%c0_107, %c0_108] : memref<8x128xf32, #tpu.memory_space<vmem>>, vector<8x128xf32>
    tpu.vector_store %arg7[%c0_107, %c0_108], %364 {strides = array<i32>} : memref<8x128xf32, #tpu.memory_space<vmem>>, vector<8x128xf32>,
    %c0_109 = arith.constant 0 : index
    %c0_110 = arith.constant 0 : index
    %370 = vector.load %arg5[%c0_109, %c0_110] : memref<8x128xf32, #tpu.memory_space<vmem>>, vector<8x128xf32>
    tpu.vector_store %arg5[%c0_109, %c0_110], %367 {strides = array<i32>} : memref<8x128xf32, #tpu.memory_space<vmem>>, vector<8x128xf32>,
    return
  }
  func.func @transform_0(%arg0: i32, %arg1: i32) -> (i32, i32, i32) {
    %c0_i32 = arith.constant 0 : i32
    %c0_i32_0 = arith.constant 0 : i32
    return %arg1, %arg0, %c0_i32 : i32, i32, i32
  }
  func.func @transform_1(%arg0: i32, %arg1: i32) -> (i32, i32) {
    %c0_i32 = arith.constant 0 : i32
    %c0_i32_0 = arith.constant 0 : i32
    %c0_i32_1 = arith.constant 0 : i32
    return %c0_i32, %c0_i32_0 : i32, i32
  }
  func.func @transform_2(%arg0: i32, %arg1: i32) -> (i32, i32) {
    %c0_i32 = arith.constant 0 : i32
    %c0_i32_0 = arith.constant 0 : i32
    return %arg0, %c0_i32 : i32, i32
  }
  func.func @transform_3(%arg0: i32, %arg1: i32) -> (i32, i32) {
    %c0_i32 = arith.constant 0 : i32
    %c0_i32_0 = arith.constant 0 : i32
    return %arg0, %c0_i32 : i32, i32
  }
}

</mosaic_0001>

<llo_original>
// kernel: lstm_forward_pallas.2
$region0: #{lstm_forward_pallas.2}
  #allocation0 [shape = 'u32[]', space=smem, size = 0x4, offset = 0x4, fixed_abs, tag = 'smem constant byte address 0x4 - core index']
  #allocation1 [shape = 'u32[144,128]{1,0:T(1,128)}', space=vmem, size = 0x12000, scoped, tag = 'internal scratch']
  #allocation2 [shape = 'f32[8,128]{1,0:T(8,128)}', space=vmem, size = 0x1000, scoped, tag = 'scratch operand']
  #allocation3 [shape = 'f32[8,128]{1,0:T(8,128)}', space=vmem, size = 0x1000, scoped, tag = 'scratch operand']
  %s0 = inlined_call_operand.hbm [shape: f32[8,8,512], index: 0, kind: input, shape index: {}]
  %s1 = inlined_call_operand.hbm [shape: f32[128,512], index: 1, kind: input, shape index: {}]
  %s2 = inlined_call_operand.hbm [shape: s32[8,1], index: 2, kind: input, shape index: {}]
  %s3 = inlined_call_operand.hbm [shape: f32[8,8,128], index: 3, kind: output, shape index: {}]
  %s4 = sld [smem:[#allocation0]]
  $region38: #{lstm_forward_pallas.2} parent=0
    _
  %s6 = ssub.s32 1, %s4
  %s7 = scalar_select 0, %s6, %s4
  $region1: #{lstm_forward_pallas.2} parent=0
    #allocation4 [shape = 'u8[131072]{0}', space=vmem, size = 0x20000, scoped, tag = 'input window, operand 0, single buffered']
    #allocation5 [shape = 's32[1]{0}', space=sflag, size = 0x4, scoped, tag = 'scoped memory for lstm_forward_pallas.2']
    #allocation6 [shape = 's32[1]{0}', space=sflag, size = 0x4, scoped, tag = 'scoped memory for lstm_forward_pallas.2']
    #allocation7 [shape = 'u8[262144]{0}', space=vmem, size = 0x40000, scoped, tag = 'input window, operand 1, single buffered']
    #allocation8 [shape = 's32[1]{0}', space=sflag, size = 0x4, scoped, tag = 'scoped memory for lstm_forward_pallas.2']
    #allocation9 [shape = 'u8[4096]{0}', space=vmem, size = 0x1000, scoped, tag = 'input window, operand 2, single buffered']
    #allocation10 [shape = 'u8[32768]{0}', space=vmem, size = 0x8000, scoped, tag = 'output window, operand 0, single buffered']
    %8 = vsyncpa [#allocation5], 0
    %9 = vsyncpa [#allocation8], 0
    %10 = vsyncpa [#allocation6], 0
    // Predicated region
    $region2: #{lstm_forward_pallas.2} parent=1 // pred_check
      _
    $region3: #{lstm_forward_pallas.2} parent=1 // pred_check_branch
      %12 = sbr.rel (0) target = $region5
    $region4: #{lstm_forward_pallas.2} parent=1 // pred_region
      %s14 = ssub.s32 4096, 4096
      %15 = vsyncadd [#allocation5], %s14
      %s16 = sshll.u32 [#allocation4], 4
      %s17 = int_to_ptr.vmem [resolvable:$true] %s16
      %22 = dma.hbm_to_vmem [thread:$0]  %s0, 4096, %s17, [#allocation5], 512, 512, 32
    $region5: #{lstm_forward_pallas.2} parent=1 // pred_fallthru
      _
    // Predicated region
    $region6: #{lstm_forward_pallas.2} parent=1 // pred_check
      _
    $region7: #{lstm_forward_pallas.2} parent=1 // pred_check_branch
      %24 = sbr.rel (0) target = $region9
    $region8: #{lstm_forward_pallas.2} parent=1 // pred_region
      %s26 = ssub.s32 8192, 8192
      %27 = vsyncadd [#allocation8], %s26
      %s28 = sshll.u32 [#allocation7], 4
      %s29 = int_to_ptr.vmem [resolvable:$true] %s28
      %34 = dma.hbm_to_vmem [thread:$0]  %s1, 8192, %s29, [#allocation8], 512, 512, 32
    $region9: #{lstm_forward_pallas.2} parent=1 // pred_fallthru
      _
    // Predicated region
    $region10: #{lstm_forward_pallas.2} parent=1 // pred_check
      _
    $region11: #{lstm_forward_pallas.2} parent=1 // pred_check_branch
      %36 = sbr.rel (0) target = $region13
    $region12: #{lstm_forward_pallas.2} parent=1 // pred_region
      %s38 = ssub.s32 128, 128
      %39 = vsyncadd [#allocation8], %s38
      %s41 = sshll.u32 [#allocation9], 4
      %s42 = int_to_ptr.vmem [resolvable:$true] %s41
      %44 = dma.hbm_to_vmem [thread:$0]  %s2, 128, %s42, [#allocation8]
    $region13: #{lstm_forward_pallas.2} parent=1 // pred_fallthru
      _
    // Predicated region
    $region14: #{lstm_forward_pallas.2} parent=1 // pred_check
      _
    $region15: #{lstm_forward_pallas.2} parent=1 // pred_check_branch
      %46 = sbr.rel (0) target = $region17
    $region16: #{lstm_forward_pallas.2} parent=1 // pred_region
      %47 = dma.done [#allocation5], 4096
    $region17: #{lstm_forward_pallas.2} parent=1 // pred_fallthru
      _
    // Predicated region
    $region18: #{lstm_forward_pallas.2} parent=1 // pred_check
      _
    $region19: #{lstm_forward_pallas.2} parent=1 // pred_check_branch
      %49 = sbr.rel (0) target = $region21
    $region20: #{lstm_forward_pallas.2} parent=1 // pred_region
      %50 = dma.done [#allocation8], 8192
    $region21: #{lstm_forward_pallas.2} parent=1 // pred_fallthru
      _
    // Predicated region
    $region22: #{lstm_forward_pallas.2} parent=1 // pred_check
      _
    $region23: #{lstm_forward_pallas.2} parent=1 // pred_check_branch
      %52 = sbr.rel (0) target = $region25
    $region24: #{lstm_forward_pallas.2} parent=1 // pred_region
      %53 = dma.done [#allocation8], 128
    $region25: #{lstm_forward_pallas.2} parent=1 // pred_fallthru
      _
    %p54 = scmp.eq.s32.totalorder 0, 0
    // Predicated region
    $region26: #{lstm_forward_pallas.2} parent=1 // pred_check
      %p55 = pneg %p54
    $region27: #{lstm_forward_pallas.2} parent=1 // pred_check_branch
      %57 = sbr.rel (%p55) target = $region29
    $region28: #{lstm_forward_pallas.2} parent=1 // pred_region
      %58 = vst [vmem:[#allocation2] sm:$0xff] 0.0
      %59 = vst [vmem:[#allocation3] sm:$0xff] 0.0
    $region29: #{lstm_forward_pallas.2} parent=1 // pred_fallthru
      _
    %v60 = vld [vmem:[#allocation7] sm:$0xff]
    %v61 = vld [vmem:[#allocation7 + $0x8] sm:$0xff]
    %v62 = vld [vmem:[#allocation7 + $0x10] sm:$0xff]
    %v63 = vld [vmem:[#allocation7 + $0x18] sm:$0xff]
    %v64 = vld [vmem:[#allocation7 + $0x20] sm:$0xff]
    %v65 = vld [vmem:[#allocation7 + $0x28] sm:$0xff]
    %v66 = vld [vmem:[#allocation7 + $0x30] sm:$0xff]
    %v67 = vld [vmem:[#allocation7 + $0x38] sm:$0xff]
    %v68 = vld [vmem:[#allocation7 + $0x40] sm:$0xff]
    %v69 = vld [vmem:[#allocation7 + $0x48] sm:$0xff]
    %v70 = vld [vmem:[#allocation7 + $0x50] sm:$0xff]
    %v71 = vld [vmem:[#allocation7 + $0x58] sm:$0xff]
    %v72 = vld [vmem:[#allocation7 + $0x60] sm:$0xff]
    %v73 = vld [vmem:[#allocation7 + $0x68] sm:$0xff]
    %v74 = vld [vmem:[#allocation7 + $0x70] sm:$0xff]
    %v75 = vld [vmem:[#allocation7 + $0x78] sm:$0xff]
    %v76 = vld [vmem:[#allocation7 + $0x80] sm:$0xff]
    %v77 = vld [vmem:[#allocation7 + $0x88] sm:$0xff]
    %v78 = vld [vmem:[#allocation7 + $0x90] sm:$0xff]
    %v79 = vld [vmem:[#allocation7 + $0x98] sm:$0xff]
    %v80 = vld [vmem:[#allocation7 + $0xa0] sm:$0xff]
    %v81 = vld [vmem:[#allocation7 + $0xa8] sm:$0xff]
    %v82 = vld [vmem:[#allocation7 + $0xb0] sm:$0xff]
    %v83 = vld [vmem:[#allocation7 + $0xb8] sm:$0xff]
    %v84 = vld [vmem:[#allocation7 + $0xc0] sm:$0xff]
    %v85 = vld [vmem:[#allocation7 + $0xc8] sm:$0xff]
    %v86 = vld [vmem:[#allocation7 + $0xd0] sm:$0xff]
    %v87 = vld [vmem:[#allocation7 + $0xd8] sm:$0xff]
    %v88 = vld [vmem:[#allocation7 + $0xe0] sm:$0xff]
    %v89 = vld [vmem:[#allocation7 + $0xe8] sm:$0xff]
    %v90 = vld [vmem:[#allocation7 + $0xf0] sm:$0xff]
    %v91 = vld [vmem:[#allocation7 + $0xf8] sm:$0xff]
    %v92 = vld [vmem:[#allocation7 + $0x100] sm:$0xff]
    %v93 = vld [vmem:[#allocation7 + $0x108] sm:$0xff]
    %v94 = vld [vmem:[#allocation7 + $0x110] sm:$0xff]
    %v95 = vld [vmem:[#allocation7 + $0x118] sm:$0xff]
    %v96 = vld [vmem:[#allocation7 + $0x120] sm:$0xff]
    %v97 = vld [vmem:[#allocation7 + $0x128] sm:$0xff]
    %v98 = vld [vmem:[#allocation7 + $0x130] sm:$0xff]
    %v99 = vld [vmem:[#allocation7 + $0x138] sm:$0xff]
    %v100 = vld [vmem:[#allocation7 + $0x140] sm:$0xff]
    %v101 = vld [vmem:[#allocation7 + $0x148] sm:$0xff]
    %v102 = vld [vmem:[#allocation7 + $0x150] sm:$0xff]
    %v103 = vld [vmem:[#allocation7 + $0x158] sm:$0xff]
    %v104 = vld [vmem:[#allocation7 + $0x160] sm:$0xff]
    %v105 = vld [vmem:[#allocation7 + $0x168] sm:$0xff]
    %v106 = vld [vmem:[#allocation7 + $0x170] sm:$0xff]
    %v107 = vld [vmem:[#allocation7 + $0x178] sm:$0xff]
    %v108 = vld [vmem:[#allocation7 + $0x180] sm:$0xff]
    %v109 = vld [vmem:[#allocation7 + $0x188] sm:$0xff]
    %v110 = vld [vmem:[#allocation7 + $0x190] sm:$0xff]
    %v111 = vld [vmem:[#allocation7 + $0x198] sm:$0xff]
    %v112 = vld [vmem:[#allocation7 + $0x1a0] sm:$0xff]
    %v113 = vld [vmem:[#allocation7 + $0x1a8] sm:$0xff]
    %v114 = vld [vmem:[#allocation7 + $0x1b0] sm:$0xff]
    %v115 = vld [vmem:[#allocation7 + $0x1b8] sm:$0xff]
    %v116 = vld [vmem:[#allocation7 + $0x1c0] sm:$0xff]
    %v117 = vld [vmem:[#allocation7 + $0x1c8] sm:$0xff]
    %v118 = vld [vmem:[#allocation7 + $0x1d0] sm:$0xff]
    %v119 = vld [vmem:[#allocation7 + $0x1d8] sm:$0xff]
    %v120 = vld [vmem:[#allocation7 + $0x1e0] sm:$0xff]
    %v121 = vld [vmem:[#allocation7 + $0x1e8] sm:$0xff]
    %v122 = vld [vmem:[#allocation7 + $0x1f0] sm:$0xff]
    %v123 = vld [vmem:[#allocation7 + $0x1f8] sm:$0xff]
    %v124 = vld [vmem:[#allocation9] sm:$0xff]
    %s125 = smul.u32 0, 8
    %v126 = vld [vmem:[#allocation2] sm:$0xff]
    %v127 = vld [vmem:[#allocation3] sm:$0xff]
    %v128 = vld [vmem:[#allocation4] sm:$0xff]
    %v129 = vld [vmem:[#allocation4 + $0x8] sm:$0xff]
    %v130 = vld [vmem:[#allocation4 + $0x10] sm:$0xff]
    %v131 = vld [vmem:[#allocation4 + $0x18] sm:$0xff]
    %132 = vmatprep.subr.mxu0 %v61
    %133 = vmatpush1.msra.mxu0 %v60
    %134 = vmatprep.subr.mxu0 %v65
    %135 = vmatpush1.msra.mxu0 %v64
    %136 = vmatprep.subr.mxu0 %v69
    %137 = vmatpush1.msra.mxu0 %v68
    %138 = vmatprep.subr.mxu0 %v73
    %139 = vmatpush1.msra.mxu0 %v72
    %140 = vmatprep.subr.mxu0 %v77
    %141 = vmatpush1.msra.mxu0 %v76
    %142 = vmatprep.subr.mxu0 %v81
    %143 = vmatpush1.msra.mxu0 %v80
    %144 = vmatprep.subr.mxu0 %v85
    %145 = vmatpush1.msra.mxu0 %v84
    %146 = vmatprep.subr.mxu0 %v89
    %147 = vmatpush1.msra.mxu0 %v88
    %148 = vmatprep.subr.mxu0 %v93
    %149 = vmatpush1.msra.mxu0 %v92
    %150 = vmatprep.subr.mxu0 %v97
    %151 = vmatpush1.msra.mxu0 %v96
    %152 = vmatprep.subr.mxu0 %v101
    %153 = vmatpush1.msra.mxu0 %v100
    %154 = vmatprep.subr.mxu0 %v105
    %155 = vmatpush1.msra.mxu0 %v104
    %156 = vmatprep.subr.mxu0 %v109
    %157 = vmatpush1.msra.mxu0 %v108
    %158 = vmatprep.subr.mxu0 %v113
    %159 = vmatpush1.msra.mxu0 %v112
    %160 = vmatprep.subr.mxu0 %v117
    %161 = vmatpush1.msra.mxu0 %v116
    %162 = vmatprep.subr.mxu0 %v121
    %163 = vmatpush1.msra.mxu0 %v120
    %164 = vmatprep.subr.mxu0 0.0
    %165 = vmatpush1.msra.mxu0 0.0
    %166 = vmatprep.subr.mxu0 0.0
    %167 = vmatpush1.msra.mxu0 0.0
    %168 = vmatprep.subr.mxu0 0.0
    %169 = vmatpush1.msra.mxu0 0.0
    %170 = vmatprep.subr.mxu0 0.0
    %171 = vmatpush1.msra.mxu0 0.0
    %172 = vmatprep.subr.mxu0 0.0
    %173 = vmatpush1.msra.mxu0 0.0
    %174 = vmatprep.subr.mxu0 0.0
    %175 = vmatpush1.msra.mxu0 0.0
    %176 = vmatprep.subr.mxu0 0.0
    %177 = vmatpush1.msra.mxu0 0.0
    %178 = vmatprep.subr.mxu0 0.0
    %179 = vmatpush1.msra.mxu0 0.0
    %180 = vmatprep.subr.mxu0 0.0
    %181 = vmatpush1.msra.mxu0 0.0
    %182 = vmatprep.subr.mxu0 0.0
    %183 = vmatpush1.msra.mxu0 0.0
    %184 = vmatprep.subr.mxu0 0.0
    %185 = vmatpush1.msra.mxu0 0.0
    %186 = vmatprep.subr.mxu0 0.0
    %187 = vmatpush1.msra.mxu0 0.0
    %188 = vmatprep.subr.mxu0 0.0
    %189 = vmatpush1.msra.mxu0 0.0
    %190 = vmatprep.subr.mxu0 0.0
    %191 = vmatpush1.msra.mxu0 0.0
    %192 = vmatprep.subr.mxu0 0.0
    %193 = vmatpush1.msra.mxu0 0.0
    %194 = vmatprep.subr.mxu0 0.0
    %195 = vmatpush1.msra.mxu0 0.0
    %196 = vmatprep.mubr.f32.mxu0 0.0
    %197 = vmatmul.mubr.f32.gmra.mrb[0].mxu0 %v126
    %v198 = vpop.f32.mrb[0].mxu0
    %v199 = vadd.f32 0.0, %v198
    %v200 = vpop.f32.mrb[0].mxu0
    %v201 = vadd.f32 0.0, %v200
    %202 = vdwg.mxu0
    %203 = vmatprep.subr.mxu0 %v63
    %204 = vmatpush1.msra.mxu0 %v62
    %205 = vmatprep.subr.mxu0 %v67
    %206 = vmatpush1.msra.mxu0 %v66
    %207 = vmatprep.subr.mxu0 %v71
    %208 = vmatpush1.msra.mxu0 %v70
    %209 = vmatprep.subr.mxu0 %v75
    %210 = vmatpush1.msra.mxu0 %v74
    %211 = vmatprep.subr.mxu0 %v79
    %212 = vmatpush1.msra.mxu0 %v78
    %213 = vmatprep.subr.mxu0 %v83
    %214 = vmatpush1.msra.mxu0 %v82
    %215 = vmatprep.subr.mxu0 %v87
    %216 = vmatpush1.msra.mxu0 %v86
    %217 = vmatprep.subr.mxu0 %v91
    %218 = vmatpush1.msra.mxu0 %v90
    %219 = vmatprep.subr.mxu0 %v95
    %220 = vmatpush1.msra.mxu0 %v94
    %221 = vmatprep.subr.mxu0 %v99
    %222 = vmatpush1.msra.mxu0 %v98
    %223 = vmatprep.subr.mxu0 %v103
    %224 = vmatpush1.msra.mxu0 %v102
    %225 = vmatprep.subr.mxu0 %v107
    %226 = vmatpush1.msra.mxu0 %v106
    %227 = vmatprep.subr.mxu0 %v111
    %228 = vmatpush1.msra.mxu0 %v110
    %229 = vmatprep.subr.mxu0 %v115
    %230 = vmatpush1.msra.mxu0 %v114
    %231 = vmatprep.subr.mxu0 %v119
    %232 = vmatpush1.msra.mxu0 %v118
    %233 = vmatprep.subr.mxu0 %v123
    %234 = vmatpush1.msra.mxu0 %v122
    %235 = vmatprep.subr.mxu0 0.0
    %236 = vmatpush1.msra.mxu0 0.0
    %237 = vmatprep.subr.mxu0 0.0
    %238 = vmatpush1.msra.mxu0 0.0
    %239 = vmatprep.subr.mxu0 0.0
    %240 = vmatpush1.msra.mxu0 0.0
    %241 = vmatprep.subr.mxu0 0.0
    %242 = vmatpush1.msra.mxu0 0.0
    %243 = vmatprep.subr.mxu0 0.0
    %244 = vmatpush1.msra.mxu0 0.0
    %245 = vmatprep.subr.mxu0 0.0
    %246 = vmatpush1.msra.mxu0 0.0
    %247 = vmatprep.subr.mxu0 0.0
    %248 = vmatpush1.msra.mxu0 0.0
    %249 = vmatprep.subr.mxu0 0.0
    %250 = vmatpush1.msra.mxu0 0.0
    %251 = vmatprep.subr.mxu0 0.0
    %252 = vmatpush1.msra.mxu0 0.0
    %253 = vmatprep.subr.mxu0 0.0
    %254 = vmatpush1.msra.mxu0 0.0
    %255 = vmatprep.subr.mxu0 0.0
    %256 = vmatpush1.msra.mxu0 0.0
    %257 = vmatprep.subr.mxu0 0.0
    %258 = vmatpush1.msra.mxu0 0.0
    %259 = vmatprep.subr.mxu0 0.0
    %260 = vmatpush1.msra.mxu0 0.0
    %261 = vmatprep.subr.mxu0 0.0
    %262 = vmatpush1.msra.mxu0 0.0
    %263 = vmatprep.subr.mxu0 0.0
    %264 = vmatpush1.msra.mxu0 0.0
    %265 = vmatprep.subr.mxu0 0.0
    %266 = vmatpush1.msra.mxu0 0.0
    %267 = vmatprep.mubr.f32.mxu0 0.0
    %268 = vmatmul.mubr.f32.gmra.mrb[0].mxu0 %v126
    %v269 = vpop.f32.mrb[0].mxu0
    %v270 = vadd.f32 0.0, %v269
    %v271 = vpop.f32.mrb[0].mxu0
    %v272 = vadd.f32 0.0, %v271
    %273 = vdwg.mxu0
    %v274 = vadd.f32 %v128, %v199
    %v275 = vadd.f32 %v129, %v201
    %v276 = vadd.f32 %v130, %v270
    %v277 = vadd.f32 %v131, %v272
    %v278 = vmul.f32 %v274, 0.5
    %v279 = vtanh.pop %v278
    %v280 = vadd.f32 %v279, 1.0
    %v281 = vmul.f32 %v280, 0.5
    %v282 = vmul.f32 %v275, 0.5
    %v283 = vtanh.pop %v282
    %v284 = vadd.f32 %v283, 1.0
    %v285 = vmul.f32 %v284, 0.5
    %v286 = vtanh.pop %v276
    %v287 = vmul.f32 %v277, 0.5
    %v288 = vtanh.pop %v287
    %v289 = vadd.f32 %v288, 1.0
    %v290 = vmul.f32 %v289, 0.5
    %v291 = vmul.f32 %v285, %v127
    %v292 = vmul.f32 %v281, %v286
    %v293 = vadd.f32 %v291, %v292
    %v294 = vtanh.pop %v293
    %v295 = vmul.f32 %v290, %v294
    %v296 = vstv %s125
    %vm297 = vcmp.gt.s32.totalorder %v124, %v296
    %v298 = vsel %vm297, 1, 0
    %299 = vset.pattern.permute.xlu0 0
    %300 = vperm.xlu0 %299, %v298
    %v301 = vpop.permute.xlu0 %300
    %vm302 = vcmp.eq.s32.totalorder %v301, 1
    %v303 = vsel %vm302, %v293, %v127
    %v304 = vsel %vm302, %v295, %v126
    %305 = vst [vmem:[#allocation10] sm:$0xff] %v304
    %s306 = scalar_lea.vmem [#allocation4], 32
    %v307 = vld [vmem:[%s306] sm:$0xff]
    %v308 = vld [vmem:[%s306 + $0x8] sm:$0xff]
    %v309 = vld [vmem:[%s306 + $0x10] sm:$0xff]
    %v310 = vld [vmem:[%s306 + $0x18] sm:$0xff]
    %311 = vmatprep.subr.mxu0 %v61
    %312 = vmatpush1.msra.mxu0 %v60
    %313 = vmatprep.subr.mxu0 %v65
    %314 = vmatpush1.msra.mxu0 %v64
    %315 = vmatprep.subr.mxu0 %v69
    %316 = vmatpush1.msra.mxu0 %v68
    %317 = vmatprep.subr.mxu0 %v73
    %318 = vmatpush1.msra.mxu0 %v72
    %319 = vmatprep.subr.mxu0 %v77
    %320 = vmatpush1.msra.mxu0 %v76
    %321 = vmatprep.subr.mxu0 %v81
    %322 = vmatpush1.msra.mxu0 %v80
    %323 = vmatprep.subr.mxu0 %v85
    %324 = vmatpush1.msra.mxu0 %v84
    %325 = vmatprep.subr.mxu0 %v89
    %326 = vmatpush1.msra.mxu0 %v88
    %327 = vmatprep.subr.mxu0 %v93
    %328 = vmatpush1.msra.mxu0 %v92
    %329 = vmatprep.subr.mxu0 %v97
    %330 = vmatpush1.msra.mxu0 %v96
    %331 = vmatprep.subr.mxu0 %v101
    %332 = vmatpush1.msra.mxu0 %v100
    %333 = vmatprep.subr.mxu0 %v105
    %334 = vmatpush1.msra.mxu0 %v104
    %335 = vmatprep.subr.mxu0 %v109
    %336 = vmatpush1.msra.mxu0 %v108
    %337 = vmatprep.subr.mxu0 %v113
    %338 = vmatpush1.msra.mxu0 %v112
    %339 = vmatprep.subr.mxu0 %v117
    %340 = vmatpush1.msra.mxu0 %v116
    %341 = vmatprep.subr.mxu0 %v121
    %342 = vmatpush1.msra.mxu0 %v120
    %343 = vmatprep.subr.mxu0 0.0
    %344 = vmatpush1.msra.mxu0 0.0
    %345 = vmatprep.subr.mxu0 0.0
    %346 = vmatpush1.msra.mxu0 0.0
    %347 = vmatprep.subr.mxu0 0.0
    %348 = vmatpush1.msra.mxu0 0.0
    %349 = vmatprep.subr.mxu0 0.0
    %350 = vmatpush1.msra.mxu0 0.0
    %351 = vmatprep.subr.mxu0 0.0
    %352 = vmatpush1.msra.mxu0 0.0
    %353 = vmatprep.subr.mxu0 0.0
    %354 = vmatpush1.msra.mxu0 0.0
    %355 = vmatprep.subr.mxu0 0.0
    %356 = vmatpush1.msra.mxu0 0.0
    %357 = vmatprep.subr.mxu0 0.0
    %358 = vmatpush1.msra.mxu0 0.0
    %359 = vmatprep.subr.mxu0 0.0
    %360 = vmatpush1.msra.mxu0 0.0
    %361 = vmatprep.subr.mxu0 0.0
    %362 = vmatpush1.msra.mxu0 0.0
    %363 = vmatprep.subr.mxu0 0.0
    %364 = vmatpush1.msra.mxu0 0.0
    %365 = vmatprep.subr.mxu0 0.0
    %366 = vmatpush1.msra.mxu0 0.0
    %367 = vmatprep.subr.mxu0 0.0
    %368 = vmatpush1.msra.mxu0 0.0
    %369 = vmatprep.subr.mxu0 0.0
    %370 = vmatpush1.msra.mxu0 0.0
    %371 = vmatprep.subr.mxu0 0.0
    %372 = vmatpush1.msra.mxu0 0.0
    %373 = vmatprep.subr.mxu0 0.0
    %374 = vmatpush1.msra.mxu0 0.0
    %375 = vmatprep.mubr.f32.mxu0 0.0
    %376 = vmatmul.mubr.f32.gmra.mrb[0].mxu0 %v304
    %v377 = vpop.f32.mrb[0].mxu0
    %v378 = vadd.f32 0.0, %v377
    %v379 = vpop.f32.mrb[0].mxu0
    %v380 = vadd.f32 0.0, %v379
    %381 = vdwg.mxu0
    %382 = vmatprep.subr.mxu0 %v63
    %383 = vmatpush1.msra.mxu0 %v62
    %384 = vmatprep.subr.mxu0 %v67
    %385 = vmatpush1.msra.mxu0 %v66
    %386 = vmatprep.subr.mxu0 %v71
    %387 = vmatpush1.msra.mxu0 %v70
    %388 = vmatprep.subr.mxu0 %v75
    %389 = vmatpush1.msra.mxu0 %v74
    %390 = vmatprep.subr.mxu0 %v79
    %391 = vmatpush1.msra.mxu0 %v78
    %392 = vmatprep.subr.mxu0 %v83
    %393 = vmatpush1.msra.mxu0 %v82
    %394 = vmatprep.subr.mxu0 %v87
    %395 = vmatpush1.msra.mxu0 %v86
    %396 = vmatprep.subr.mxu0 %v91
    %397 = vmatpush1.msra.mxu0 %v90
    %398 = vmatprep.subr.mxu0 %v95
    %399 = vmatpush1.msra.mxu0 %v94
    %400 = vmatprep.subr.mxu0 %v99
    %401 = vmatpush1.msra.mxu0 %v98
    %402 = vmatprep.subr.mxu0 %v103
    %403 = vmatpush1.msra.mxu0 %v102
    %404 = vmatprep.subr.mxu0 %v107
    %405 = vmatpush1.msra.mxu0 %v106
    %406 = vmatprep.subr.mxu0 %v111
    %407 = vmatpush1.msra.mxu0 %v110
    %408 = vmatprep.subr.mxu0 %v115
    %409 = vmatpush1.msra.mxu0 %v114
    %410 = vmatprep.subr.mxu0 %v119
    %411 = vmatpush1.msra.mxu0 %v118
    %412 = vmatprep.subr.mxu0 %v123
    %413 = vmatpush1.msra.mxu0 %v122
    %414 = vmatprep.subr.mxu0 0.0
    %415 = vmatpush1.msra.mxu0 0.0
    %416 = vmatprep.subr.mxu0 0.0
    %417 = vmatpush1.msra.mxu0 0.0
    %418 = vmatprep.subr.mxu0 0.0
    %419 = vmatpush1.msra.mxu0 0.0
    %420 = vmatprep.subr.mxu0 0.0
    %421 = vmatpush1.msra.mxu0 0.0
    %422 = vmatprep.subr.mxu0 0.0
    %423 = vmatpush1.msra.mxu0 0.0
    %424 = vmatprep.subr.mxu0 0.0
    %425 = vmatpush1.msra.mxu0 0.0
    %426 = vmatprep.subr.mxu0 0.0
    %427 = vmatpush1.msra.mxu0 0.0
    %428 = vmatprep.subr.mxu0 0.0
    %429 = vmatpush1.msra.mxu0 0.0
    %430 = vmatprep.subr.mxu0 0.0
    %431 = vmatpush1.msra.mxu0 0.0
    %432 = vmatprep.subr.mxu0 0.0
    %433 = vmatpush1.msra.mxu0 0.0
    %434 = vmatprep.subr.mxu0 0.0
    %435 = vmatpush1.msra.mxu0 0.0
    %436 = vmatprep.subr.mxu0 0.0
    %437 = vmatpush1.msra.mxu0 0.0
    %438 = vmatprep.subr.mxu0 0.0
    %439 = vmatpush1.msra.mxu0 0.0
    %440 = vmatprep.subr.mxu0 0.0
    %441 = vmatpush1.msra.mxu0 0.0
    %442 = vmatprep.subr.mxu0 0.0
    %443 = vmatpush1.msra.mxu0 0.0
    %444 = vmatprep.subr.mxu0 0.0
    %445 = vmatpush1.msra.mxu0 0.0
    %446 = vmatprep.mubr.f32.mxu0 0.0
    %447 = vmatmul.mubr.f32.gmra.mrb[0].mxu0 %v304
    %v448 = vpop.f32.mrb[0].mxu0
    %v449 = vadd.f32 0.0, %v448
    %v450 = vpop.f32.mrb[0].mxu0
    %v451 = vadd.f32 0.0, %v450
    %452 = vdwg.mxu0
    %v453 = vadd.f32 %v307, %v378
    %v454 = vadd.f32 %v308, %v380
    %v455 = vadd.f32 %v309, %v449
    %v456 = vadd.f32 %v310, %v451
    %v457 = vmul.f32 %v453, 0.5
    %v458 = vtanh.pop %v457
    %v459 = vadd.f32 %v458, 1.0
    %v460 = vmul.f32 %v459, 0.5
    %v461 = vmul.f32 %v454, 0.5
    %v462 = vtanh.pop %v461
    %v463 = vadd.f32 %v462, 1.0
    %v464 = vmul.f32 %v463, 0.5
    %v465 = vtanh.pop %v455
    %v466 = vmul.f32 %v456, 0.5
    %v467 = vtanh.pop %v466
    %v468 = vadd.f32 %v467, 1.0
    %v469 = vmul.f32 %v468, 0.5
    %v470 = vmul.f32 %v464, %v303
    %v471 = vmul.f32 %v460, %v465
    %v472 = vadd.f32 %v470, %v471
    %v473 = vtanh.pop %v472
    %v474 = vmul.f32 %v469, %v473
    %s475 = sadd.s32 %s125, 1
    %v476 = vstv %s475
    %vm477 = vcmp.gt.s32.totalorder %v124, %v476
    %v478 = vsel %vm477, 1, 0
    %479 = vset.pattern.permute.xlu0 0
    %480 = vperm.xlu0 %479, %v478
    %v481 = vpop.permute.xlu0 %480
    %vm482 = vcmp.eq.s32.totalorder %v481, 1
    %v483 = vsel %vm482, %v472, %v303
    %v484 = vsel %vm482, %v474, %v304
    %s485 = scalar_lea.vmem [#allocation10], 8
    %486 = vst [vmem:[%s485] sm:$0xff] %v484
    %s487 = scalar_lea.vmem [#allocation4], 64
    %v488 = vld [vmem:[%s487] sm:$0xff]
    %v489 = vld [vmem:[%s487 + $0x8] sm:$0xff]
    %v490 = vld [vmem:[%s487 + $0x10] sm:$0xff]
    %v491 = vld [vmem:[%s487 + $0x18] sm:$0xff]
    %492 = vmatprep.subr.mxu0 %v61
    %493 = vmatpush1.msra.mxu0 %v60
    %494 = vmatprep.subr.mxu0 %v65
    %495 = vmatpush1.msra.mxu0 %v64
    %496 = vmatprep.subr.mxu0 %v69
    %497 = vmatpush1.msra.mxu0 %v68
    %498 = vmatprep.subr.mxu0 %v73
    %499 = vmatpush1.msra.mxu0 %v72
    %500 = vmatprep.subr.mxu0 %v77
    %501 = vmatpush1.msra.mxu0 %v76
    %502 = vmatprep.subr.mxu0 %v81
    %503 = vmatpush1.msra.mxu0 %v80
    %504 = vmatprep.subr.mxu0 %v85
    %505 = vmatpush1.msra.mxu0 %v84
    %506 = vmatprep.subr.mxu0 %v89
    %507 = vmatpush1.msra.mxu0 %v88
    %508 = vmatprep.subr.mxu0 %v93
    %509 = vmatpush1.msra.mxu0 %v92
    %510 = vmatprep.subr.mxu0 %v97
    %511 = vmatpush1.msra.mxu0 %v96
    %512 = vmatprep.subr.mxu0 %v101
    %513 = vmatpush1.msra.mxu0 %v100
    %514 = vmatprep.subr.mxu0 %v105
    %515 = vmatpush1.msra.mxu0 %v104
    %516 = vmatprep.subr.mxu0 %v109
    %517 = vmatpush1.msra.mxu0 %v108
    %518 = vmatprep.subr.mxu0 %v113
    %519 = vmatpush1.msra.mxu0 %v112
    %520 = vmatprep.subr.mxu0 %v117
    %521 = vmatpush1.msra.mxu0 %v116
    %522 = vmatprep.subr.mxu0 %v121
    %523 = vmatpush1.msra.mxu0 %v120
    %524 = vmatprep.subr.mxu0 0.0
    %525 = vmatpush1.msra.mxu0 0.0
    %526 = vmatprep.subr.mxu0 0.0
    %527 = vmatpush1.msra.mxu0 0.0
    %528 = vmatprep.subr.mxu0 0.0
    %529 = vmatpush1.msra.mxu0 0.0
    %530 = vmatprep.subr.mxu0 0.0
    %531 = vmatpush1.msra.mxu0 0.0
    %532 = vmatprep.subr.mxu0 0.0
    %533 = vmatpush1.msra.mxu0 0.0
    %534 = vmatprep.subr.mxu0 0.0
    %535 = vmatpush1.msra.mxu0 0.0
    %536 = vmatprep.subr.mxu0 0.0
    %537 = vmatpush1.msra.mxu0 0.0
    %538 = vmatprep.subr.mxu0 0.0
    %539 = vmatpush1.msra.mxu0 0.0
    %540 = vmatprep.subr.mxu0 0.0
    %541 = vmatpush1.msra.mxu0 0.0
    %542 = vmatprep.subr.mxu0 0.0
    %543 = vmatpush1.msra.mxu0 0.0
    %544 = vmatprep.subr.mxu0 0.0
    %545 = vmatpush1.msra.mxu0 0.0
    %546 = vmatprep.subr.mxu0 0.0
    %547 = vmatpush1.msra.mxu0 0.0
    %548 = vmatprep.subr.mxu0 0.0
    %549 = vmatpush1.msra.mxu0 0.0
    %550 = vmatprep.subr.mxu0 0.0
    %551 = vmatpush1.msra.mxu0 0.0
    %552 = vmatprep.subr.mxu0 0.0
    %553 = vmatpush1.msra.mxu0 0.0
    %554 = vmatprep.subr.mxu0 0.0
    %555 = vmatpush1.msra.mxu0 0.0
    %556 = vmatprep.mubr.f32.mxu0 0.0
    %557 = vmatmul.mubr.f32.gmra.mrb[0].mxu0 %v484
    %v558 = vpop.f32.mrb[0].mxu0
    %v559 = vadd.f32 0.0, %v558
    %v560 = vpop.f32.mrb[0].mxu0
    %v561 = vadd.f32 0.0, %v560
    %562 = vdwg.mxu0
    %563 = vmatprep.subr.mxu0 %v63
    %564 = vmatpush1.msra.mxu0 %v62
    %565 = vmatprep.subr.mxu0 %v67
    %566 = vmatpush1.msra.mxu0 %v66
    %567 = vmatprep.subr.mxu0 %v71
    %568 = vmatpush1.msra.mxu0 %v70
    %569 = vmatprep.subr.mxu0 %v75
    %570 = vmatpush1.msra.mxu0 %v74
    %571 = vmatprep.subr.mxu0 %v79
    %572 = vmatpush1.msra.mxu0 %v78
    %573 = vmatprep.subr.mxu0 %v83
    %574 = vmatpush1.msra.mxu0 %v82
    %575 = vmatprep.subr.mxu0 %v87
    %576 = vmatpush1.msra.mxu0 %v86
    %577 = vmatprep.subr.mxu0 %v91
    %578 = vmatpush1.msra.mxu0 %v90
    %579 = vmatprep.subr.mxu0 %v95
    %580 = vmatpush1.msra.mxu0 %v94
    %581 = vmatprep.subr.mxu0 %v99
    %582 = vmatpush1.msra.mxu0 %v98
    %583 = vmatprep.subr.mxu0 %v103
    %584 = vmatpush1.msra.mxu0 %v102
    %585 = vmatprep.subr.mxu0 %v107
    %586 = vmatpush1.msra.mxu0 %v106
    %587 = vmatprep.subr.mxu0 %v111
    %588 = vmatpush1.msra.mxu0 %v110
    %589 = vmatprep.subr.mxu0 %v115
    %590 = vmatpush1.msra.mxu0 %v114
    %591 = vmatprep.subr.mxu0 %v119
    %592 = vmatpush1.msra.mxu0 %v118
    %593 = vmatprep.subr.mxu0 %v123
    %594 = vmatpush1.msra.mxu0 %v122
    %595 = vmatprep.subr.mxu0 0.0
    %596 = vmatpush1.msra.mxu0 0.0
    %597 = vmatprep.subr.mxu0 0.0
    %598 = vmatpush1.msra.mxu0 0.0
    %599 = vmatprep.subr.mxu0 0.0
    %600 = vmatpush1.msra.mxu0 0.0
    %601 = vmatprep.subr.mxu0 0.0
    %602 = vmatpush1.msra.mxu0 0.0
    %603 = vmatprep.subr.mxu0 0.0
    %604 = vmatpush1.msra.mxu0 0.0
    %605 = vmatprep.subr.mxu0 0.0
    %606 = vmatpush1.msra.mxu0 0.0
    %607 = vmatprep.subr.mxu0 0.0
    %608 = vmatpush1.msra.mxu0 0.0
    %609 = vmatprep.subr.mxu0 0.0
    %610 = vmatpush1.msra.mxu0 0.0
    %611 = vmatprep.subr.mxu0 0.0
    %612 = vmatpush1.msra.mxu0 0.0
    %613 = vmatprep.subr.mxu0 0.0
    %614 = vmatpush1.msra.mxu0 0.0
    %615 = vmatprep.subr.mxu0 0.0
    %616 = vmatpush1.msra.mxu0 0.0
    %617 = vmatprep.subr.mxu0 0.0
    %618 = vmatpush1.msra.mxu0 0.0
    %619 = vmatprep.subr.mxu0 0.0
    %620 = vmatpush1.msra.mxu0 0.0
    %621 = vmatprep.subr.mxu0 0.0
    %622 = vmatpush1.msra.mxu0 0.0
    %623 = vmatprep.subr.mxu0 0.0
    %624 = vmatpush1.msra.mxu0 0.0
    %625 = vmatprep.subr.mxu0 0.0
    %626 = vmatpush1.msra.mxu0 0.0
    %627 = vmatprep.mubr.f32.mxu0 0.0
    %628 = vmatmul.mubr.f32.gmra.mrb[0].mxu0 %v484
    %v629 = vpop.f32.mrb[0].mxu0
    %v630 = vadd.f32 0.0, %v629
    %v631 = vpop.f32.mrb[0].mxu0
    %v632 = vadd.f32 0.0, %v631
    %633 = vdwg.mxu0
    %v634 = vadd.f32 %v488, %v559
    %v635 = vadd.f32 %v489, %v561
    %v636 = vadd.f32 %v490, %v630
    %v637 = vadd.f32 %v491, %v632
    %v638 = vmul.f32 %v634, 0.5
    %v639 = vtanh.pop %v638
    %v640 = vadd.f32 %v639, 1.0
    %v641 = vmul.f32 %v640, 0.5
    %v642 = vmul.f32 %v635, 0.5
    %v643 = vtanh.pop %v642
    %v644 = vadd.f32 %v643, 1.0
    %v645 = vmul.f32 %v644, 0.5
    %v646 = vtanh.pop %v636
    %v647 = vmul.f32 %v637, 0.5
    %v648 = vtanh.pop %v647
    %v649 = vadd.f32 %v648, 1.0
    %v650 = vmul.f32 %v649, 0.5
    %v651 = vmul.f32 %v645, %v483
    %v652 = vmul.f32 %v641, %v646
    %v653 = vadd.f32 %v651, %v652
    %v654 = vtanh.pop %v653
    %v655 = vmul.f32 %v650, %v654
    %s656 = sadd.s32 %s125, 2
    %v657 = vstv %s656
    %vm658 = vcmp.gt.s32.totalorder %v124, %v657
    %v659 = vsel %vm658, 1, 0
    %660 = vset.pattern.permute.xlu0 0
    %661 = vperm.xlu0 %660, %v659
    %v662 = vpop.permute.xlu0 %661
    %vm663 = vcmp.eq.s32.totalorder %v662, 1
    %v664 = vsel %vm663, %v653, %v483
    %v665 = vsel %vm663, %v655, %v484
    %s666 = scalar_lea.vmem [#allocation10], 16
    %667 = vst [vmem:[%s666] sm:$0xff] %v665
    %s668 = scalar_lea.vmem [#allocation4], 96
    %v669 = vld [vmem:[%s668] sm:$0xff]
    %v670 = vld [vmem:[%s668 + $0x8] sm:$0xff]
    %v671 = vld [vmem:[%s668 + $0x10] sm:$0xff]
    %v672 = vld [vmem:[%s668 + $0x18] sm:$0xff]
    %673 = vmatprep.subr.mxu0 %v61
    %674 = vmatpush1.msra.mxu0 %v60
    %675 = vmatprep.subr.mxu0 %v65
    %676 = vmatpush1.msra.mxu0 %v64
    %677 = vmatprep.subr.mxu0 %v69
    %678 = vmatpush1.msra.mxu0 %v68
    %679 = vmatprep.subr.mxu0 %v73
    %680 = vmatpush1.msra.mxu0 %v72
    %681 = vmatprep.subr.mxu0 %v77
    %682 = vmatpush1.msra.mxu0 %v76
    %683 = vmatprep.subr.mxu0 %v81
    %684 = vmatpush1.msra.mxu0 %v80
    %685 = vmatprep.subr.mxu0 %v85
    %686 = vmatpush1.msra.mxu0 %v84
    %687 = vmatprep.subr.mxu0 %v89
    %688 = vmatpush1.msra.mxu0 %v88
    %689 = vmatprep.subr.mxu0 %v93
    %690 = vmatpush1.msra.mxu0 %v92
    %691 = vmatprep.subr.mxu0 %v97
    %692 = vmatpush1.msra.mxu0 %v96
    %693 = vmatprep.subr.mxu0 %v101
    %694 = vmatpush1.msra.mxu0 %v100
    %695 = vmatprep.subr.mxu0 %v105
    %696 = vmatpush1.msra.mxu0 %v104
    %697 = vmatprep.subr.mxu0 %v109
    %698 = vmatpush1.msra.mxu0 %v108
    %699 = vmatprep.subr.mxu0 %v113
    %700 = vmatpush1.msra.mxu0 %v112
    %701 = vmatprep.subr.mxu0 %v117
    %702 = vmatpush1.msra.mxu0 %v116
    %703 = vmatprep.subr.mxu0 %v121
    %704 = vmatpush1.msra.mxu0 %v120
    %705 = vmatprep.subr.mxu0 0.0
    %706 = vmatpush1.msra.mxu0 0.0
    %707 = vmatprep.subr.mxu0 0.0
    %708 = vmatpush1.msra.mxu0 0.0
    %709 = vmatprep.subr.mxu0 0.0
    %710 = vmatpush1.msra.mxu0 0.0
    %711 = vmatprep.subr.mxu0 0.0
    %712 = vmatpush1.msra.mxu0 0.0
    %713 = vmatprep.subr.mxu0 0.0
    %714 = vmatpush1.msra.mxu0 0.0
    %715 = vmatprep.subr.mxu0 0.0
    %716 = vmatpush1.msra.mxu0 0.0
    %717 = vmatprep.subr.mxu0 0.0
    %718 = vmatpush1.msra.mxu0 0.0
    %719 = vmatprep.subr.mxu0 0.0
    %720 = vmatpush1.msra.mxu0 0.0
    %721 = vmatprep.subr.mxu0 0.0
    %722 = vmatpush1.msra.mxu0 0.0
    %723 = vmatprep.subr.mxu0 0.0
    %724 = vmatpush1.msra.mxu0 0.0
    %725 = vmatprep.subr.mxu0 0.0
    %726 = vmatpush1.msra.mxu0 0.0
    %727 = vmatprep.subr.mxu0 0.0
    %728 = vmatpush1.msra.mxu0 0.0
    %729 = vmatprep.subr.mxu0 0.0
    %730 = vmatpush1.msra.mxu0 0.0
    %731 = vmatprep.subr.mxu0 0.0
    %732 = vmatpush1.msra.mxu0 0.0
    %733 = vmatprep.subr.mxu0 0.0
    %734 = vmatpush1.msra.mxu0 0.0
    %735 = vmatprep.subr.mxu0 0.0
    %736 = vmatpush1.msra.mxu0 0.0
    %737 = vmatprep.mubr.f32.mxu0 0.0
    %738 = vmatmul.mubr.f32.gmra.mrb[0].mxu0 %v665
    %v739 = vpop.f32.mrb[0].mxu0
    %v740 = vadd.f32 0.0, %v739
    %v741 = vpop.f32.mrb[0].mxu0
    %v742 = vadd.f32 0.0, %v741
    %743 = vdwg.mxu0
    %744 = vmatprep.subr.mxu0 %v63
    %745 = vmatpush1.msra.mxu0 %v62
    %746 = vmatprep.subr.mxu0 %v67
    %747 = vmatpush1.msra.mxu0 %v66
    %748 = vmatprep.subr.mxu0 %v71
    %749 = vmatpush1.msra.mxu0 %v70
    %750 = vmatprep.subr.mxu0 %v75
    %751 = vmatpush1.msra.mxu0 %v74
    %752 = vmatprep.subr.mxu0 %v79
    %753 = vmatpush1.msra.mxu0 %v78
    %754 = vmatprep.subr.mxu0 %v83
    %755 = vmatpush1.msra.mxu0 %v82
    %756 = vmatprep.subr.mxu0 %v87
    %757 = vmatpush1.msra.mxu0 %v86
    %758 = vmatprep.subr.mxu0 %v91
    %759 = vmatpush1.msra.mxu0 %v90
    %760 = vmatprep.subr.mxu0 %v95
    %761 = vmatpush1.msra.mxu0 %v94
    %762 = vmatprep.subr.mxu0 %v99
    %763 = vmatpush1.msra.mxu0 %v98
    %764 = vmatprep.subr.mxu0 %v103
    %765 = vmatpush1.msra.mxu0 %v102
    %766 = vmatprep.subr.mxu0 %v107
    %767 = vmatpush1.msra.mxu0 %v106
    %768 = vmatprep.subr.mxu0 %v111
    %769 = vmatpush1.msra.mxu0 %v110
    %770 = vmatprep.subr.mxu0 %v115
    %771 = vmatpush1.msra.mxu0 %v114
    %772 = vmatprep.subr.mxu0 %v119
    %773 = vmatpush1.msra.mxu0 %v118
    %774 = vmatprep.subr.mxu0 %v123
    %775 = vmatpush1.msra.mxu0 %v122
    %776 = vmatprep.subr.mxu0 0.0
    %777 = vmatpush1.msra.mxu0 0.0
    %778 = vmatprep.subr.mxu0 0.0
    %779 = vmatpush1.msra.mxu0 0.0
    %780 = vmatprep.subr.mxu0 0.0
    %781 = vmatpush1.msra.mxu0 0.0
    %782 = vmatprep.subr.mxu0 0.0
    %783 = vmatpush1.msra.mxu0 0.0
    %784 = vmatprep.subr.mxu0 0.0
    %785 = vmatpush1.msra.mxu0 0.0
    %786 = vmatprep.subr.mxu0 0.0
    %787 = vmatpush1.msra.mxu0 0.0
    %788 = vmatprep.subr.mxu0 0.0
    %789 = vmatpush1.msra.mxu0 0.0
    %790 = vmatprep.subr.mxu0 0.0
    %791 = vmatpush1.msra.mxu0 0.0
    %792 = vmatprep.subr.mxu0 0.0
    %793 = vmatpush1.msra.mxu0 0.0
    %794 = vmatprep.subr.mxu0 0.0
    %795 = vmatpush1.msra.mxu0 0.0
    %796 = vmatprep.subr.mxu0 0.0
    %797 = vmatpush1.msra.mxu0 0.0
    %798 = vmatprep.subr.mxu0 0.0
    %799 = vmatpush1.msra.mxu0 0.0
    %800 = vmatprep.subr.mxu0 0.0
    %801 = vmatpush1.msra.mxu0 0.0
    %802 = vmatprep.subr.mxu0 0.0
    %803 = vmatpush1.msra.mxu0 0.0
    %804 = vmatprep.subr.mxu0 0.0
    %805 = vmatpush1.msra.mxu0 0.0
    %806 = vmatprep.subr.mxu0 0.0
    %807 = vmatpush1.msra.mxu0 0.0
    %808 = vmatprep.mubr.f32.mxu0 0.0
    %809 = vmatmul.mubr.f32.gmra.mrb[0].mxu0 %v665
    %v810 = vpop.f32.mrb[0].mxu0
    %v811 = vadd.f32 0.0, %v810
    %v812 = vpop.f32.mrb[0].mxu0
    %v813 = vadd.f32 0.0, %v812
    %814 = vdwg.mxu0
    %v815 = vadd.f32 %v669, %v740
    %v816 = vadd.f32 %v670, %v742
    %v817 = vadd.f32 %v671, %v811
    %v818 = vadd.f32 %v672, %v813
    %v819 = vmul.f32 %v815, 0.5
    %v820 = vtanh.pop %v819
    %v821 = vadd.f32 %v820, 1.0
    %v822 = vmul.f32 %v821, 0.5
    %v823 = vmul.f32 %v816, 0.5
    %v824 = vtanh.pop %v823
    %v825 = vadd.f32 %v824, 1.0
    %v826 = vmul.f32 %v825, 0.5
    %v827 = vtanh.pop %v817
    %v828 = vmul.f32 %v818, 0.5
    %v829 = vtanh.pop %v828
    %v830 = vadd.f32 %v829, 1.0
    %v831 = vmul.f32 %v830, 0.5
    %v832 = vmul.f32 %v826, %v664
    %v833 = vmul.f32 %v822, %v827
    %v834 = vadd.f32 %v832, %v833
    %v835 = vtanh.pop %v834
    %v836 = vmul.f32 %v831, %v835
    %s837 = sadd.s32 %s125, 3
    %v838 = vstv %s837
    %vm839 = vcmp.gt.s32.totalorder %v124, %v838
    %v840 = vsel %vm839, 1, 0
    %841 = vset.pattern.permute.xlu0 0
    %842 = vperm.xlu0 %841, %v840
    %v843 = vpop.permute.xlu0 %842
    %vm844 = vcmp.eq.s32.totalorder %v843, 1
    %v845 = vsel %vm844, %v834, %v664
    %v846 = vsel %vm844, %v836, %v665
    %s847 = scalar_lea.vmem [#allocation10], 24
    %848 = vst [vmem:[%s847] sm:$0xff] %v846
    %s849 = scalar_lea.vmem [#allocation4], 128
    %v850 = vld [vmem:[%s849] sm:$0xff]
    %v851 = vld [vmem:[%s849 + $0x8] sm:$0xff]
    %v852 = vld [vmem:[%s849 + $0x10] sm:$0xff]
    %v853 = vld [vmem:[%s849 + $0x18] sm:$0xff]
    %854 = vmatprep.subr.mxu0 %v61
    %855 = vmatpush1.msra.mxu0 %v60
    %856 = vmatprep.subr.mxu0 %v65
    %857 = vmatpush1.msra.mxu0 %v64
    %858 = vmatprep.subr.mxu0 %v69
    %859 = vmatpush1.msra.mxu0 %v68
    %860 = vmatprep.subr.mxu0 %v73
    %861 = vmatpush1.msra.mxu0 %v72
    %862 = vmatprep.subr.mxu0 %v77
    %863 = vmatpush1.msra.mxu0 %v76
    %864 = vmatprep.subr.mxu0 %v81
    %865 = vmatpush1.msra.mxu0 %v80
    %866 = vmatprep.subr.mxu0 %v85
    %867 = vmatpush1.msra.mxu0 %v84
    %868 = vmatprep.subr.mxu0 %v89
    %869 = vmatpush1.msra.mxu0 %v88
    %870 = vmatprep.subr.mxu0 %v93
    %871 = vmatpush1.msra.mxu0 %v92
    %872 = vmatprep.subr.mxu0 %v97
    %873 = vmatpush1.msra.mxu0 %v96
    %874 = vmatprep.subr.mxu0 %v101
    %875 = vmatpush1.msra.mxu0 %v100
    %876 = vmatprep.subr.mxu0 %v105
    %877 = vmatpush1.msra.mxu0 %v104
    %878 = vmatprep.subr.mxu0 %v109
    %879 = vmatpush1.msra.mxu0 %v108
    %880 = vmatprep.subr.mxu0 %v113
    %881 = vmatpush1.msra.mxu0 %v112
    %882 = vmatprep.subr.mxu0 %v117
    %883 = vmatpush1.msra.mxu0 %v116
    %884 = vmatprep.subr.mxu0 %v121
    %885 = vmatpush1.msra.mxu0 %v120
    %886 = vmatprep.subr.mxu0 0.0
    %887 = vmatpush1.msra.mxu0 0.0
    %888 = vmatprep.subr.mxu0 0.0
    %889 = vmatpush1.msra.mxu0 0.0
    %890 = vmatprep.subr.mxu0 0.0
    %891 = vmatpush1.msra.mxu0 0.0
    %892 = vmatprep.subr.mxu0 0.0
    %893 = vmatpush1.msra.mxu0 0.0
    %894 = vmatprep.subr.mxu0 0.0
    %895 = vmatpush1.msra.mxu0 0.0
    %896 = vmatprep.subr.mxu0 0.0
    %897 = vmatpush1.msra.mxu0 0.0
    %898 = vmatprep.subr.mxu0 0.0
    %899 = vmatpush1.msra.mxu0 0.0
    %900 = vmatprep.subr.mxu0 0.0
    %901 = vmatpush1.msra.mxu0 0.0
    %902 = vmatprep.subr.mxu0 0.0
    %903 = vmatpush1.msra.mxu0 0.0
    %904 = vmatprep.subr.mxu0 0.0
    %905 = vmatpush1.msra.mxu0 0.0
    %906 = vmatprep.subr.mxu0 0.0
    %907 = vmatpush1.msra.mxu0 0.0
    %908 = vmatprep.subr.mxu0 0.0
    %909 = vmatpush1.msra.mxu0 0.0
    %910 = vmatprep.subr.mxu0 0.0
    %911 = vmatpush1.msra.mxu0 0.0
    %912 = vmatprep.subr.mxu0 0.0
    %913 = vmatpush1.msra.mxu0 0.0
    %914 = vmatprep.subr.mxu0 0.0
    %915 = vmatpush1.msra.mxu0 0.0
    %916 = vmatprep.subr.mxu0 0.0
    %917 = vmatpush1.msra.mxu0 0.0
    %918 = vmatprep.mubr.f32.mxu0 0.0
    %919 = vmatmul.mubr.f32.gmra.mrb[0].mxu0 %v846
    %v920 = vpop.f32.mrb[0].mxu0
    %v921 = vadd.f32 0.0, %v920
    %v922 = vpop.f32.mrb[0].mxu0
    %v923 = vadd.f32 0.0, %v922
    %924 = vdwg.mxu0
    %925 = vmatprep.subr.mxu0 %v63
    %926 = vmatpush1.msra.mxu0 %v62
    %927 = vmatprep.subr.mxu0 %v67
    %928 = vmatpush1.msra.mxu0 %v66
    %929 = vmatprep.subr.mxu0 %v71
    %930 = vmatpush1.msra.mxu0 %v70
    %931 = vmatprep.subr.mxu0 %v75
    %932 = vmatpush1.msra.mxu0 %v74
    %933 = vmatprep.subr.mxu0 %v79
    %934 = vmatpush1.msra.mxu0 %v78
    %935 = vmatprep.subr.mxu0 %v83
    %936 = vmatpush1.msra.mxu0 %v82
    %937 = vmatprep.subr.mxu0 %v87
    %938 = vmatpush1.msra.mxu0 %v86
    %939 = vmatprep.subr.mxu0 %v91
    %940 = vmatpush1.msra.mxu0 %v90
    %941 = vmatprep.subr.mxu0 %v95
    %942 = vmatpush1.msra.mxu0 %v94
    %943 = vmatprep.subr.mxu0 %v99
    %944 = vmatpush1.msra.mxu0 %v98
    %945 = vmatprep.subr.mxu0 %v103
    %946 = vmatpush1.msra.mxu0 %v102
    %947 = vmatprep.subr.mxu0 %v107
    %948 = vmatpush1.msra.mxu0 %v106
    %949 = vmatprep.subr.mxu0 %v111
    %950 = vmatpush1.msra.mxu0 %v110
    %951 = vmatprep.subr.mxu0 %v115
    %952 = vmatpush1.msra.mxu0 %v114
    %953 = vmatprep.subr.mxu0 %v119
    %954 = vmatpush1.msra.mxu0 %v118
    %955 = vmatprep.subr.mxu0 %v123
    %956 = vmatpush1.msra.mxu0 %v122
    %957 = vmatprep.subr.mxu0 0.0
    %958 = vmatpush1.msra.mxu0 0.0
    %959 = vmatprep.subr.mxu0 0.0
    %960 = vmatpush1.msra.mxu0 0.0
    %961 = vmatprep.subr.mxu0 0.0
    %962 = vmatpush1.msra.mxu0 0.0
    %963 = vmatprep.subr.mxu0 0.0
    %964 = vmatpush1.msra.mxu0 0.0
    %965 = vmatprep.subr.mxu0 0.0
    %966 = vmatpush1.msra.mxu0 0.0
    %967 = vmatprep.subr.mxu0 0.0
    %968 = vmatpush1.msra.mxu0 0.0
    %969 = vmatprep.subr.mxu0 0.0
    %970 = vmatpush1.msra.mxu0 0.0
    %971 = vmatprep.subr.mxu0 0.0
    %972 = vmatpush1.msra.mxu0 0.0
    %973 = vmatprep.subr.mxu0 0.0
    %974 = vmatpush1.msra.mxu0 0.0
    %975 = vmatprep.subr.mxu0 0.0
    %976 = vmatpush1.msra.mxu0 0.0
    %977 = vmatprep.subr.mxu0 0.0
    %978 = vmatpush1.msra.mxu0 0.0
    %979 = vmatprep.subr.mxu0 0.0
    %980 = vmatpush1.msra.mxu0 0.0
    %981 = vmatprep.subr.mxu0 0.0
    %982 = vmatpush1.msra.mxu0 0.0
    %983 = vmatprep.subr.mxu0 0.0
    %984 = vmatpush1.msra.mxu0 0.0
    %985 = vmatprep.subr.mxu0 0.0
    %986 = vmatpush1.msra.mxu0 0.0
    %987 = vmatprep.subr.mxu0 0.0
    %988 = vmatpush1.msra.mxu0 0.0
    %989 = vmatprep.mubr.f32.mxu0 0.0
    %990 = vmatmul.mubr.f32.gmra.mrb[0].mxu0 %v846
    %v991 = vpop.f32.mrb[0].mxu0
    %v992 = vadd.f32 0.0, %v991
    %v993 = vpop.f32.mrb[0].mxu0
    %v994 = vadd.f32 0.0, %v993
    %995 = vdwg.mxu0
    %v996 = vadd.f32 %v850, %v921
    %v997 = vadd.f32 %v851, %v923
    %v998 = vadd.f32 %v852, %v992
    %v999 = vadd.f32 %v853, %v994
    %v1000 = vmul.f32 %v996, 0.5
    %v1001 = vtanh.pop %v1000
    %v1002 = vadd.f32 %v1001, 1.0
    %v1003 = vmul.f32 %v1002, 0.5
    %v1004 = vmul.f32 %v997, 0.5
    %v1005 = vtanh.pop %v1004
    %v1006 = vadd.f32 %v1005, 1.0
    %v1007 = vmul.f32 %v1006, 0.5
    %v1008 = vtanh.pop %v998
    %v1009 = vmul.f32 %v999, 0.5
    %v1010 = vtanh.pop %v1009
    %v1011 = vadd.f32 %v1010, 1.0
    %v1012 = vmul.f32 %v1011, 0.5
    %v1013 = vmul.f32 %v1007, %v845
    %v1014 = vmul.f32 %v1003, %v1008
    %v1015 = vadd.f32 %v1013, %v1014
    %v1016 = vtanh.pop %v1015
    %v1017 = vmul.f32 %v1012, %v1016
    %s1018 = sadd.s32 %s125, 4
    %v1019 = vstv %s1018
    %vm1020 = vcmp.gt.s32.totalorder %v124, %v1019
    %v1021 = vsel %vm1020, 1, 0
    %1022 = vset.pattern.permute.xlu0 0
    %1023 = vperm.xlu0 %1022, %v1021
    %v1024 = vpop.permute.xlu0 %1023
    %vm1025 = vcmp.eq.s32.totalorder %v1024, 1
    %v1026 = vsel %vm1025, %v1015, %v845
    %v1027 = vsel %vm1025, %v1017, %v846
    %s1028 = scalar_lea.vmem [#allocation10], 32
    %1029 = vst [vmem:[%s1028] sm:$0xff] %v1027
    %s1030 = scalar_lea.vmem [#allocation4], 160
    %v1031 = vld [vmem:[%s1030] sm:$0xff]
    %v1032 = vld [vmem:[%s1030 + $0x8] sm:$0xff]
    %v1033 = vld [vmem:[%s1030 + $0x10] sm:$0xff]
    %v1034 = vld [vmem:[%s1030 + $0x18] sm:$0xff]
    %1035 = vmatprep.subr.mxu0 %v61
    %1036 = vmatpush1.msra.mxu0 %v60
    %1037 = vmatprep.subr.mxu0 %v65
    %1038 = vmatpush1.msra.mxu0 %v64
    %1039 = vmatprep.subr.mxu0 %v69
    %1040 = vmatpush1.msra.mxu0 %v68
    %1041 = vmatprep.subr.mxu0 %v73
    %1042 = vmatpush1.msra.mxu0 %v72
    %1043 = vmatprep.subr.mxu0 %v77
    %1044 = vmatpush1.msra.mxu0 %v76
    %1045 = vmatprep.subr.mxu0 %v81
    %1046 = vmatpush1.msra.mxu0 %v80
    %1047 = vmatprep.subr.mxu0 %v85
    %1048 = vmatpush1.msra.mxu0 %v84
    %1049 = vmatprep.subr.mxu0 %v89
    %1050 = vmatpush1.msra.mxu0 %v88
    %1051 = vmatprep.subr.mxu0 %v93
    %1052 = vmatpush1.msra.mxu0 %v92
    %1053 = vmatprep.subr.mxu0 %v97
    %1054 = vmatpush1.msra.mxu0 %v96
    %1055 = vmatprep.subr.mxu0 %v101
    %1056 = vmatpush1.msra.mxu0 %v100
    %1057 = vmatprep.subr.mxu0 %v105
    %1058 = vmatpush1.msra.mxu0 %v104
    %1059 = vmatprep.subr.mxu0 %v109
    %1060 = vmatpush1.msra.mxu0 %v108
    %1061 = vmatprep.subr.mxu0 %v113
    %1062 = vmatpush1.msra.mxu0 %v112
    %1063 = vmatprep.subr.mxu0 %v117
    %1064 = vmatpush1.msra.mxu0 %v116
    %1065 = vmatprep.subr.mxu0 %v121
    %1066 = vmatpush1.msra.mxu0 %v120
    %1067 = vmatprep.subr.mxu0 0.0
    %1068 = vmatpush1.msra.mxu0 0.0
    %1069 = vmatprep.subr.mxu0 0.0
    %1070 = vmatpush1.msra.mxu0 0.0
    %1071 = vmatprep.subr.mxu0 0.0
    %1072 = vmatpush1.msra.mxu0 0.0
    %1073 = vmatprep.subr.mxu0 0.0
    %1074 = vmatpush1.msra.mxu0 0.0
    %1075 = vmatprep.subr.mxu0 0.0
    %1076 = vmatpush1.msra.mxu0 0.0
    %1077 = vmatprep.subr.mxu0 0.0
    %1078 = vmatpush1.msra.mxu0 0.0
    %1079 = vmatprep.subr.mxu0 0.0
    %1080 = vmatpush1.msra.mxu0 0.0
    %1081 = vmatprep.subr.mxu0 0.0
    %1082 = vmatpush1.msra.mxu0 0.0
    %1083 = vmatprep.subr.mxu0 0.0
    %1084 = vmatpush1.msra.mxu0 0.0
    %1085 = vmatprep.subr.mxu0 0.0
    %1086 = vmatpush1.msra.mxu0 0.0
    %1087 = vmatprep.subr.mxu0 0.0
    %1088 = vmatpush1.msra.mxu0 0.0
    %1089 = vmatprep.subr.mxu0 0.0
    %1090 = vmatpush1.msra.mxu0 0.0
    %1091 = vmatprep.subr.mxu0 0.0
    %1092 = vmatpush1.msra.mxu0 0.0
    %1093 = vmatprep.subr.mxu0 0.0
    %1094 = vmatpush1.msra.mxu0 0.0
    %1095 = vmatprep.subr.mxu0 0.0
    %1096 = vmatpush1.msra.mxu0 0.0
    %1097 = vmatprep.subr.mxu0 0.0
    %1098 = vmatpush1.msra.mxu0 0.0
    %1099 = vmatprep.mubr.f32.mxu0 0.0
    %1100 = vmatmul.mubr.f32.gmra.mrb[0].mxu0 %v1027
    %v1101 = vpop.f32.mrb[0].mxu0
    %v1102 = vadd.f32 0.0, %v1101
    %v1103 = vpop.f32.mrb[0].mxu0
    %v1104 = vadd.f32 0.0, %v1103
    %1105 = vdwg.mxu0
    %1106 = vmatprep.subr.mxu0 %v63
    %1107 = vmatpush1.msra.mxu0 %v62
    %1108 = vmatprep.subr.mxu0 %v67
    %1109 = vmatpush1.msra.mxu0 %v66
    %1110 = vmatprep.subr.mxu0 %v71
    %1111 = vmatpush1.msra.mxu0 %v70
    %1112 = vmatprep.subr.mxu0 %v75
    %1113 = vmatpush1.msra.mxu0 %v74
    %1114 = vmatprep.subr.mxu0 %v79
    %1115 = vmatpush1.msra.mxu0 %v78
    %1116 = vmatprep.subr.mxu0 %v83
    %1117 = vmatpush1.msra.mxu0 %v82
    %1118 = vmatprep.subr.mxu0 %v87
    %1119 = vmatpush1.msra.mxu0 %v86
    %1120 = vmatprep.subr.mxu0 %v91
    %1121 = vmatpush1.msra.mxu0 %v90
    %1122 = vmatprep.subr.mxu0 %v95
    %1123 = vmatpush1.msra.mxu0 %v94
    %1124 = vmatprep.subr.mxu0 %v99
    %1125 = vmatpush1.msra.mxu0 %v98
    %1126 = vmatprep.subr.mxu0 %v103
    %1127 = vmatpush1.msra.mxu0 %v102
    %1128 = vmatprep.subr.mxu0 %v107
    %1129 = vmatpush1.msra.mxu0 %v106
    %1130 = vmatprep.subr.mxu0 %v111
    %1131 = vmatpush1.msra.mxu0 %v110
    %1132 = vmatprep.subr.mxu0 %v115
    %1133 = vmatpush1.msra.mxu0 %v114
    %1134 = vmatprep.subr.mxu0 %v119
    %1135 = vmatpush1.msra.mxu0 %v118
    %1136 = vmatprep.subr.mxu0 %v123
    %1137 = vmatpush1.msra.mxu0 %v122
    %1138 = vmatprep.subr.mxu0 0.0
    %1139 = vmatpush1.msra.mxu0 0.0
    %1140 = vmatprep.subr.mxu0 0.0
    %1141 = vmatpush1.msra.mxu0 0.0
    %1142 = vmatprep.subr.mxu0 0.0
    %1143 = vmatpush1.msra.mxu0 0.0
    %1144 = vmatprep.subr.mxu0 0.0
    %1145 = vmatpush1.msra.mxu0 0.0
    %1146 = vmatprep.subr.mxu0 0.0
    %1147 = vmatpush1.msra.mxu0 0.0
    %1148 = vmatprep.subr.mxu0 0.0
    %1149 = vmatpush1.msra.mxu0 0.0
    %1150 = vmatprep.subr.mxu0 0.0
    %1151 = vmatpush1.msra.mxu0 0.0
    %1152 = vmatprep.subr.mxu0 0.0
    %1153 = vmatpush1.msra.mxu0 0.0
    %1154 = vmatprep.subr.mxu0 0.0
    %1155 = vmatpush1.msra.mxu0 0.0
    %1156 = vmatprep.subr.mxu0 0.0
    %1157 = vmatpush1.msra.mxu0 0.0
    %1158 = vmatprep.subr.mxu0 0.0
    %1159 = vmatpush1.msra.mxu0 0.0
    %1160 = vmatprep.subr.mxu0 0.0
    %1161 = vmatpush1.msra.mxu0 0.0
    %1162 = vmatprep.subr.mxu0 0.0
    %1163 = vmatpush1.msra.mxu0 0.0
    %1164 = vmatprep.subr.mxu0 0.0
    %1165 = vmatpush1.msra.mxu0 0.0
    %1166 = vmatprep.subr.mxu0 0.0
    %1167 = vmatpush1.msra.mxu0 0.0
    %1168 = vmatprep.subr.mxu0 0.0
    %1169 = vmatpush1.msra.mxu0 0.0
    %1170 = vmatprep.mubr.f32.mxu0 0.0
    %1171 = vmatmul.mubr.f32.gmra.mrb[0].mxu0 %v1027
    %v1172 = vpop.f32.mrb[0].mxu0
    %v1173 = vadd.f32 0.0, %v1172
    %v1174 = vpop.f32.mrb[0].mxu0
    %v1175 = vadd.f32 0.0, %v1174
    %1176 = vdwg.mxu0
    %v1177 = vadd.f32 %v1031, %v1102
    %v1178 = vadd.f32 %v1032, %v1104
    %v1179 = vadd.f32 %v1033, %v1173
    %v1180 = vadd.f32 %v1034, %v1175
    %v1181 = vmul.f32 %v1177, 0.5
    %v1182 = vtanh.pop %v1181
    %v1183 = vadd.f32 %v1182, 1.0
    %v1184 = vmul.f32 %v1183, 0.5
    %v1185 = vmul.f32 %v1178, 0.5
    %v1186 = vtanh.pop %v1185
    %v1187 = vadd.f32 %v1186, 1.0
    %v1188 = vmul.f32 %v1187, 0.5
    %v1189 = vtanh.pop %v1179
    %v1190 = vmul.f32 %v1180, 0.5
    %v1191 = vtanh.pop %v1190
    %v1192 = vadd.f32 %v1191, 1.0
    %v1193 = vmul.f32 %v1192, 0.5
    %v1194 = vmul.f32 %v1188, %v1026
    %v1195 = vmul.f32 %v1184, %v1189
    %v1196 = vadd.f32 %v1194, %v1195
    %v1197 = vtanh.pop %v1196
    %v1198 = vmul.f32 %v1193, %v1197
    %s1199 = sadd.s32 %s125, 5
    %v1200 = vstv %s1199
    %vm1201 = vcmp.gt.s32.totalorder %v124, %v1200
    %v1202 = vsel %vm1201, 1, 0
    %1203 = vset.pattern.permute.xlu0 0
    %1204 = vperm.xlu0 %1203, %v1202
    %v1205 = vpop.permute.xlu0 %1204
    %vm1206 = vcmp.eq.s32.totalorder %v1205, 1
    %v1207 = vsel %vm1206, %v1196, %v1026
    %v1208 = vsel %vm1206, %v1198, %v1027
    %s1209 = scalar_lea.vmem [#allocation10], 40
    %1210 = vst [vmem:[%s1209] sm:$0xff] %v1208
    %s1211 = scalar_lea.vmem [#allocation4], 192
    %v1212 = vld [vmem:[%s1211] sm:$0xff]
    %v1213 = vld [vmem:[%s1211 + $0x8] sm:$0xff]
    %v1214 = vld [vmem:[%s1211 + $0x10] sm:$0xff]
    %v1215 = vld [vmem:[%s1211 + $0x18] sm:$0xff]
    %1216 = vmatprep.subr.mxu0 %v61
    %1217 = vmatpush1.msra.mxu0 %v60
    %1218 = vmatprep.subr.mxu0 %v65
    %1219 = vmatpush1.msra.mxu0 %v64
    %1220 = vmatprep.subr.mxu0 %v69
    %1221 = vmatpush1.msra.mxu0 %v68
    %1222 = vmatprep.subr.mxu0 %v73
    %1223 = vmatpush1.msra.mxu0 %v72
    %1224 = vmatprep.subr.mxu0 %v77
    %1225 = vmatpush1.msra.mxu0 %v76
    %1226 = vmatprep.subr.mxu0 %v81
    %1227 = vmatpush1.msra.mxu0 %v80
    %1228 = vmatprep.subr.mxu0 %v85
    %1229 = vmatpush1.msra.mxu0 %v84
    %1230 = vmatprep.subr.mxu0 %v89
    %1231 = vmatpush1.msra.mxu0 %v88
    %1232 = vmatprep.subr.mxu0 %v93
    %1233 = vmatpush1.msra.mxu0 %v92
    %1234 = vmatprep.subr.mxu0 %v97
    %1235 = vmatpush1.msra.mxu0 %v96
    %1236 = vmatprep.subr.mxu0 %v101
    %1237 = vmatpush1.msra.mxu0 %v100
    %1238 = vmatprep.subr.mxu0 %v105
    %1239 = vmatpush1.msra.mxu0 %v104
    %1240 = vmatprep.subr.mxu0 %v109
    %1241 = vmatpush1.msra.mxu0 %v108
    %1242 = vmatprep.subr.mxu0 %v113
    %1243 = vmatpush1.msra.mxu0 %v112
    %1244 = vmatprep.subr.mxu0 %v117
    %1245 = vmatpush1.msra.mxu0 %v116
    %1246 = vmatprep.subr.mxu0 %v121
    %1247 = vmatpush1.msra.mxu0 %v120
    %1248 = vmatprep.subr.mxu0 0.0
    %1249 = vmatpush1.msra.mxu0 0.0
    %1250 = vmatprep.subr.mxu0 0.0
    %1251 = vmatpush1.msra.mxu0 0.0
    %1252 = vmatprep.subr.mxu0 0.0
    %1253 = vmatpush1.msra.mxu0 0.0
    %1254 = vmatprep.subr.mxu0 0.0
    %1255 = vmatpush1.msra.mxu0 0.0
    %1256 = vmatprep.subr.mxu0 0.0
    %1257 = vmatpush1.msra.mxu0 0.0
    %1258 = vmatprep.subr.mxu0 0.0
    %1259 = vmatpush1.msra.mxu0 0.0
    %1260 = vmatprep.subr.mxu0 0.0
    %1261 = vmatpush1.msra.mxu0 0.0
    %1262 = vmatprep.subr.mxu0 0.0
    %1263 = vmatpush1.msra.mxu0 0.0
    %1264 = vmatprep.subr.mxu0 0.0
    %1265 = vmatpush1.msra.mxu0 0.0
    %1266 = vmatprep.subr.mxu0 0.0
    %1267 = vmatpush1.msra.mxu0 0.0
    %1268 = vmatprep.subr.mxu0 0.0
    %1269 = vmatpush1.msra.mxu0 0.0
    %1270 = vmatprep.subr.mxu0 0.0
    %1271 = vmatpush1.msra.mxu0 0.0
    %1272 = vmatprep.subr.mxu0 0.0
    %1273 = vmatpush1.msra.mxu0 0.0
    %1274 = vmatprep.subr.mxu0 0.0
    %1275 = vmatpush1.msra.mxu0 0.0
    %1276 = vmatprep.subr.mxu0 0.0
    %1277 = vmatpush1.msra.mxu0 0.0
    %1278 = vmatprep.subr.mxu0 0.0
    %1279 = vmatpush1.msra.mxu0 0.0
    %1280 = vmatprep.mubr.f32.mxu0 0.0
    %1281 = vmatmul.mubr.f32.gmra.mrb[0].mxu0 %v1208
    %v1282 = vpop.f32.mrb[0].mxu0
    %v1283 = vadd.f32 0.0, %v1282
    %v1284 = vpop.f32.mrb[0].mxu0
    %v1285 = vadd.f32 0.0, %v1284
    %1286 = vdwg.mxu0
    %1287 = vmatprep.subr.mxu0 %v63
    %1288 = vmatpush1.msra.mxu0 %v62
    %1289 = vmatprep.subr.mxu0 %v67
    %1290 = vmatpush1.msra.mxu0 %v66
    %1291 = vmatprep.subr.mxu0 %v71
    %1292 = vmatpush1.msra.mxu0 %v70
    %1293 = vmatprep.subr.mxu0 %v75
    %1294 = vmatpush1.msra.mxu0 %v74
    %1295 = vmatprep.subr.mxu0 %v79
    %1296 = vmatpush1.msra.mxu0 %v78
    %1297 = vmatprep.subr.mxu0 %v83
    %1298 = vmatpush1.msra.mxu0 %v82
    %1299 = vmatprep.subr.mxu0 %v87
    %1300 = vmatpush1.msra.mxu0 %v86
    %1301 = vmatprep.subr.mxu0 %v91
    %1302 = vmatpush1.msra.mxu0 %v90
    %1303 = vmatprep.subr.mxu0 %v95
    %1304 = vmatpush1.msra.mxu0 %v94
    %1305 = vmatprep.subr.mxu0 %v99
    %1306 = vmatpush1.msra.mxu0 %v98
    %1307 = vmatprep.subr.mxu0 %v103
    %1308 = vmatpush1.msra.mxu0 %v102
    %1309 = vmatprep.subr.mxu0 %v107
    %1310 = vmatpush1.msra.mxu0 %v106
    %1311 = vmatprep.subr.mxu0 %v111
    %1312 = vmatpush1.msra.mxu0 %v110
    %1313 = vmatprep.subr.mxu0 %v115
    %1314 = vmatpush1.msra.mxu0 %v114
    %1315 = vmatprep.subr.mxu0 %v119
    %1316 = vmatpush1.msra.mxu0 %v118
    %1317 = vmatprep.subr.mxu0 %v123
    %1318 = vmatpush1.msra.mxu0 %v122
    %1319 = vmatprep.subr.mxu0 0.0
    %1320 = vmatpush1.msra.mxu0 0.0
    %1321 = vmatprep.subr.mxu0 0.0
    %1322 = vmatpush1.msra.mxu0 0.0
    %1323 = vmatprep.subr.mxu0 0.0
    %1324 = vmatpush1.msra.mxu0 0.0
    %1325 = vmatprep.subr.mxu0 0.0
    %1326 = vmatpush1.msra.mxu0 0.0
    %1327 = vmatprep.subr.mxu0 0.0
    %1328 = vmatpush1.msra.mxu0 0.0
    %1329 = vmatprep.subr.mxu0 0.0
    %1330 = vmatpush1.msra.mxu0 0.0
    %1331 = vmatprep.subr.mxu0 0.0
    %1332 = vmatpush1.msra.mxu0 0.0
    %1333 = vmatprep.subr.mxu0 0.0
    %1334 = vmatpush1.msra.mxu0 0.0
    %1335 = vmatprep.subr.mxu0 0.0
    %1336 = vmatpush1.msra.mxu0 0.0
    %1337 = vmatprep.subr.mxu0 0.0
    %1338 = vmatpush1.msra.mxu0 0.0
    %1339 = vmatprep.subr.mxu0 0.0
    %1340 = vmatpush1.msra.mxu0 0.0
    %1341 = vmatprep.subr.mxu0 0.0
    %1342 = vmatpush1.msra.mxu0 0.0
    %1343 = vmatprep.subr.mxu0 0.0
    %1344 = vmatpush1.msra.mxu0 0.0
    %1345 = vmatprep.subr.mxu0 0.0
    %1346 = vmatpush1.msra.mxu0 0.0
    %1347 = vmatprep.subr.mxu0 0.0
    %1348 = vmatpush1.msra.mxu0 0.0
    %1349 = vmatprep.subr.mxu0 0.0
    %1350 = vmatpush1.msra.mxu0 0.0
    %1351 = vmatprep.mubr.f32.mxu0 0.0
    %1352 = vmatmul.mubr.f32.gmra.mrb[0].mxu0 %v1208
    %v1353 = vpop.f32.mrb[0].mxu0
    %v1354 = vadd.f32 0.0, %v1353
    %v1355 = vpop.f32.mrb[0].mxu0
    %v1356 = vadd.f32 0.0, %v1355
    %1357 = vdwg.mxu0
    %v1358 = vadd.f32 %v1212, %v1283
    %v1359 = vadd.f32 %v1213, %v1285
    %v1360 = vadd.f32 %v1214, %v1354
    %v1361 = vadd.f32 %v1215, %v1356
    %v1362 = vmul.f32 %v1358, 0.5
    %v1363 = vtanh.pop %v1362
    %v1364 = vadd.f32 %v1363, 1.0
    %v1365 = vmul.f32 %v1364, 0.5
    %v1366 = vmul.f32 %v1359, 0.5
    %v1367 = vtanh.pop %v1366
    %v1368 = vadd.f32 %v1367, 1.0
    %v1369 = vmul.f32 %v1368, 0.5
    %v1370 = vtanh.pop %v1360
    %v1371 = vmul.f32 %v1361, 0.5
    %v1372 = vtanh.pop %v1371
    %v1373 = vadd.f32 %v1372, 1.0
    %v1374 = vmul.f32 %v1373, 0.5
    %v1375 = vmul.f32 %v1369, %v1207
    %v1376 = vmul.f32 %v1365, %v1370
    %v1377 = vadd.f32 %v1375, %v1376
    %v1378 = vtanh.pop %v1377
    %v1379 = vmul.f32 %v1374, %v1378
    %s1380 = sadd.s32 %s125, 6
    %v1381 = vstv %s1380
    %vm1382 = vcmp.gt.s32.totalorder %v124, %v1381
    %v1383 = vsel %vm1382, 1, 0
    %1384 = vset.pattern.permute.xlu0 0
    %1385 = vperm.xlu0 %1384, %v1383
    %v1386 = vpop.permute.xlu0 %1385
    %vm1387 = vcmp.eq.s32.totalorder %v1386, 1
    %v1388 = vsel %vm1387, %v1377, %v1207
    %v1389 = vsel %vm1387, %v1379, %v1208
    %s1390 = scalar_lea.vmem [#allocation10], 48
    %1391 = vst [vmem:[%s1390] sm:$0xff] %v1389
    %s1392 = scalar_lea.vmem [#allocation4], 224
    %v1393 = vld [vmem:[%s1392] sm:$0xff]
    %v1394 = vld [vmem:[%s1392 + $0x8] sm:$0xff]
    %v1395 = vld [vmem:[%s1392 + $0x10] sm:$0xff]
    %v1396 = vld [vmem:[%s1392 + $0x18] sm:$0xff]
    %1397 = vmatprep.subr.mxu0 %v61
    %1398 = vmatpush1.msra.mxu0 %v60
    %1399 = vmatprep.subr.mxu0 %v65
    %1400 = vmatpush1.msra.mxu0 %v64
    %1401 = vmatprep.subr.mxu0 %v69
    %1402 = vmatpush1.msra.mxu0 %v68
    %1403 = vmatprep.subr.mxu0 %v73
    %1404 = vmatpush1.msra.mxu0 %v72
    %1405 = vmatprep.subr.mxu0 %v77
    %1406 = vmatpush1.msra.mxu0 %v76
    %1407 = vmatprep.subr.mxu0 %v81
    %1408 = vmatpush1.msra.mxu0 %v80
    %1409 = vmatprep.subr.mxu0 %v85
    %1410 = vmatpush1.msra.mxu0 %v84
    %1411 = vmatprep.subr.mxu0 %v89
    %1412 = vmatpush1.msra.mxu0 %v88
    %1413 = vmatprep.subr.mxu0 %v93
    %1414 = vmatpush1.msra.mxu0 %v92
    %1415 = vmatprep.subr.mxu0 %v97
    %1416 = vmatpush1.msra.mxu0 %v96
    %1417 = vmatprep.subr.mxu0 %v101
    %1418 = vmatpush1.msra.mxu0 %v100
    %1419 = vmatprep.subr.mxu0 %v105
    %1420 = vmatpush1.msra.mxu0 %v104
    %1421 = vmatprep.subr.mxu0 %v109
    %1422 = vmatpush1.msra.mxu0 %v108
    %1423 = vmatprep.subr.mxu0 %v113
    %1424 = vmatpush1.msra.mxu0 %v112
    %1425 = vmatprep.subr.mxu0 %v117
    %1426 = vmatpush1.msra.mxu0 %v116
    %1427 = vmatprep.subr.mxu0 %v121
    %1428 = vmatpush1.msra.mxu0 %v120
    %1429 = vmatprep.subr.mxu0 0.0
    %1430 = vmatpush1.msra.mxu0 0.0
    %1431 = vmatprep.subr.mxu0 0.0
    %1432 = vmatpush1.msra.mxu0 0.0
    %1433 = vmatprep.subr.mxu0 0.0
    %1434 = vmatpush1.msra.mxu0 0.0
    %1435 = vmatprep.subr.mxu0 0.0
    %1436 = vmatpush1.msra.mxu0 0.0
    %1437 = vmatprep.subr.mxu0 0.0
    %1438 = vmatpush1.msra.mxu0 0.0
    %1439 = vmatprep.subr.mxu0 0.0
    %1440 = vmatpush1.msra.mxu0 0.0
    %1441 = vmatprep.subr.mxu0 0.0
    %1442 = vmatpush1.msra.mxu0 0.0
    %1443 = vmatprep.subr.mxu0 0.0
    %1444 = vmatpush1.msra.mxu0 0.0
    %1445 = vmatprep.subr.mxu0 0.0
    %1446 = vmatpush1.msra.mxu0 0.0
    %1447 = vmatprep.subr.mxu0 0.0
    %1448 = vmatpush1.msra.mxu0 0.0
    %1449 = vmatprep.subr.mxu0 0.0
    %1450 = vmatpush1.msra.mxu0 0.0
    %1451 = vmatprep.subr.mxu0 0.0
    %1452 = vmatpush1.msra.mxu0 0.0
    %1453 = vmatprep.subr.mxu0 0.0
    %1454 = vmatpush1.msra.mxu0 0.0
    %1455 = vmatprep.subr.mxu0 0.0
    %1456 = vmatpush1.msra.mxu0 0.0
    %1457 = vmatprep.subr.mxu0 0.0
    %1458 = vmatpush1.msra.mxu0 0.0
    %1459 = vmatprep.subr.mxu0 0.0
    %1460 = vmatpush1.msra.mxu0 0.0
    %1461 = vmatprep.mubr.f32.mxu0 0.0
    %1462 = vmatmul.mubr.f32.gmra.mrb[0].mxu0 %v1389
    %v1463 = vpop.f32.mrb[0].mxu0
    %v1464 = vadd.f32 0.0, %v1463
    %v1465 = vpop.f32.mrb[0].mxu0
    %v1466 = vadd.f32 0.0, %v1465
    %1467 = vdwg.mxu0
    %1468 = vmatprep.subr.mxu0 %v63
    %1469 = vmatpush1.msra.mxu0 %v62
    %1470 = vmatprep.subr.mxu0 %v67
    %1471 = vmatpush1.msra.mxu0 %v66
    %1472 = vmatprep.subr.mxu0 %v71
    %1473 = vmatpush1.msra.mxu0 %v70
    %1474 = vmatprep.subr.mxu0 %v75
    %1475 = vmatpush1.msra.mxu0 %v74
    %1476 = vmatprep.subr.mxu0 %v79
    %1477 = vmatpush1.msra.mxu0 %v78
    %1478 = vmatprep.subr.mxu0 %v83
    %1479 = vmatpush1.msra.mxu0 %v82
    %1480 = vmatprep.subr.mxu0 %v87
    %1481 = vmatpush1.msra.mxu0 %v86
    %1482 = vmatprep.subr.mxu0 %v91
    %1483 = vmatpush1.msra.mxu0 %v90
    %1484 = vmatprep.subr.mxu0 %v95
    %1485 = vmatpush1.msra.mxu0 %v94
    %1486 = vmatprep.subr.mxu0 %v99
    %1487 = vmatpush1.msra.mxu0 %v98
    %1488 = vmatprep.subr.mxu0 %v103
    %1489 = vmatpush1.msra.mxu0 %v102
    %1490 = vmatprep.subr.mxu0 %v107
    %1491 = vmatpush1.msra.mxu0 %v106
    %1492 = vmatprep.subr.mxu0 %v111
    %1493 = vmatpush1.msra.mxu0 %v110
    %1494 = vmatprep.subr.mxu0 %v115
    %1495 = vmatpush1.msra.mxu0 %v114
    %1496 = vmatprep.subr.mxu0 %v119
    %1497 = vmatpush1.msra.mxu0 %v118
    %1498 = vmatprep.subr.mxu0 %v123
    %1499 = vmatpush1.msra.mxu0 %v122
    %1500 = vmatprep.subr.mxu0 0.0
    %1501 = vmatpush1.msra.mxu0 0.0
    %1502 = vmatprep.subr.mxu0 0.0
    %1503 = vmatpush1.msra.mxu0 0.0
    %1504 = vmatprep.subr.mxu0 0.0
    %1505 = vmatpush1.msra.mxu0 0.0
    %1506 = vmatprep.subr.mxu0 0.0
    %1507 = vmatpush1.msra.mxu0 0.0
    %1508 = vmatprep.subr.mxu0 0.0
    %1509 = vmatpush1.msra.mxu0 0.0
    %1510 = vmatprep.subr.mxu0 0.0
    %1511 = vmatpush1.msra.mxu0 0.0
    %1512 = vmatprep.subr.mxu0 0.0
    %1513 = vmatpush1.msra.mxu0 0.0
    %1514 = vmatprep.subr.mxu0 0.0
    %1515 = vmatpush1.msra.mxu0 0.0
    %1516 = vmatprep.subr.mxu0 0.0
    %1517 = vmatpush1.msra.mxu0 0.0
    %1518 = vmatprep.subr.mxu0 0.0
    %1519 = vmatpush1.msra.mxu0 0.0
    %1520 = vmatprep.subr.mxu0 0.0
    %1521 = vmatpush1.msra.mxu0 0.0
    %1522 = vmatprep.subr.mxu0 0.0
    %1523 = vmatpush1.msra.mxu0 0.0
    %1524 = vmatprep.subr.mxu0 0.0
    %1525 = vmatpush1.msra.mxu0 0.0
    %1526 = vmatprep.subr.mxu0 0.0
    %1527 = vmatpush1.msra.mxu0 0.0
    %1528 = vmatprep.subr.mxu0 0.0
    %1529 = vmatpush1.msra.mxu0 0.0
    %1530 = vmatprep.subr.mxu0 0.0
    %1531 = vmatpush1.msra.mxu0 0.0
    %1532 = vmatprep.mubr.f32.mxu0 0.0
    %1533 = vmatmul.mubr.f32.gmra.mrb[0].mxu0 %v1389
    %v1534 = vpop.f32.mrb[0].mxu0
    %v1535 = vadd.f32 0.0, %v1534
    %v1536 = vpop.f32.mrb[0].mxu0
    %v1537 = vadd.f32 0.0, %v1536
    %1538 = vdwg.mxu0
    %v1539 = vadd.f32 %v1393, %v1464
    %v1540 = vadd.f32 %v1394, %v1466
    %v1541 = vadd.f32 %v1395, %v1535
    %v1542 = vadd.f32 %v1396, %v1537
    %v1543 = vmul.f32 %v1539, 0.5
    %v1544 = vtanh.pop %v1543
    %v1545 = vadd.f32 %v1544, 1.0
    %v1546 = vmul.f32 %v1545, 0.5
    %v1547 = vmul.f32 %v1540, 0.5
    %v1548 = vtanh.pop %v1547
    %v1549 = vadd.f32 %v1548, 1.0
    %v1550 = vmul.f32 %v1549, 0.5
    %v1551 = vtanh.pop %v1541
    %v1552 = vmul.f32 %v1542, 0.5
    %v1553 = vtanh.pop %v1552
    %v1554 = vadd.f32 %v1553, 1.0
    %v1555 = vmul.f32 %v1554, 0.5
    %v1556 = vmul.f32 %v1550, %v1388
    %v1557 = vmul.f32 %v1546, %v1551
    %v1558 = vadd.f32 %v1556, %v1557
    %v1559 = vtanh.pop %v1558
    %v1560 = vmul.f32 %v1555, %v1559
    %s1561 = sadd.s32 %s125, 7
    %v1562 = vstv %s1561
    %vm1563 = vcmp.gt.s32.totalorder %v124, %v1562
    %v1564 = vsel %vm1563, 1, 0
    %1565 = vset.pattern.permute.xlu0 0
    %1566 = vperm.xlu0 %1565, %v1564
    %v1567 = vpop.permute.xlu0 %1566
    %vm1568 = vcmp.eq.s32.totalorder %v1567, 1
    %v1569 = vsel %vm1568, %v1558, %v1388
    %v1570 = vsel %vm1568, %v1560, %v1389
    %s1571 = scalar_lea.vmem [#allocation10], 56
    %1572 = vst [vmem:[%s1571] sm:$0xff] %v1570
    %1573 = vst [vmem:[#allocation2] sm:$0xff] %v1570
    %1574 = vst [vmem:[#allocation3] sm:$0xff] %v1569
    // Predicated region
    $region30: #{lstm_forward_pallas.2} parent=1 // pred_check
      _
    $region31: #{lstm_forward_pallas.2} parent=1 // pred_check_branch
      %1576 = sbr.rel (0) target = $region33
    $region32: #{lstm_forward_pallas.2} parent=1 // pred_region
      %s1578 = ssub.s32 1024, 1024
      %1579 = vsyncadd [#allocation6], %s1578
      %s1580 = sshll.u32 [#allocation10], 4
      %s1581 = int_to_ptr.vmem [resolvable:$true] %s1580
      %1586 = dma.vmem_to_hbm [thread:$0]  %s1581, 1024, %s3, [#allocation6], 128, 128, 8
    $region33: #{lstm_forward_pallas.2} parent=1 // pred_fallthru
      _
    // Predicated region
    $region34: #{lstm_forward_pallas.2} parent=1 // pred_check
      _
    $region35: #{lstm_forward_pallas.2} parent=1 // pred_check_branch
      %1588 = sbr.rel (0) target = $region37
    $region36: #{lstm_forward_pallas.2} parent=1 // pred_region
      %1589 = dma.done [#allocation6], 1024
    $region37: #{lstm_forward_pallas.2} parent=1 // pred_fallthru
      _
    %1590 = vsyncpa [#allocation5], 1
    %1591 = vsyncpa [#allocation8], 1
    %1592 = vsyncpa [#allocation6], 1

// kernel: lstm_forward_pallas.3
$region0: #{lstm_forward_pallas.3}
  #allocation0 [shape = 'u32[]', space=smem, size = 0x4, offset = 0x4, fixed_abs, tag = 'smem constant byte address 0x4 - core index']
  #allocation1 [shape = 'u32[144,128]{1,0:T(1,128)}', space=vmem, size = 0x12000, scoped, tag = 'internal scratch']
  #allocation2 [shape = 'f32[8,128]{1,0:T(8,128)}', space=vmem, size = 0x1000, scoped, tag = 'scratch operand']
  #allocation3 [shape = 'f32[8,128]{1,0:T(8,128)}', space=vmem, size = 0x1000, scoped, tag = 'scratch operand']
  %s0 = inlined_call_operand.hbm [shape: f32[8,8,512], index: 0, kind: input, shape index: {}]
  %s1 = inlined_call_operand.hbm [shape: f32[128,512], index: 1, kind: input, shape index: {}]
  %s2 = inlined_call_operand.hbm [shape: s32[8,1], index: 2, kind: input, shape index: {}]
  %s3 = inlined_call_operand.hbm [shape: f32[8,128], index: 3, kind: output, shape index: {}]
  %s4 = sld [smem:[#allocation0]]
  $region38: #{lstm_forward_pallas.3} parent=0
    _
  %s6 = ssub.s32 1, %s4
  %s7 = scalar_select 0, %s6, %s4
  $region1: #{lstm_forward_pallas.3} parent=0
    #allocation4 [shape = 'u8[131072]{0}', space=vmem, size = 0x20000, scoped, tag = 'input window, operand 0, single buffered']
    #allocation5 [shape = 's32[1]{0}', space=sflag, size = 0x4, scoped, tag = 'scoped memory for lstm_forward_pallas.3']
    #allocation6 [shape = 's32[1]{0}', space=sflag, size = 0x4, scoped, tag = 'scoped memory for lstm_forward_pallas.3']
    #allocation7 [shape = 'u8[262144]{0}', space=vmem, size = 0x40000, scoped, tag = 'input window, operand 1, single buffered']
    #allocation8 [shape = 's32[1]{0}', space=sflag, size = 0x4, scoped, tag = 'scoped memory for lstm_forward_pallas.3']
    #allocation9 [shape = 'u8[4096]{0}', space=vmem, size = 0x1000, scoped, tag = 'input window, operand 2, single buffered']
    #allocation10 [shape = 'u8[4096]{0}', space=vmem, size = 0x1000, scoped, tag = 'output window, operand 0, single buffered']
    %8 = vsyncpa [#allocation5], 0
    %9 = vsyncpa [#allocation8], 0
    %10 = vsyncpa [#allocation6], 0
    // Predicated region
    $region2: #{lstm_forward_pallas.3} parent=1 // pred_check
      _
    $region3: #{lstm_forward_pallas.3} parent=1 // pred_check_branch
      %12 = sbr.rel (0) target = $region5
    $region4: #{lstm_forward_pallas.3} parent=1 // pred_region
      %s14 = ssub.s32 4096, 4096
      %15 = vsyncadd [#allocation5], %s14
      %s16 = sshll.u32 [#allocation4], 4
      %s17 = int_to_ptr.vmem [resolvable:$true] %s16
      %22 = dma.hbm_to_vmem [thread:$0]  %s0, 4096, %s17, [#allocation5], 512, 512, 32
    $region5: #{lstm_forward_pallas.3} parent=1 // pred_fallthru
      _
    // Predicated region
    $region6: #{lstm_forward_pallas.3} parent=1 // pred_check
      _
    $region7: #{lstm_forward_pallas.3} parent=1 // pred_check_branch
      %24 = sbr.rel (0) target = $region9
    $region8: #{lstm_forward_pallas.3} parent=1 // pred_region
      %s26 = ssub.s32 8192, 8192
      %27 = vsyncadd [#allocation8], %s26
      %s28 = sshll.u32 [#allocation7], 4
      %s29 = int_to_ptr.vmem [resolvable:$true] %s28
      %34 = dma.hbm_to_vmem [thread:$0]  %s1, 8192, %s29, [#allocation8], 512, 512, 32
    $region9: #{lstm_forward_pallas.3} parent=1 // pred_fallthru
      _
    // Predicated region
    $region10: #{lstm_forward_pallas.3} parent=1 // pred_check
      _
    $region11: #{lstm_forward_pallas.3} parent=1 // pred_check_branch
      %36 = sbr.rel (0) target = $region13
    $region12: #{lstm_forward_pallas.3} parent=1 // pred_region
      %s38 = ssub.s32 128, 128
      %39 = vsyncadd [#allocation8], %s38
      %s41 = sshll.u32 [#allocation9], 4
      %s42 = int_to_ptr.vmem [resolvable:$true] %s41
      %44 = dma.hbm_to_vmem [thread:$0]  %s2, 128, %s42, [#allocation8]
    $region13: #{lstm_forward_pallas.3} parent=1 // pred_fallthru
      _
    // Predicated region
    $region14: #{lstm_forward_pallas.3} parent=1 // pred_check
      _
    $region15: #{lstm_forward_pallas.3} parent=1 // pred_check_branch
      %46 = sbr.rel (0) target = $region17
    $region16: #{lstm_forward_pallas.3} parent=1 // pred_region
      %47 = dma.done [#allocation5], 4096
    $region17: #{lstm_forward_pallas.3} parent=1 // pred_fallthru
      _
    // Predicated region
    $region18: #{lstm_forward_pallas.3} parent=1 // pred_check
      _
    $region19: #{lstm_forward_pallas.3} parent=1 // pred_check_branch
      %49 = sbr.rel (0) target = $region21
    $region20: #{lstm_forward_pallas.3} parent=1 // pred_region
      %50 = dma.done [#allocation8], 8192
    $region21: #{lstm_forward_pallas.3} parent=1 // pred_fallthru
      _
    // Predicated region
    $region22: #{lstm_forward_pallas.3} parent=1 // pred_check
      _
    $region23: #{lstm_forward_pallas.3} parent=1 // pred_check_branch
      %52 = sbr.rel (0) target = $region25
    $region24: #{lstm_forward_pallas.3} parent=1 // pred_region
      %53 = dma.done [#allocation8], 128
    $region25: #{lstm_forward_pallas.3} parent=1 // pred_fallthru
      _
    %p54 = scmp.eq.s32.totalorder 0, 0
    // Predicated region
    $region26: #{lstm_forward_pallas.3} parent=1 // pred_check
      %p55 = pneg %p54
    $region27: #{lstm_forward_pallas.3} parent=1 // pred_check_branch
      %57 = sbr.rel (%p55) target = $region29
    $region28: #{lstm_forward_pallas.3} parent=1 // pred_region
      %58 = vst [vmem:[#allocation2] sm:$0xff] 0.0
      %59 = vst [vmem:[#allocation3] sm:$0xff] 0.0
    $region29: #{lstm_forward_pallas.3} parent=1 // pred_fallthru
      _
    %v60 = vld [vmem:[#allocation7] sm:$0xff]
    %v61 = vld [vmem:[#allocation7 + $0x8] sm:$0xff]
    %v62 = vld [vmem:[#allocation7 + $0x10] sm:$0xff]
    %v63 = vld [vmem:[#allocation7 + $0x18] sm:$0xff]
    %v64 = vld [vmem:[#allocation7 + $0x20] sm:$0xff]
    %v65 = vld [vmem:[#allocation7 + $0x28] sm:$0xff]
    %v66 = vld [vmem:[#allocation7 + $0x30] sm:$0xff]
    %v67 = vld [vmem:[#allocation7 + $0x38] sm:$0xff]
    %v68 = vld [vmem:[#allocation7 + $0x40] sm:$0xff]
    %v69 = vld [vmem:[#allocation7 + $0x48] sm:$0xff]
    %v70 = vld [vmem:[#allocation7 + $0x50] sm:$0xff]
    %v71 = vld [vmem:[#allocation7 + $0x58] sm:$0xff]
    %v72 = vld [vmem:[#allocation7 + $0x60] sm:$0xff]
    %v73 = vld [vmem:[#allocation7 + $0x68] sm:$0xff]
    %v74 = vld [vmem:[#allocation7 + $0x70] sm:$0xff]
    %v75 = vld [vmem:[#allocation7 + $0x78] sm:$0xff]
    %v76 = vld [vmem:[#allocation7 + $0x80] sm:$0xff]
    %v77 = vld [vmem:[#allocation7 + $0x88] sm:$0xff]
    %v78 = vld [vmem:[#allocation7 + $0x90] sm:$0xff]
    %v79 = vld [vmem:[#allocation7 + $0x98] sm:$0xff]
    %v80 = vld [vmem:[#allocation7 + $0xa0] sm:$0xff]
    %v81 = vld [vmem:[#allocation7 + $0xa8] sm:$0xff]
    %v82 = vld [vmem:[#allocation7 + $0xb0] sm:$0xff]
    %v83 = vld [vmem:[#allocation7 + $0xb8] sm:$0xff]
    %v84 = vld [vmem:[#allocation7 + $0xc0] sm:$0xff]
    %v85 = vld [vmem:[#allocation7 + $0xc8] sm:$0xff]
    %v86 = vld [vmem:[#allocation7 + $0xd0] sm:$0xff]
    %v87 = vld [vmem:[#allocation7 + $0xd8] sm:$0xff]
    %v88 = vld [vmem:[#allocation7 + $0xe0] sm:$0xff]
    %v89 = vld [vmem:[#allocation7 + $0xe8] sm:$0xff]
    %v90 = vld [vmem:[#allocation7 + $0xf0] sm:$0xff]
    %v91 = vld [vmem:[#allocation7 + $0xf8] sm:$0xff]
    %v92 = vld [vmem:[#allocation7 + $0x100] sm:$0xff]
    %v93 = vld [vmem:[#allocation7 + $0x108] sm:$0xff]
    %v94 = vld [vmem:[#allocation7 + $0x110] sm:$0xff]
    %v95 = vld [vmem:[#allocation7 + $0x118] sm:$0xff]
    %v96 = vld [vmem:[#allocation7 + $0x120] sm:$0xff]
    %v97 = vld [vmem:[#allocation7 + $0x128] sm:$0xff]
    %v98 = vld [vmem:[#allocation7 + $0x130] sm:$0xff]
    %v99 = vld [vmem:[#allocation7 + $0x138] sm:$0xff]
    %v100 = vld [vmem:[#allocation7 + $0x140] sm:$0xff]
    %v101 = vld [vmem:[#allocation7 + $0x148] sm:$0xff]
    %v102 = vld [vmem:[#allocation7 + $0x150] sm:$0xff]
    %v103 = vld [vmem:[#allocation7 + $0x158] sm:$0xff]
    %v104 = vld [vmem:[#allocation7 + $0x160] sm:$0xff]
    %v105 = vld [vmem:[#allocation7 + $0x168] sm:$0xff]
    %v106 = vld [vmem:[#allocation7 + $0x170] sm:$0xff]
    %v107 = vld [vmem:[#allocation7 + $0x178] sm:$0xff]
    %v108 = vld [vmem:[#allocation7 + $0x180] sm:$0xff]
    %v109 = vld [vmem:[#allocation7 + $0x188] sm:$0xff]
    %v110 = vld [vmem:[#allocation7 + $0x190] sm:$0xff]
    %v111 = vld [vmem:[#allocation7 + $0x198] sm:$0xff]
    %v112 = vld [vmem:[#allocation7 + $0x1a0] sm:$0xff]
    %v113 = vld [vmem:[#allocation7 + $0x1a8] sm:$0xff]
    %v114 = vld [vmem:[#allocation7 + $0x1b0] sm:$0xff]
    %v115 = vld [vmem:[#allocation7 + $0x1b8] sm:$0xff]
    %v116 = vld [vmem:[#allocation7 + $0x1c0] sm:$0xff]
    %v117 = vld [vmem:[#allocation7 + $0x1c8] sm:$0xff]
    %v118 = vld [vmem:[#allocation7 + $0x1d0] sm:$0xff]
    %v119 = vld [vmem:[#allocation7 + $0x1d8] sm:$0xff]
    %v120 = vld [vmem:[#allocation7 + $0x1e0] sm:$0xff]
    %v121 = vld [vmem:[#allocation7 + $0x1e8] sm:$0xff]
    %v122 = vld [vmem:[#allocation7 + $0x1f0] sm:$0xff]
    %v123 = vld [vmem:[#allocation7 + $0x1f8] sm:$0xff]
    %v124 = vld [vmem:[#allocation9] sm:$0xff]
    %s125 = smul.u32 0, 8
    %v126 = vld [vmem:[#allocation2] sm:$0xff]
    %v127 = vld [vmem:[#allocation3] sm:$0xff]
    %v128 = vld [vmem:[#allocation4] sm:$0xff]
    %v129 = vld [vmem:[#allocation4 + $0x8] sm:$0xff]
    %v130 = vld [vmem:[#allocation4 + $0x10] sm:$0xff]
    %v131 = vld [vmem:[#allocation4 + $0x18] sm:$0xff]
    %132 = vmatprep.subr.mxu0 %v61
    %133 = vmatpush1.msra.mxu0 %v60
    %134 = vmatprep.subr.mxu0 %v65
    %135 = vmatpush1.msra.mxu0 %v64
    %136 = vmatprep.subr.mxu0 %v69
    %137 = vmatpush1.msra.mxu0 %v68
    %138 = vmatprep.subr.mxu0 %v73
    %139 = vmatpush1.msra.mxu0 %v72
    %140 = vmatprep.subr.mxu0 %v77
    %141 = vmatpush1.msra.mxu0 %v76
    %142 = vmatprep.subr.mxu0 %v81
    %143 = vmatpush1.msra.mxu0 %v80
    %144 = vmatprep.subr.mxu0 %v85
    %145 = vmatpush1.msra.mxu0 %v84
    %146 = vmatprep.subr.mxu0 %v89
    %147 = vmatpush1.msra.mxu0 %v88
    %148 = vmatprep.subr.mxu0 %v93
    %149 = vmatpush1.msra.mxu0 %v92
    %150 = vmatprep.subr.mxu0 %v97
    %151 = vmatpush1.msra.mxu0 %v96
    %152 = vmatprep.subr.mxu0 %v101
    %153 = vmatpush1.msra.mxu0 %v100
    %154 = vmatprep.subr.mxu0 %v105
    %155 = vmatpush1.msra.mxu0 %v104
    %156 = vmatprep.subr.mxu0 %v109
    %157 = vmatpush1.msra.mxu0 %v108
    %158 = vmatprep.subr.mxu0 %v113
    %159 = vmatpush1.msra.mxu0 %v112
    %160 = vmatprep.subr.mxu0 %v117
    %161 = vmatpush1.msra.mxu0 %v116
    %162 = vmatprep.subr.mxu0 %v121
    %163 = vmatpush1.msra.mxu0 %v120
    %164 = vmatprep.subr.mxu0 0.0
    %165 = vmatpush1.msra.mxu0 0.0
    %166 = vmatprep.subr.mxu0 0.0
    %167 = vmatpush1.msra.mxu0 0.0
    %168 = vmatprep.subr.mxu0 0.0
    %169 = vmatpush1.msra.mxu0 0.0
    %170 = vmatprep.subr.mxu0 0.0
    %171 = vmatpush1.msra.mxu0 0.0
    %172 = vmatprep.subr.mxu0 0.0
    %173 = vmatpush1.msra.mxu0 0.0
    %174 = vmatprep.subr.mxu0 0.0
    %175 = vmatpush1.msra.mxu0 0.0
    %176 = vmatprep.subr.mxu0 0.0
    %177 = vmatpush1.msra.mxu0 0.0
    %178 = vmatprep.subr.mxu0 0.0
    %179 = vmatpush1.msra.mxu0 0.0
    %180 = vmatprep.subr.mxu0 0.0
    %181 = vmatpush1.msra.mxu0 0.0
    %182 = vmatprep.subr.mxu0 0.0
    %183 = vmatpush1.msra.mxu0 0.0
    %184 = vmatprep.subr.mxu0 0.0
    %185 = vmatpush1.msra.mxu0 0.0
    %186 = vmatprep.subr.mxu0 0.0
    %187 = vmatpush1.msra.mxu0 0.0
    %188 = vmatprep.subr.mxu0 0.0
    %189 = vmatpush1.msra.mxu0 0.0
    %190 = vmatprep.subr.mxu0 0.0
    %191 = vmatpush1.msra.mxu0 0.0
    %192 = vmatprep.subr.mxu0 0.0
    %193 = vmatpush1.msra.mxu0 0.0
    %194 = vmatprep.subr.mxu0 0.0
    %195 = vmatpush1.msra.mxu0 0.0
    %196 = vmatprep.mubr.f32.mxu0 0.0
    %197 = vmatmul.mubr.f32.gmra.mrb[0].mxu0 %v126
    %v198 = vpop.f32.mrb[0].mxu0
    %v199 = vadd.f32 0.0, %v198
    %v200 = vpop.f32.mrb[0].mxu0
    %v201 = vadd.f32 0.0, %v200
    %202 = vdwg.mxu0
    %203 = vmatprep.subr.mxu0 %v63
    %204 = vmatpush1.msra.mxu0 %v62
    %205 = vmatprep.subr.mxu0 %v67
    %206 = vmatpush1.msra.mxu0 %v66
    %207 = vmatprep.subr.mxu0 %v71
    %208 = vmatpush1.msra.mxu0 %v70
    %209 = vmatprep.subr.mxu0 %v75
    %210 = vmatpush1.msra.mxu0 %v74
    %211 = vmatprep.subr.mxu0 %v79
    %212 = vmatpush1.msra.mxu0 %v78
    %213 = vmatprep.subr.mxu0 %v83
    %214 = vmatpush1.msra.mxu0 %v82
    %215 = vmatprep.subr.mxu0 %v87
    %216 = vmatpush1.msra.mxu0 %v86
    %217 = vmatprep.subr.mxu0 %v91
    %218 = vmatpush1.msra.mxu0 %v90
    %219 = vmatprep.subr.mxu0 %v95
    %220 = vmatpush1.msra.mxu0 %v94
    %221 = vmatprep.subr.mxu0 %v99
    %222 = vmatpush1.msra.mxu0 %v98
    %223 = vmatprep.subr.mxu0 %v103
    %224 = vmatpush1.msra.mxu0 %v102
    %225 = vmatprep.subr.mxu0 %v107
    %226 = vmatpush1.msra.mxu0 %v106
    %227 = vmatprep.subr.mxu0 %v111
    %228 = vmatpush1.msra.mxu0 %v110
    %229 = vmatprep.subr.mxu0 %v115
    %230 = vmatpush1.msra.mxu0 %v114
    %231 = vmatprep.subr.mxu0 %v119
    %232 = vmatpush1.msra.mxu0 %v118
    %233 = vmatprep.subr.mxu0 %v123
    %234 = vmatpush1.msra.mxu0 %v122
    %235 = vmatprep.subr.mxu0 0.0
    %236 = vmatpush1.msra.mxu0 0.0
    %237 = vmatprep.subr.mxu0 0.0
    %238 = vmatpush1.msra.mxu0 0.0
    %239 = vmatprep.subr.mxu0 0.0
    %240 = vmatpush1.msra.mxu0 0.0
    %241 = vmatprep.subr.mxu0 0.0
    %242 = vmatpush1.msra.mxu0 0.0
    %243 = vmatprep.subr.mxu0 0.0
    %244 = vmatpush1.msra.mxu0 0.0
    %245 = vmatprep.subr.mxu0 0.0
    %246 = vmatpush1.msra.mxu0 0.0
    %247 = vmatprep.subr.mxu0 0.0
    %248 = vmatpush1.msra.mxu0 0.0
    %249 = vmatprep.subr.mxu0 0.0
    %250 = vmatpush1.msra.mxu0 0.0
    %251 = vmatprep.subr.mxu0 0.0
    %252 = vmatpush1.msra.mxu0 0.0
    %253 = vmatprep.subr.mxu0 0.0
    %254 = vmatpush1.msra.mxu0 0.0
    %255 = vmatprep.subr.mxu0 0.0
    %256 = vmatpush1.msra.mxu0 0.0
    %257 = vmatprep.subr.mxu0 0.0
    %258 = vmatpush1.msra.mxu0 0.0
    %259 = vmatprep.subr.mxu0 0.0
    %260 = vmatpush1.msra.mxu0 0.0
    %261 = vmatprep.subr.mxu0 0.0
    %262 = vmatpush1.msra.mxu0 0.0
    %263 = vmatprep.subr.mxu0 0.0
    %264 = vmatpush1.msra.mxu0 0.0
    %265 = vmatprep.subr.mxu0 0.0
    %266 = vmatpush1.msra.mxu0 0.0
    %267 = vmatprep.mubr.f32.mxu0 0.0
    %268 = vmatmul.mubr.f32.gmra.mrb[0].mxu0 %v126
    %v269 = vpop.f32.mrb[0].mxu0
    %v270 = vadd.f32 0.0, %v269
    %v271 = vpop.f32.mrb[0].mxu0
    %v272 = vadd.f32 0.0, %v271
    %273 = vdwg.mxu0
    %v274 = vadd.f32 %v128, %v199
    %v275 = vadd.f32 %v129, %v201
    %v276 = vadd.f32 %v130, %v270
    %v277 = vadd.f32 %v131, %v272
    %v278 = vmul.f32 %v274, 0.5
    %v279 = vtanh.pop %v278
    %v280 = vadd.f32 %v279, 1.0
    %v281 = vmul.f32 %v280, 0.5
    %v282 = vmul.f32 %v275, 0.5
    %v283 = vtanh.pop %v282
    %v284 = vadd.f32 %v283, 1.0
    %v285 = vmul.f32 %v284, 0.5
    %v286 = vtanh.pop %v276
    %v287 = vmul.f32 %v277, 0.5
    %v288 = vtanh.pop %v287
    %v289 = vadd.f32 %v288, 1.0
    %v290 = vmul.f32 %v289, 0.5
    %v291 = vmul.f32 %v285, %v127
    %v292 = vmul.f32 %v281, %v286
    %v293 = vadd.f32 %v291, %v292
    %v294 = vtanh.pop %v293
    %v295 = vmul.f32 %v290, %v294
    %v296 = vstv %s125
    %vm297 = vcmp.gt.s32.totalorder %v124, %v296
    %v298 = vsel %vm297, 1, 0
    %299 = vset.pattern.permute.xlu0 0
    %300 = vperm.xlu0 %299, %v298
    %v301 = vpop.permute.xlu0 %300
    %vm302 = vcmp.eq.s32.totalorder %v301, 1
    %v303 = vsel %vm302, %v293, %v127
    %v304 = vsel %vm302, %v295, %v126
    %s305 = scalar_lea.vmem [#allocation4], 32
    %v306 = vld [vmem:[%s305] sm:$0xff]
    %v307 = vld [vmem:[%s305 + $0x8] sm:$0xff]
    %v308 = vld [vmem:[%s305 + $0x10] sm:$0xff]
    %v309 = vld [vmem:[%s305 + $0x18] sm:$0xff]
    %310 = vmatprep.subr.mxu0 %v61
    %311 = vmatpush1.msra.mxu0 %v60
    %312 = vmatprep.subr.mxu0 %v65
    %313 = vmatpush1.msra.mxu0 %v64
    %314 = vmatprep.subr.mxu0 %v69
    %315 = vmatpush1.msra.mxu0 %v68
    %316 = vmatprep.subr.mxu0 %v73
    %317 = vmatpush1.msra.mxu0 %v72
    %318 = vmatprep.subr.mxu0 %v77
    %319 = vmatpush1.msra.mxu0 %v76
    %320 = vmatprep.subr.mxu0 %v81
    %321 = vmatpush1.msra.mxu0 %v80
    %322 = vmatprep.subr.mxu0 %v85
    %323 = vmatpush1.msra.mxu0 %v84
    %324 = vmatprep.subr.mxu0 %v89
    %325 = vmatpush1.msra.mxu0 %v88
    %326 = vmatprep.subr.mxu0 %v93
    %327 = vmatpush1.msra.mxu0 %v92
    %328 = vmatprep.subr.mxu0 %v97
    %329 = vmatpush1.msra.mxu0 %v96
    %330 = vmatprep.subr.mxu0 %v101
    %331 = vmatpush1.msra.mxu0 %v100
    %332 = vmatprep.subr.mxu0 %v105
    %333 = vmatpush1.msra.mxu0 %v104
    %334 = vmatprep.subr.mxu0 %v109
    %335 = vmatpush1.msra.mxu0 %v108
    %336 = vmatprep.subr.mxu0 %v113
    %337 = vmatpush1.msra.mxu0 %v112
    %338 = vmatprep.subr.mxu0 %v117
    %339 = vmatpush1.msra.mxu0 %v116
    %340 = vmatprep.subr.mxu0 %v121
    %341 = vmatpush1.msra.mxu0 %v120
    %342 = vmatprep.subr.mxu0 0.0
    %343 = vmatpush1.msra.mxu0 0.0
    %344 = vmatprep.subr.mxu0 0.0
    %345 = vmatpush1.msra.mxu0 0.0
    %346 = vmatprep.subr.mxu0 0.0
    %347 = vmatpush1.msra.mxu0 0.0
    %348 = vmatprep.subr.mxu0 0.0
    %349 = vmatpush1.msra.mxu0 0.0
    %350 = vmatprep.subr.mxu0 0.0
    %351 = vmatpush1.msra.mxu0 0.0
    %352 = vmatprep.subr.mxu0 0.0
    %353 = vmatpush1.msra.mxu0 0.0
    %354 = vmatprep.subr.mxu0 0.0
    %355 = vmatpush1.msra.mxu0 0.0
    %356 = vmatprep.subr.mxu0 0.0
    %357 = vmatpush1.msra.mxu0 0.0
    %358 = vmatprep.subr.mxu0 0.0
    %359 = vmatpush1.msra.mxu0 0.0
    %360 = vmatprep.subr.mxu0 0.0
    %361 = vmatpush1.msra.mxu0 0.0
    %362 = vmatprep.subr.mxu0 0.0
    %363 = vmatpush1.msra.mxu0 0.0
    %364 = vmatprep.subr.mxu0 0.0
    %365 = vmatpush1.msra.mxu0 0.0
    %366 = vmatprep.subr.mxu0 0.0
    %367 = vmatpush1.msra.mxu0 0.0
    %368 = vmatprep.subr.mxu0 0.0
    %369 = vmatpush1.msra.mxu0 0.0
    %370 = vmatprep.subr.mxu0 0.0
    %371 = vmatpush1.msra.mxu0 0.0
    %372 = vmatprep.subr.mxu0 0.0
    %373 = vmatpush1.msra.mxu0 0.0
    %374 = vmatprep.mubr.f32.mxu0 0.0
    %375 = vmatmul.mubr.f32.gmra.mrb[0].mxu0 %v304
    %v376 = vpop.f32.mrb[0].mxu0
    %v377 = vadd.f32 0.0, %v376
    %v378 = vpop.f32.mrb[0].mxu0
    %v379 = vadd.f32 0.0, %v378
    %380 = vdwg.mxu0
    %381 = vmatprep.subr.mxu0 %v63
    %382 = vmatpush1.msra.mxu0 %v62
    %383 = vmatprep.subr.mxu0 %v67
    %384 = vmatpush1.msra.mxu0 %v66
    %385 = vmatprep.subr.mxu0 %v71
    %386 = vmatpush1.msra.mxu0 %v70
    %387 = vmatprep.subr.mxu0 %v75
    %388 = vmatpush1.msra.mxu0 %v74
    %389 = vmatprep.subr.mxu0 %v79
    %390 = vmatpush1.msra.mxu0 %v78
    %391 = vmatprep.subr.mxu0 %v83
    %392 = vmatpush1.msra.mxu0 %v82
    %393 = vmatprep.subr.mxu0 %v87
    %394 = vmatpush1.msra.mxu0 %v86
    %395 = vmatprep.subr.mxu0 %v91
    %396 = vmatpush1.msra.mxu0 %v90
    %397 = vmatprep.subr.mxu0 %v95
    %398 = vmatpush1.msra.mxu0 %v94
    %399 = vmatprep.subr.mxu0 %v99
    %400 = vmatpush1.msra.mxu0 %v98
    %401 = vmatprep.subr.mxu0 %v103
    %402 = vmatpush1.msra.mxu0 %v102
    %403 = vmatprep.subr.mxu0 %v107
    %404 = vmatpush1.msra.mxu0 %v106
    %405 = vmatprep.subr.mxu0 %v111
    %406 = vmatpush1.msra.mxu0 %v110
    %407 = vmatprep.subr.mxu0 %v115
    %408 = vmatpush1.msra.mxu0 %v114
    %409 = vmatprep.subr.mxu0 %v119
    %410 = vmatpush1.msra.mxu0 %v118
    %411 = vmatprep.subr.mxu0 %v123
    %412 = vmatpush1.msra.mxu0 %v122
    %413 = vmatprep.subr.mxu0 0.0
    %414 = vmatpush1.msra.mxu0 0.0
    %415 = vmatprep.subr.mxu0 0.0
    %416 = vmatpush1.msra.mxu0 0.0
    %417 = vmatprep.subr.mxu0 0.0
    %418 = vmatpush1.msra.mxu0 0.0
    %419 = vmatprep.subr.mxu0 0.0
    %420 = vmatpush1.msra.mxu0 0.0
    %421 = vmatprep.subr.mxu0 0.0
    %422 = vmatpush1.msra.mxu0 0.0
    %423 = vmatprep.subr.mxu0 0.0
    %424 = vmatpush1.msra.mxu0 0.0
    %425 = vmatprep.subr.mxu0 0.0
    %426 = vmatpush1.msra.mxu0 0.0
    %427 = vmatprep.subr.mxu0 0.0
    %428 = vmatpush1.msra.mxu0 0.0
    %429 = vmatprep.subr.mxu0 0.0
    %430 = vmatpush1.msra.mxu0 0.0
    %431 = vmatprep.subr.mxu0 0.0
    %432 = vmatpush1.msra.mxu0 0.0
    %433 = vmatprep.subr.mxu0 0.0
    %434 = vmatpush1.msra.mxu0 0.0
    %435 = vmatprep.subr.mxu0 0.0
    %436 = vmatpush1.msra.mxu0 0.0
    %437 = vmatprep.subr.mxu0 0.0
    %438 = vmatpush1.msra.mxu0 0.0
    %439 = vmatprep.subr.mxu0 0.0
    %440 = vmatpush1.msra.mxu0 0.0
    %441 = vmatprep.subr.mxu0 0.0
    %442 = vmatpush1.msra.mxu0 0.0
    %443 = vmatprep.subr.mxu0 0.0
    %444 = vmatpush1.msra.mxu0 0.0
    %445 = vmatprep.mubr.f32.mxu0 0.0
    %446 = vmatmul.mubr.f32.gmra.mrb[0].mxu0 %v304
    %v447 = vpop.f32.mrb[0].mxu0
    %v448 = vadd.f32 0.0, %v447
    %v449 = vpop.f32.mrb[0].mxu0
    %v450 = vadd.f32 0.0, %v449
    %451 = vdwg.mxu0
    %v452 = vadd.f32 %v306, %v377
    %v453 = vadd.f32 %v307, %v379
    %v454 = vadd.f32 %v308, %v448
    %v455 = vadd.f32 %v309, %v450
    %v456 = vmul.f32 %v452, 0.5
    %v457 = vtanh.pop %v456
    %v458 = vadd.f32 %v457, 1.0
    %v459 = vmul.f32 %v458, 0.5
    %v460 = vmul.f32 %v453, 0.5
    %v461 = vtanh.pop %v460
    %v462 = vadd.f32 %v461, 1.0
    %v463 = vmul.f32 %v462, 0.5
    %v464 = vtanh.pop %v454
    %v465 = vmul.f32 %v455, 0.5
    %v466 = vtanh.pop %v465
    %v467 = vadd.f32 %v466, 1.0
    %v468 = vmul.f32 %v467, 0.5
    %v469 = vmul.f32 %v463, %v303
    %v470 = vmul.f32 %v459, %v464
    %v471 = vadd.f32 %v469, %v470
    %v472 = vtanh.pop %v471
    %v473 = vmul.f32 %v468, %v472
    %s474 = sadd.s32 %s125, 1
    %v475 = vstv %s474
    %vm476 = vcmp.gt.s32.totalorder %v124, %v475
    %v477 = vsel %vm476, 1, 0
    %478 = vset.pattern.permute.xlu0 0
    %479 = vperm.xlu0 %478, %v477
    %v480 = vpop.permute.xlu0 %479
    %vm481 = vcmp.eq.s32.totalorder %v480, 1
    %v482 = vsel %vm481, %v471, %v303
    %v483 = vsel %vm481, %v473, %v304
    %s484 = scalar_lea.vmem [#allocation4], 64
    %v485 = vld [vmem:[%s484] sm:$0xff]
    %v486 = vld [vmem:[%s484 + $0x8] sm:$0xff]
    %v487 = vld [vmem:[%s484 + $0x10] sm:$0xff]
    %v488 = vld [vmem:[%s484 + $0x18] sm:$0xff]
    %489 = vmatprep.subr.mxu0 %v61
    %490 = vmatpush1.msra.mxu0 %v60
    %491 = vmatprep.subr.mxu0 %v65
    %492 = vmatpush1.msra.mxu0 %v64
    %493 = vmatprep.subr.mxu0 %v69
    %494 = vmatpush1.msra.mxu0 %v68
    %495 = vmatprep.subr.mxu0 %v73
    %496 = vmatpush1.msra.mxu0 %v72
    %497 = vmatprep.subr.mxu0 %v77
    %498 = vmatpush1.msra.mxu0 %v76
    %499 = vmatprep.subr.mxu0 %v81
    %500 = vmatpush1.msra.mxu0 %v80
    %501 = vmatprep.subr.mxu0 %v85
    %502 = vmatpush1.msra.mxu0 %v84
    %503 = vmatprep.subr.mxu0 %v89
    %504 = vmatpush1.msra.mxu0 %v88
    %505 = vmatprep.subr.mxu0 %v93
    %506 = vmatpush1.msra.mxu0 %v92
    %507 = vmatprep.subr.mxu0 %v97
    %508 = vmatpush1.msra.mxu0 %v96
    %509 = vmatprep.subr.mxu0 %v101
    %510 = vmatpush1.msra.mxu0 %v100
    %511 = vmatprep.subr.mxu0 %v105
    %512 = vmatpush1.msra.mxu0 %v104
    %513 = vmatprep.subr.mxu0 %v109
    %514 = vmatpush1.msra.mxu0 %v108
    %515 = vmatprep.subr.mxu0 %v113
    %516 = vmatpush1.msra.mxu0 %v112
    %517 = vmatprep.subr.mxu0 %v117
    %518 = vmatpush1.msra.mxu0 %v116
    %519 = vmatprep.subr.mxu0 %v121
    %520 = vmatpush1.msra.mxu0 %v120
    %521 = vmatprep.subr.mxu0 0.0
    %522 = vmatpush1.msra.mxu0 0.0
    %523 = vmatprep.subr.mxu0 0.0
    %524 = vmatpush1.msra.mxu0 0.0
    %525 = vmatprep.subr.mxu0 0.0
    %526 = vmatpush1.msra.mxu0 0.0
    %527 = vmatprep.subr.mxu0 0.0
    %528 = vmatpush1.msra.mxu0 0.0
    %529 = vmatprep.subr.mxu0 0.0
    %530 = vmatpush1.msra.mxu0 0.0
    %531 = vmatprep.subr.mxu0 0.0
    %532 = vmatpush1.msra.mxu0 0.0
    %533 = vmatprep.subr.mxu0 0.0
    %534 = vmatpush1.msra.mxu0 0.0
    %535 = vmatprep.subr.mxu0 0.0
    %536 = vmatpush1.msra.mxu0 0.0
    %537 = vmatprep.subr.mxu0 0.0
    %538 = vmatpush1.msra.mxu0 0.0
    %539 = vmatprep.subr.mxu0 0.0
    %540 = vmatpush1.msra.mxu0 0.0
    %541 = vmatprep.subr.mxu0 0.0
    %542 = vmatpush1.msra.mxu0 0.0
    %543 = vmatprep.subr.mxu0 0.0
    %544 = vmatpush1.msra.mxu0 0.0
    %545 = vmatprep.subr.mxu0 0.0
    %546 = vmatpush1.msra.mxu0 0.0
    %547 = vmatprep.subr.mxu0 0.0
    %548 = vmatpush1.msra.mxu0 0.0
    %549 = vmatprep.subr.mxu0 0.0
    %550 = vmatpush1.msra.mxu0 0.0
    %551 = vmatprep.subr.mxu0 0.0
    %552 = vmatpush1.msra.mxu0 0.0
    %553 = vmatprep.mubr.f32.mxu0 0.0
    %554 = vmatmul.mubr.f32.gmra.mrb[0].mxu0 %v483
    %v555 = vpop.f32.mrb[0].mxu0
    %v556 = vadd.f32 0.0, %v555
    %v557 = vpop.f32.mrb[0].mxu0
    %v558 = vadd.f32 0.0, %v557
    %559 = vdwg.mxu0
    %560 = vmatprep.subr.mxu0 %v63
    %561 = vmatpush1.msra.mxu0 %v62
    %562 = vmatprep.subr.mxu0 %v67
    %563 = vmatpush1.msra.mxu0 %v66
    %564 = vmatprep.subr.mxu0 %v71
    %565 = vmatpush1.msra.mxu0 %v70
    %566 = vmatprep.subr.mxu0 %v75
    %567 = vmatpush1.msra.mxu0 %v74
    %568 = vmatprep.subr.mxu0 %v79
    %569 = vmatpush1.msra.mxu0 %v78
    %570 = vmatprep.subr.mxu0 %v83
    %571 = vmatpush1.msra.mxu0 %v82
    %572 = vmatprep.subr.mxu0 %v87
    %573 = vmatpush1.msra.mxu0 %v86
    %574 = vmatprep.subr.mxu0 %v91
    %575 = vmatpush1.msra.mxu0 %v90
    %576 = vmatprep.subr.mxu0 %v95
    %577 = vmatpush1.msra.mxu0 %v94
    %578 = vmatprep.subr.mxu0 %v99
    %579 = vmatpush1.msra.mxu0 %v98
    %580 = vmatprep.subr.mxu0 %v103
    %581 = vmatpush1.msra.mxu0 %v102
    %582 = vmatprep.subr.mxu0 %v107
    %583 = vmatpush1.msra.mxu0 %v106
    %584 = vmatprep.subr.mxu0 %v111
    %585 = vmatpush1.msra.mxu0 %v110
    %586 = vmatprep.subr.mxu0 %v115
    %587 = vmatpush1.msra.mxu0 %v114
    %588 = vmatprep.subr.mxu0 %v119
    %589 = vmatpush1.msra.mxu0 %v118
    %590 = vmatprep.subr.mxu0 %v123
    %591 = vmatpush1.msra.mxu0 %v122
    %592 = vmatprep.subr.mxu0 0.0
    %593 = vmatpush1.msra.mxu0 0.0
    %594 = vmatprep.subr.mxu0 0.0
    %595 = vmatpush1.msra.mxu0 0.0
    %596 = vmatprep.subr.mxu0 0.0
    %597 = vmatpush1.msra.mxu0 0.0
    %598 = vmatprep.subr.mxu0 0.0
    %599 = vmatpush1.msra.mxu0 0.0
    %600 = vmatprep.subr.mxu0 0.0
    %601 = vmatpush1.msra.mxu0 0.0
    %602 = vmatprep.subr.mxu0 0.0
    %603 = vmatpush1.msra.mxu0 0.0
    %604 = vmatprep.subr.mxu0 0.0
    %605 = vmatpush1.msra.mxu0 0.0
    %606 = vmatprep.subr.mxu0 0.0
    %607 = vmatpush1.msra.mxu0 0.0
    %608 = vmatprep.subr.mxu0 0.0
    %609 = vmatpush1.msra.mxu0 0.0
    %610 = vmatprep.subr.mxu0 0.0
    %611 = vmatpush1.msra.mxu0 0.0
    %612 = vmatprep.subr.mxu0 0.0
    %613 = vmatpush1.msra.mxu0 0.0
    %614 = vmatprep.subr.mxu0 0.0
    %615 = vmatpush1.msra.mxu0 0.0
    %616 = vmatprep.subr.mxu0 0.0
    %617 = vmatpush1.msra.mxu0 0.0
    %618 = vmatprep.subr.mxu0 0.0
    %619 = vmatpush1.msra.mxu0 0.0
    %620 = vmatprep.subr.mxu0 0.0
    %621 = vmatpush1.msra.mxu0 0.0
    %622 = vmatprep.subr.mxu0 0.0
    %623 = vmatpush1.msra.mxu0 0.0
    %624 = vmatprep.mubr.f32.mxu0 0.0
    %625 = vmatmul.mubr.f32.gmra.mrb[0].mxu0 %v483
    %v626 = vpop.f32.mrb[0].mxu0
    %v627 = vadd.f32 0.0, %v626
    %v628 = vpop.f32.mrb[0].mxu0
    %v629 = vadd.f32 0.0, %v628
    %630 = vdwg.mxu0
    %v631 = vadd.f32 %v485, %v556
    %v632 = vadd.f32 %v486, %v558
    %v633 = vadd.f32 %v487, %v627
    %v634 = vadd.f32 %v488, %v629
    %v635 = vmul.f32 %v631, 0.5
    %v636 = vtanh.pop %v635
    %v637 = vadd.f32 %v636, 1.0
    %v638 = vmul.f32 %v637, 0.5
    %v639 = vmul.f32 %v632, 0.5
    %v640 = vtanh.pop %v639
    %v641 = vadd.f32 %v640, 1.0
    %v642 = vmul.f32 %v641, 0.5
    %v643 = vtanh.pop %v633
    %v644 = vmul.f32 %v634, 0.5
    %v645 = vtanh.pop %v644
    %v646 = vadd.f32 %v645, 1.0
    %v647 = vmul.f32 %v646, 0.5
    %v648 = vmul.f32 %v642, %v482
    %v649 = vmul.f32 %v638, %v643
    %v650 = vadd.f32 %v648, %v649
    %v651 = vtanh.pop %v650
    %v652 = vmul.f32 %v647, %v651
    %s653 = sadd.s32 %s125, 2
    %v654 = vstv %s653
    %vm655 = vcmp.gt.s32.totalorder %v124, %v654
    %v656 = vsel %vm655, 1, 0
    %657 = vset.pattern.permute.xlu0 0
    %658 = vperm.xlu0 %657, %v656
    %v659 = vpop.permute.xlu0 %658
    %vm660 = vcmp.eq.s32.totalorder %v659, 1
    %v661 = vsel %vm660, %v650, %v482
    %v662 = vsel %vm660, %v652, %v483
    %s663 = scalar_lea.vmem [#allocation4], 96
    %v664 = vld [vmem:[%s663] sm:$0xff]
    %v665 = vld [vmem:[%s663 + $0x8] sm:$0xff]
    %v666 = vld [vmem:[%s663 + $0x10] sm:$0xff]
    %v667 = vld [vmem:[%s663 + $0x18] sm:$0xff]
    %668 = vmatprep.subr.mxu0 %v61
    %669 = vmatpush1.msra.mxu0 %v60
    %670 = vmatprep.subr.mxu0 %v65
    %671 = vmatpush1.msra.mxu0 %v64
    %672 = vmatprep.subr.mxu0 %v69
    %673 = vmatpush1.msra.mxu0 %v68
    %674 = vmatprep.subr.mxu0 %v73
    %675 = vmatpush1.msra.mxu0 %v72
    %676 = vmatprep.subr.mxu0 %v77
    %677 = vmatpush1.msra.mxu0 %v76
    %678 = vmatprep.subr.mxu0 %v81
    %679 = vmatpush1.msra.mxu0 %v80
    %680 = vmatprep.subr.mxu0 %v85
    %681 = vmatpush1.msra.mxu0 %v84
    %682 = vmatprep.subr.mxu0 %v89
    %683 = vmatpush1.msra.mxu0 %v88
    %684 = vmatprep.subr.mxu0 %v93
    %685 = vmatpush1.msra.mxu0 %v92
    %686 = vmatprep.subr.mxu0 %v97
    %687 = vmatpush1.msra.mxu0 %v96
    %688 = vmatprep.subr.mxu0 %v101
    %689 = vmatpush1.msra.mxu0 %v100
    %690 = vmatprep.subr.mxu0 %v105
    %691 = vmatpush1.msra.mxu0 %v104
    %692 = vmatprep.subr.mxu0 %v109
    %693 = vmatpush1.msra.mxu0 %v108
    %694 = vmatprep.subr.mxu0 %v113
    %695 = vmatpush1.msra.mxu0 %v112
    %696 = vmatprep.subr.mxu0 %v117
    %697 = vmatpush1.msra.mxu0 %v116
    %698 = vmatprep.subr.mxu0 %v121
    %699 = vmatpush1.msra.mxu0 %v120
    %700 = vmatprep.subr.mxu0 0.0
    %701 = vmatpush1.msra.mxu0 0.0
    %702 = vmatprep.subr.mxu0 0.0
    %703 = vmatpush1.msra.mxu0 0.0
    %704 = vmatprep.subr.mxu0 0.0
    %705 = vmatpush1.msra.mxu0 0.0
    %706 = vmatprep.subr.mxu0 0.0
    %707 = vmatpush1.msra.mxu0 0.0
    %708 = vmatprep.subr.mxu0 0.0
    %709 = vmatpush1.msra.mxu0 0.0
    %710 = vmatprep.subr.mxu0 0.0
    %711 = vmatpush1.msra.mxu0 0.0
    %712 = vmatprep.subr.mxu0 0.0
    %713 = vmatpush1.msra.mxu0 0.0
    %714 = vmatprep.subr.mxu0 0.0
    %715 = vmatpush1.msra.mxu0 0.0
    %716 = vmatprep.subr.mxu0 0.0
    %717 = vmatpush1.msra.mxu0 0.0
    %718 = vmatprep.subr.mxu0 0.0
    %719 = vmatpush1.msra.mxu0 0.0
    %720 = vmatprep.subr.mxu0 0.0
    %721 = vmatpush1.msra.mxu0 0.0
    %722 = vmatprep.subr.mxu0 0.0
    %723 = vmatpush1.msra.mxu0 0.0
    %724 = vmatprep.subr.mxu0 0.0
    %725 = vmatpush1.msra.mxu0 0.0
    %726 = vmatprep.subr.mxu0 0.0
    %727 = vmatpush1.msra.mxu0 0.0
    %728 = vmatprep.subr.mxu0 0.0
    %729 = vmatpush1.msra.mxu0 0.0
    %730 = vmatprep.subr.mxu0 0.0
    %731 = vmatpush1.msra.mxu0 0.0
    %732 = vmatprep.mubr.f32.mxu0 0.0
    %733 = vmatmul.mubr.f32.gmra.mrb[0].mxu0 %v662
    %v734 = vpop.f32.mrb[0].mxu0
    %v735 = vadd.f32 0.0, %v734
    %v736 = vpop.f32.mrb[0].mxu0
    %v737 = vadd.f32 0.0, %v736
    %738 = vdwg.mxu0
    %739 = vmatprep.subr.mxu0 %v63
    %740 = vmatpush1.msra.mxu0 %v62
    %741 = vmatprep.subr.mxu0 %v67
    %742 = vmatpush1.msra.mxu0 %v66
    %743 = vmatprep.subr.mxu0 %v71
    %744 = vmatpush1.msra.mxu0 %v70
    %745 = vmatprep.subr.mxu0 %v75
    %746 = vmatpush1.msra.mxu0 %v74
    %747 = vmatprep.subr.mxu0 %v79
    %748 = vmatpush1.msra.mxu0 %v78
    %749 = vmatprep.subr.mxu0 %v83
    %750 = vmatpush1.msra.mxu0 %v82
    %751 = vmatprep.subr.mxu0 %v87
    %752 = vmatpush1.msra.mxu0 %v86
    %753 = vmatprep.subr.mxu0 %v91
    %754 = vmatpush1.msra.mxu0 %v90
    %755 = vmatprep.subr.mxu0 %v95
    %756 = vmatpush1.msra.mxu0 %v94
    %757 = vmatprep.subr.mxu0 %v99
    %758 = vmatpush1.msra.mxu0 %v98
    %759 = vmatprep.subr.mxu0 %v103
    %760 = vmatpush1.msra.mxu0 %v102
    %761 = vmatprep.subr.mxu0 %v107
    %762 = vmatpush1.msra.mxu0 %v106
    %763 = vmatprep.subr.mxu0 %v111
    %764 = vmatpush1.msra.mxu0 %v110
    %765 = vmatprep.subr.mxu0 %v115
    %766 = vmatpush1.msra.mxu0 %v114
    %767 = vmatprep.subr.mxu0 %v119
    %768 = vmatpush1.msra.mxu0 %v118
    %769 = vmatprep.subr.mxu0 %v123
    %770 = vmatpush1.msra.mxu0 %v122
    %771 = vmatprep.subr.mxu0 0.0
    %772 = vmatpush1.msra.mxu0 0.0
    %773 = vmatprep.subr.mxu0 0.0
    %774 = vmatpush1.msra.mxu0 0.0
    %775 = vmatprep.subr.mxu0 0.0
    %776 = vmatpush1.msra.mxu0 0.0
    %777 = vmatprep.subr.mxu0 0.0
    %778 = vmatpush1.msra.mxu0 0.0
    %779 = vmatprep.subr.mxu0 0.0
    %780 = vmatpush1.msra.mxu0 0.0
    %781 = vmatprep.subr.mxu0 0.0
    %782 = vmatpush1.msra.mxu0 0.0
    %783 = vmatprep.subr.mxu0 0.0
    %784 = vmatpush1.msra.mxu0 0.0
    %785 = vmatprep.subr.mxu0 0.0
    %786 = vmatpush1.msra.mxu0 0.0
    %787 = vmatprep.subr.mxu0 0.0
    %788 = vmatpush1.msra.mxu0 0.0
    %789 = vmatprep.subr.mxu0 0.0
    %790 = vmatpush1.msra.mxu0 0.0
    %791 = vmatprep.subr.mxu0 0.0
    %792 = vmatpush1.msra.mxu0 0.0
    %793 = vmatprep.subr.mxu0 0.0
    %794 = vmatpush1.msra.mxu0 0.0
    %795 = vmatprep.subr.mxu0 0.0
    %796 = vmatpush1.msra.mxu0 0.0
    %797 = vmatprep.subr.mxu0 0.0
    %798 = vmatpush1.msra.mxu0 0.0
    %799 = vmatprep.subr.mxu0 0.0
    %800 = vmatpush1.msra.mxu0 0.0
    %801 = vmatprep.subr.mxu0 0.0
    %802 = vmatpush1.msra.mxu0 0.0
    %803 = vmatprep.mubr.f32.mxu0 0.0
    %804 = vmatmul.mubr.f32.gmra.mrb[0].mxu0 %v662
    %v805 = vpop.f32.mrb[0].mxu0
    %v806 = vadd.f32 0.0, %v805
    %v807 = vpop.f32.mrb[0].mxu0
    %v808 = vadd.f32 0.0, %v807
    %809 = vdwg.mxu0
    %v810 = vadd.f32 %v664, %v735
    %v811 = vadd.f32 %v665, %v737
    %v812 = vadd.f32 %v666, %v806
    %v813 = vadd.f32 %v667, %v808
    %v814 = vmul.f32 %v810, 0.5
    %v815 = vtanh.pop %v814
    %v816 = vadd.f32 %v815, 1.0
    %v817 = vmul.f32 %v816, 0.5
    %v818 = vmul.f32 %v811, 0.5
    %v819 = vtanh.pop %v818
    %v820 = vadd.f32 %v819, 1.0
    %v821 = vmul.f32 %v820, 0.5
    %v822 = vtanh.pop %v812
    %v823 = vmul.f32 %v813, 0.5
    %v824 = vtanh.pop %v823
    %v825 = vadd.f32 %v824, 1.0
    %v826 = vmul.f32 %v825, 0.5
    %v827 = vmul.f32 %v821, %v661
    %v828 = vmul.f32 %v817, %v822
    %v829 = vadd.f32 %v827, %v828
    %v830 = vtanh.pop %v829
    %v831 = vmul.f32 %v826, %v830
    %s832 = sadd.s32 %s125, 3
    %v833 = vstv %s832
    %vm834 = vcmp.gt.s32.totalorder %v124, %v833
    %v835 = vsel %vm834, 1, 0
    %836 = vset.pattern.permute.xlu0 0
    %837 = vperm.xlu0 %836, %v835
    %v838 = vpop.permute.xlu0 %837
    %vm839 = vcmp.eq.s32.totalorder %v838, 1
    %v840 = vsel %vm839, %v829, %v661
    %v841 = vsel %vm839, %v831, %v662
    %s842 = scalar_lea.vmem [#allocation4], 128
    %v843 = vld [vmem:[%s842] sm:$0xff]
    %v844 = vld [vmem:[%s842 + $0x8] sm:$0xff]
    %v845 = vld [vmem:[%s842 + $0x10] sm:$0xff]
    %v846 = vld [vmem:[%s842 + $0x18] sm:$0xff]
    %847 = vmatprep.subr.mxu0 %v61
    %848 = vmatpush1.msra.mxu0 %v60
    %849 = vmatprep.subr.mxu0 %v65
    %850 = vmatpush1.msra.mxu0 %v64
    %851 = vmatprep.subr.mxu0 %v69
    %852 = vmatpush1.msra.mxu0 %v68
    %853 = vmatprep.subr.mxu0 %v73
    %854 = vmatpush1.msra.mxu0 %v72
    %855 = vmatprep.subr.mxu0 %v77
    %856 = vmatpush1.msra.mxu0 %v76
    %857 = vmatprep.subr.mxu0 %v81
    %858 = vmatpush1.msra.mxu0 %v80
    %859 = vmatprep.subr.mxu0 %v85
    %860 = vmatpush1.msra.mxu0 %v84
    %861 = vmatprep.subr.mxu0 %v89
    %862 = vmatpush1.msra.mxu0 %v88
    %863 = vmatprep.subr.mxu0 %v93
    %864 = vmatpush1.msra.mxu0 %v92
    %865 = vmatprep.subr.mxu0 %v97
    %866 = vmatpush1.msra.mxu0 %v96
    %867 = vmatprep.subr.mxu0 %v101
    %868 = vmatpush1.msra.mxu0 %v100
    %869 = vmatprep.subr.mxu0 %v105
    %870 = vmatpush1.msra.mxu0 %v104
    %871 = vmatprep.subr.mxu0 %v109
    %872 = vmatpush1.msra.mxu0 %v108
    %873 = vmatprep.subr.mxu0 %v113
    %874 = vmatpush1.msra.mxu0 %v112
    %875 = vmatprep.subr.mxu0 %v117
    %876 = vmatpush1.msra.mxu0 %v116
    %877 = vmatprep.subr.mxu0 %v121
    %878 = vmatpush1.msra.mxu0 %v120
    %879 = vmatprep.subr.mxu0 0.0
    %880 = vmatpush1.msra.mxu0 0.0
    %881 = vmatprep.subr.mxu0 0.0
    %882 = vmatpush1.msra.mxu0 0.0
    %883 = vmatprep.subr.mxu0 0.0
    %884 = vmatpush1.msra.mxu0 0.0
    %885 = vmatprep.subr.mxu0 0.0
    %886 = vmatpush1.msra.mxu0 0.0
    %887 = vmatprep.subr.mxu0 0.0
    %888 = vmatpush1.msra.mxu0 0.0
    %889 = vmatprep.subr.mxu0 0.0
    %890 = vmatpush1.msra.mxu0 0.0
    %891 = vmatprep.subr.mxu0 0.0
    %892 = vmatpush1.msra.mxu0 0.0
    %893 = vmatprep.subr.mxu0 0.0
    %894 = vmatpush1.msra.mxu0 0.0
    %895 = vmatprep.subr.mxu0 0.0
    %896 = vmatpush1.msra.mxu0 0.0
    %897 = vmatprep.subr.mxu0 0.0
    %898 = vmatpush1.msra.mxu0 0.0
    %899 = vmatprep.subr.mxu0 0.0
    %900 = vmatpush1.msra.mxu0 0.0
    %901 = vmatprep.subr.mxu0 0.0
    %902 = vmatpush1.msra.mxu0 0.0
    %903 = vmatprep.subr.mxu0 0.0
    %904 = vmatpush1.msra.mxu0 0.0
    %905 = vmatprep.subr.mxu0 0.0
    %906 = vmatpush1.msra.mxu0 0.0
    %907 = vmatprep.subr.mxu0 0.0
    %908 = vmatpush1.msra.mxu0 0.0
    %909 = vmatprep.subr.mxu0 0.0
    %910 = vmatpush1.msra.mxu0 0.0
    %911 = vmatprep.mubr.f32.mxu0 0.0
    %912 = vmatmul.mubr.f32.gmra.mrb[0].mxu0 %v841
    %v913 = vpop.f32.mrb[0].mxu0
    %v914 = vadd.f32 0.0, %v913
    %v915 = vpop.f32.mrb[0].mxu0
    %v916 = vadd.f32 0.0, %v915
    %917 = vdwg.mxu0
    %918 = vmatprep.subr.mxu0 %v63
    %919 = vmatpush1.msra.mxu0 %v62
    %920 = vmatprep.subr.mxu0 %v67
    %921 = vmatpush1.msra.mxu0 %v66
    %922 = vmatprep.subr.mxu0 %v71
    %923 = vmatpush1.msra.mxu0 %v70
    %924 = vmatprep.subr.mxu0 %v75
    %925 = vmatpush1.msra.mxu0 %v74
    %926 = vmatprep.subr.mxu0 %v79
    %927 = vmatpush1.msra.mxu0 %v78
    %928 = vmatprep.subr.mxu0 %v83
    %929 = vmatpush1.msra.mxu0 %v82
    %930 = vmatprep.subr.mxu0 %v87
    %931 = vmatpush1.msra.mxu0 %v86
    %932 = vmatprep.subr.mxu0 %v91
    %933 = vmatpush1.msra.mxu0 %v90
    %934 = vmatprep.subr.mxu0 %v95
    %935 = vmatpush1.msra.mxu0 %v94
    %936 = vmatprep.subr.mxu0 %v99
    %937 = vmatpush1.msra.mxu0 %v98
    %938 = vmatprep.subr.mxu0 %v103
    %939 = vmatpush1.msra.mxu0 %v102
    %940 = vmatprep.subr.mxu0 %v107
    %941 = vmatpush1.msra.mxu0 %v106
    %942 = vmatprep.subr.mxu0 %v111
    %943 = vmatpush1.msra.mxu0 %v110
    %944 = vmatprep.subr.mxu0 %v115
    %945 = vmatpush1.msra.mxu0 %v114
    %946 = vmatprep.subr.mxu0 %v119
    %947 = vmatpush1.msra.mxu0 %v118
    %948 = vmatprep.subr.mxu0 %v123
    %949 = vmatpush1.msra.mxu0 %v122
    %950 = vmatprep.subr.mxu0 0.0
    %951 = vmatpush1.msra.mxu0 0.0
    %952 = vmatprep.subr.mxu0 0.0
    %953 = vmatpush1.msra.mxu0 0.0
    %954 = vmatprep.subr.mxu0 0.0
    %955 = vmatpush1.msra.mxu0 0.0
    %956 = vmatprep.subr.mxu0 0.0
    %957 = vmatpush1.msra.mxu0 0.0
    %958 = vmatprep.subr.mxu0 0.0
    %959 = vmatpush1.msra.mxu0 0.0
    %960 = vmatprep.subr.mxu0 0.0
    %961 = vmatpush1.msra.mxu0 0.0
    %962 = vmatprep.subr.mxu0 0.0
    %963 = vmatpush1.msra.mxu0 0.0
    %964 = vmatprep.subr.mxu0 0.0
    %965 = vmatpush1.msra.mxu0 0.0
    %966 = vmatprep.subr.mxu0 0.0
    %967 = vmatpush1.msra.mxu0 0.0
    %968 = vmatprep.subr.mxu0 0.0
    %969 = vmatpush1.msra.mxu0 0.0
    %970 = vmatprep.subr.mxu0 0.0
    %971 = vmatpush1.msra.mxu0 0.0
    %972 = vmatprep.subr.mxu0 0.0
    %973 = vmatpush1.msra.mxu0 0.0
    %974 = vmatprep.subr.mxu0 0.0
    %975 = vmatpush1.msra.mxu0 0.0
    %976 = vmatprep.subr.mxu0 0.0
    %977 = vmatpush1.msra.mxu0 0.0
    %978 = vmatprep.subr.mxu0 0.0
    %979 = vmatpush1.msra.mxu0 0.0
    %980 = vmatprep.subr.mxu0 0.0
    %981 = vmatpush1.msra.mxu0 0.0
    %982 = vmatprep.mubr.f32.mxu0 0.0
    %983 = vmatmul.mubr.f32.gmra.mrb[0].mxu0 %v841
    %v984 = vpop.f32.mrb[0].mxu0
    %v985 = vadd.f32 0.0, %v984
    %v986 = vpop.f32.mrb[0].mxu0
    %v987 = vadd.f32 0.0, %v986
    %988 = vdwg.mxu0
    %v989 = vadd.f32 %v843, %v914
    %v990 = vadd.f32 %v844, %v916
    %v991 = vadd.f32 %v845, %v985
    %v992 = vadd.f32 %v846, %v987
    %v993 = vmul.f32 %v989, 0.5
    %v994 = vtanh.pop %v993
    %v995 = vadd.f32 %v994, 1.0
    %v996 = vmul.f32 %v995, 0.5
    %v997 = vmul.f32 %v990, 0.5
    %v998 = vtanh.pop %v997
    %v999 = vadd.f32 %v998, 1.0
    %v1000 = vmul.f32 %v999, 0.5
    %v1001 = vtanh.pop %v991
    %v1002 = vmul.f32 %v992, 0.5
    %v1003 = vtanh.pop %v1002
    %v1004 = vadd.f32 %v1003, 1.0
    %v1005 = vmul.f32 %v1004, 0.5
    %v1006 = vmul.f32 %v1000, %v840
    %v1007 = vmul.f32 %v996, %v1001
    %v1008 = vadd.f32 %v1006, %v1007
    %v1009 = vtanh.pop %v1008
    %v1010 = vmul.f32 %v1005, %v1009
    %s1011 = sadd.s32 %s125, 4
    %v1012 = vstv %s1011
    %vm1013 = vcmp.gt.s32.totalorder %v124, %v1012
    %v1014 = vsel %vm1013, 1, 0
    %1015 = vset.pattern.permute.xlu0 0
    %1016 = vperm.xlu0 %1015, %v1014
    %v1017 = vpop.permute.xlu0 %1016
    %vm1018 = vcmp.eq.s32.totalorder %v1017, 1
    %v1019 = vsel %vm1018, %v1008, %v840
    %v1020 = vsel %vm1018, %v1010, %v841
    %s1021 = scalar_lea.vmem [#allocation4], 160
    %v1022 = vld [vmem:[%s1021] sm:$0xff]
    %v1023 = vld [vmem:[%s1021 + $0x8] sm:$0xff]
    %v1024 = vld [vmem:[%s1021 + $0x10] sm:$0xff]
    %v1025 = vld [vmem:[%s1021 + $0x18] sm:$0xff]
    %1026 = vmatprep.subr.mxu0 %v61
    %1027 = vmatpush1.msra.mxu0 %v60
    %1028 = vmatprep.subr.mxu0 %v65
    %1029 = vmatpush1.msra.mxu0 %v64
    %1030 = vmatprep.subr.mxu0 %v69
    %1031 = vmatpush1.msra.mxu0 %v68
    %1032 = vmatprep.subr.mxu0 %v73
    %1033 = vmatpush1.msra.mxu0 %v72
    %1034 = vmatprep.subr.mxu0 %v77
    %1035 = vmatpush1.msra.mxu0 %v76
    %1036 = vmatprep.subr.mxu0 %v81
    %1037 = vmatpush1.msra.mxu0 %v80
    %1038 = vmatprep.subr.mxu0 %v85
    %1039 = vmatpush1.msra.mxu0 %v84
    %1040 = vmatprep.subr.mxu0 %v89
    %1041 = vmatpush1.msra.mxu0 %v88
    %1042 = vmatprep.subr.mxu0 %v93
    %1043 = vmatpush1.msra.mxu0 %v92
    %1044 = vmatprep.subr.mxu0 %v97
    %1045 = vmatpush1.msra.mxu0 %v96
    %1046 = vmatprep.subr.mxu0 %v101
    %1047 = vmatpush1.msra.mxu0 %v100
    %1048 = vmatprep.subr.mxu0 %v105
    %1049 = vmatpush1.msra.mxu0 %v104
    %1050 = vmatprep.subr.mxu0 %v109
    %1051 = vmatpush1.msra.mxu0 %v108
    %1052 = vmatprep.subr.mxu0 %v113
    %1053 = vmatpush1.msra.mxu0 %v112
    %1054 = vmatprep.subr.mxu0 %v117
    %1055 = vmatpush1.msra.mxu0 %v116
    %1056 = vmatprep.subr.mxu0 %v121
    %1057 = vmatpush1.msra.mxu0 %v120
    %1058 = vmatprep.subr.mxu0 0.0
    %1059 = vmatpush1.msra.mxu0 0.0
    %1060 = vmatprep.subr.mxu0 0.0
    %1061 = vmatpush1.msra.mxu0 0.0
    %1062 = vmatprep.subr.mxu0 0.0
    %1063 = vmatpush1.msra.mxu0 0.0
    %1064 = vmatprep.subr.mxu0 0.0
    %1065 = vmatpush1.msra.mxu0 0.0
    %1066 = vmatprep.subr.mxu0 0.0
    %1067 = vmatpush1.msra.mxu0 0.0
    %1068 = vmatprep.subr.mxu0 0.0
    %1069 = vmatpush1.msra.mxu0 0.0
    %1070 = vmatprep.subr.mxu0 0.0
    %1071 = vmatpush1.msra.mxu0 0.0
    %1072 = vmatprep.subr.mxu0 0.0
    %1073 = vmatpush1.msra.mxu0 0.0
    %1074 = vmatprep.subr.mxu0 0.0
    %1075 = vmatpush1.msra.mxu0 0.0
    %1076 = vmatprep.subr.mxu0 0.0
    %1077 = vmatpush1.msra.mxu0 0.0
    %1078 = vmatprep.subr.mxu0 0.0
    %1079 = vmatpush1.msra.mxu0 0.0
    %1080 = vmatprep.subr.mxu0 0.0
    %1081 = vmatpush1.msra.mxu0 0.0
    %1082 = vmatprep.subr.mxu0 0.0
    %1083 = vmatpush1.msra.mxu0 0.0
    %1084 = vmatprep.subr.mxu0 0.0
    %1085 = vmatpush1.msra.mxu0 0.0
    %1086 = vmatprep.subr.mxu0 0.0
    %1087 = vmatpush1.msra.mxu0 0.0
    %1088 = vmatprep.subr.mxu0 0.0
    %1089 = vmatpush1.msra.mxu0 0.0
    %1090 = vmatprep.mubr.f32.mxu0 0.0
    %1091 = vmatmul.mubr.f32.gmra.mrb[0].mxu0 %v1020
    %v1092 = vpop.f32.mrb[0].mxu0
    %v1093 = vadd.f32 0.0, %v1092
    %v1094 = vpop.f32.mrb[0].mxu0
    %v1095 = vadd.f32 0.0, %v1094
    %1096 = vdwg.mxu0
    %1097 = vmatprep.subr.mxu0 %v63
    %1098 = vmatpush1.msra.mxu0 %v62
    %1099 = vmatprep.subr.mxu0 %v67
    %1100 = vmatpush1.msra.mxu0 %v66
    %1101 = vmatprep.subr.mxu0 %v71
    %1102 = vmatpush1.msra.mxu0 %v70
    %1103 = vmatprep.subr.mxu0 %v75
    %1104 = vmatpush1.msra.mxu0 %v74
    %1105 = vmatprep.subr.mxu0 %v79
    %1106 = vmatpush1.msra.mxu0 %v78
    %1107 = vmatprep.subr.mxu0 %v83
    %1108 = vmatpush1.msra.mxu0 %v82
    %1109 = vmatprep.subr.mxu0 %v87
    %1110 = vmatpush1.msra.mxu0 %v86
    %1111 = vmatprep.subr.mxu0 %v91
    %1112 = vmatpush1.msra.mxu0 %v90
    %1113 = vmatprep.subr.mxu0 %v95
    %1114 = vmatpush1.msra.mxu0 %v94
    %1115 = vmatprep.subr.mxu0 %v99
    %1116 = vmatpush1.msra.mxu0 %v98
    %1117 = vmatprep.subr.mxu0 %v103
    %1118 = vmatpush1.msra.mxu0 %v102
    %1119 = vmatprep.subr.mxu0 %v107
    %1120 = vmatpush1.msra.mxu0 %v106
    %1121 = vmatprep.subr.mxu0 %v111
    %1122 = vmatpush1.msra.mxu0 %v110
    %1123 = vmatprep.subr.mxu0 %v115
    %1124 = vmatpush1.msra.mxu0 %v114
    %1125 = vmatprep.subr.mxu0 %v119
    %1126 = vmatpush1.msra.mxu0 %v118
    %1127 = vmatprep.subr.mxu0 %v123
    %1128 = vmatpush1.msra.mxu0 %v122
    %1129 = vmatprep.subr.mxu0 0.0
    %1130 = vmatpush1.msra.mxu0 0.0
    %1131 = vmatprep.subr.mxu0 0.0
    %1132 = vmatpush1.msra.mxu0 0.0
    %1133 = vmatprep.subr.mxu0 0.0
    %1134 = vmatpush1.msra.mxu0 0.0
    %1135 = vmatprep.subr.mxu0 0.0
    %1136 = vmatpush1.msra.mxu0 0.0
    %1137 = vmatprep.subr.mxu0 0.0
    %1138 = vmatpush1.msra.mxu0 0.0
    %1139 = vmatprep.subr.mxu0 0.0
    %1140 = vmatpush1.msra.mxu0 0.0
    %1141 = vmatprep.subr.mxu0 0.0
    %1142 = vmatpush1.msra.mxu0 0.0
    %1143 = vmatprep.subr.mxu0 0.0
    %1144 = vmatpush1.msra.mxu0 0.0
    %1145 = vmatprep.subr.mxu0 0.0
    %1146 = vmatpush1.msra.mxu0 0.0
    %1147 = vmatprep.subr.mxu0 0.0
    %1148 = vmatpush1.msra.mxu0 0.0
    %1149 = vmatprep.subr.mxu0 0.0
    %1150 = vmatpush1.msra.mxu0 0.0
    %1151 = vmatprep.subr.mxu0 0.0
    %1152 = vmatpush1.msra.mxu0 0.0
    %1153 = vmatprep.subr.mxu0 0.0
    %1154 = vmatpush1.msra.mxu0 0.0
    %1155 = vmatprep.subr.mxu0 0.0
    %1156 = vmatpush1.msra.mxu0 0.0
    %1157 = vmatprep.subr.mxu0 0.0
    %1158 = vmatpush1.msra.mxu0 0.0
    %1159 = vmatprep.subr.mxu0 0.0
    %1160 = vmatpush1.msra.mxu0 0.0
    %1161 = vmatprep.mubr.f32.mxu0 0.0
    %1162 = vmatmul.mubr.f32.gmra.mrb[0].mxu0 %v1020
    %v1163 = vpop.f32.mrb[0].mxu0
    %v1164 = vadd.f32 0.0, %v1163
    %v1165 = vpop.f32.mrb[0].mxu0
    %v1166 = vadd.f32 0.0, %v1165
    %1167 = vdwg.mxu0
    %v1168 = vadd.f32 %v1022, %v1093
    %v1169 = vadd.f32 %v1023, %v1095
    %v1170 = vadd.f32 %v1024, %v1164
    %v1171 = vadd.f32 %v1025, %v1166
    %v1172 = vmul.f32 %v1168, 0.5
    %v1173 = vtanh.pop %v1172
    %v1174 = vadd.f32 %v1173, 1.0
    %v1175 = vmul.f32 %v1174, 0.5
    %v1176 = vmul.f32 %v1169, 0.5
    %v1177 = vtanh.pop %v1176
    %v1178 = vadd.f32 %v1177, 1.0
    %v1179 = vmul.f32 %v1178, 0.5
    %v1180 = vtanh.pop %v1170
    %v1181 = vmul.f32 %v1171, 0.5
    %v1182 = vtanh.pop %v1181
    %v1183 = vadd.f32 %v1182, 1.0
    %v1184 = vmul.f32 %v1183, 0.5
    %v1185 = vmul.f32 %v1179, %v1019
    %v1186 = vmul.f32 %v1175, %v1180
    %v1187 = vadd.f32 %v1185, %v1186
    %v1188 = vtanh.pop %v1187
    %v1189 = vmul.f32 %v1184, %v1188
    %s1190 = sadd.s32 %s125, 5
    %v1191 = vstv %s1190
    %vm1192 = vcmp.gt.s32.totalorder %v124, %v1191
    %v1193 = vsel %vm1192, 1, 0
    %1194 = vset.pattern.permute.xlu0 0
    %1195 = vperm.xlu0 %1194, %v1193
    %v1196 = vpop.permute.xlu0 %1195
    %vm1197 = vcmp.eq.s32.totalorder %v1196, 1
    %v1198 = vsel %vm1197, %v1187, %v1019
    %v1199 = vsel %vm1197, %v1189, %v1020
    %s1200 = scalar_lea.vmem [#allocation4], 192
    %v1201 = vld [vmem:[%s1200] sm:$0xff]
    %v1202 = vld [vmem:[%s1200 + $0x8] sm:$0xff]
    %v1203 = vld [vmem:[%s1200 + $0x10] sm:$0xff]
    %v1204 = vld [vmem:[%s1200 + $0x18] sm:$0xff]
    %1205 = vmatprep.subr.mxu0 %v61
    %1206 = vmatpush1.msra.mxu0 %v60
    %1207 = vmatprep.subr.mxu0 %v65
    %1208 = vmatpush1.msra.mxu0 %v64
    %1209 = vmatprep.subr.mxu0 %v69
    %1210 = vmatpush1.msra.mxu0 %v68
    %1211 = vmatprep.subr.mxu0 %v73
    %1212 = vmatpush1.msra.mxu0 %v72
    %1213 = vmatprep.subr.mxu0 %v77
    %1214 = vmatpush1.msra.mxu0 %v76
    %1215 = vmatprep.subr.mxu0 %v81
    %1216 = vmatpush1.msra.mxu0 %v80
    %1217 = vmatprep.subr.mxu0 %v85
    %1218 = vmatpush1.msra.mxu0 %v84
    %1219 = vmatprep.subr.mxu0 %v89
    %1220 = vmatpush1.msra.mxu0 %v88
    %1221 = vmatprep.subr.mxu0 %v93
    %1222 = vmatpush1.msra.mxu0 %v92
    %1223 = vmatprep.subr.mxu0 %v97
    %1224 = vmatpush1.msra.mxu0 %v96
    %1225 = vmatprep.subr.mxu0 %v101
    %1226 = vmatpush1.msra.mxu0 %v100
    %1227 = vmatprep.subr.mxu0 %v105
    %1228 = vmatpush1.msra.mxu0 %v104
    %1229 = vmatprep.subr.mxu0 %v109
    %1230 = vmatpush1.msra.mxu0 %v108
    %1231 = vmatprep.subr.mxu0 %v113
    %1232 = vmatpush1.msra.mxu0 %v112
    %1233 = vmatprep.subr.mxu0 %v117
    %1234 = vmatpush1.msra.mxu0 %v116
    %1235 = vmatprep.subr.mxu0 %v121
    %1236 = vmatpush1.msra.mxu0 %v120
    %1237 = vmatprep.subr.mxu0 0.0
    %1238 = vmatpush1.msra.mxu0 0.0
    %1239 = vmatprep.subr.mxu0 0.0
    %1240 = vmatpush1.msra.mxu0 0.0
    %1241 = vmatprep.subr.mxu0 0.0
    %1242 = vmatpush1.msra.mxu0 0.0
    %1243 = vmatprep.subr.mxu0 0.0
    %1244 = vmatpush1.msra.mxu0 0.0
    %1245 = vmatprep.subr.mxu0 0.0
    %1246 = vmatpush1.msra.mxu0 0.0
    %1247 = vmatprep.subr.mxu0 0.0
    %1248 = vmatpush1.msra.mxu0 0.0
    %1249 = vmatprep.subr.mxu0 0.0
    %1250 = vmatpush1.msra.mxu0 0.0
    %1251 = vmatprep.subr.mxu0 0.0
    %1252 = vmatpush1.msra.mxu0 0.0
    %1253 = vmatprep.subr.mxu0 0.0
    %1254 = vmatpush1.msra.mxu0 0.0
    %1255 = vmatprep.subr.mxu0 0.0
    %1256 = vmatpush1.msra.mxu0 0.0
    %1257 = vmatprep.subr.mxu0 0.0
    %1258 = vmatpush1.msra.mxu0 0.0
    %1259 = vmatprep.subr.mxu0 0.0
    %1260 = vmatpush1.msra.mxu0 0.0
    %1261 = vmatprep.subr.mxu0 0.0
    %1262 = vmatpush1.msra.mxu0 0.0
    %1263 = vmatprep.subr.mxu0 0.0
    %1264 = vmatpush1.msra.mxu0 0.0
    %1265 = vmatprep.subr.mxu0 0.0
    %1266 = vmatpush1.msra.mxu0 0.0
    %1267 = vmatprep.subr.mxu0 0.0
    %1268 = vmatpush1.msra.mxu0 0.0
    %1269 = vmatprep.mubr.f32.mxu0 0.0
    %1270 = vmatmul.mubr.f32.gmra.mrb[0].mxu0 %v1199
    %v1271 = vpop.f32.mrb[0].mxu0
    %v1272 = vadd.f32 0.0, %v1271
    %v1273 = vpop.f32.mrb[0].mxu0
    %v1274 = vadd.f32 0.0, %v1273
    %1275 = vdwg.mxu0
    %1276 = vmatprep.subr.mxu0 %v63
    %1277 = vmatpush1.msra.mxu0 %v62
    %1278 = vmatprep.subr.mxu0 %v67
    %1279 = vmatpush1.msra.mxu0 %v66
    %1280 = vmatprep.subr.mxu0 %v71
    %1281 = vmatpush1.msra.mxu0 %v70
    %1282 = vmatprep.subr.mxu0 %v75
    %1283 = vmatpush1.msra.mxu0 %v74
    %1284 = vmatprep.subr.mxu0 %v79
    %1285 = vmatpush1.msra.mxu0 %v78
    %1286 = vmatprep.subr.mxu0 %v83
    %1287 = vmatpush1.msra.mxu0 %v82
    %1288 = vmatprep.subr.mxu0 %v87
    %1289 = vmatpush1.msra.mxu0 %v86
    %1290 = vmatprep.subr.mxu0 %v91
    %1291 = vmatpush1.msra.mxu0 %v90
    %1292 = vmatprep.subr.mxu0 %v95
    %1293 = vmatpush1.msra.mxu0 %v94
    %1294 = vmatprep.subr.mxu0 %v99
    %1295 = vmatpush1.msra.mxu0 %v98
    %1296 = vmatprep.subr.mxu0 %v103
    %1297 = vmatpush1.msra.mxu0 %v102
    %1298 = vmatprep.subr.mxu0 %v107
    %1299 = vmatpush1.msra.mxu0 %v106
    %1300 = vmatprep.subr.mxu0 %v111
    %1301 = vmatpush1.msra.mxu0 %v110
    %1302 = vmatprep.subr.mxu0 %v115
    %1303 = vmatpush1.msra.mxu0 %v114
    %1304 = vmatprep.subr.mxu0 %v119
    %1305 = vmatpush1.msra.mxu0 %v118
    %1306 = vmatprep.subr.mxu0 %v123
    %1307 = vmatpush1.msra.mxu0 %v122
    %1308 = vmatprep.subr.mxu0 0.0
    %1309 = vmatpush1.msra.mxu0 0.0
    %1310 = vmatprep.subr.mxu0 0.0
    %1311 = vmatpush1.msra.mxu0 0.0
    %1312 = vmatprep.subr.mxu0 0.0
    %1313 = vmatpush1.msra.mxu0 0.0
    %1314 = vmatprep.subr.mxu0 0.0
    %1315 = vmatpush1.msra.mxu0 0.0
    %1316 = vmatprep.subr.mxu0 0.0
    %1317 = vmatpush1.msra.mxu0 0.0
    %1318 = vmatprep.subr.mxu0 0.0
    %1319 = vmatpush1.msra.mxu0 0.0
    %1320 = vmatprep.subr.mxu0 0.0
    %1321 = vmatpush1.msra.mxu0 0.0
    %1322 = vmatprep.subr.mxu0 0.0
    %1323 = vmatpush1.msra.mxu0 0.0
    %1324 = vmatprep.subr.mxu0 0.0
    %1325 = vmatpush1.msra.mxu0 0.0
    %1326 = vmatprep.subr.mxu0 0.0
    %1327 = vmatpush1.msra.mxu0 0.0
    %1328 = vmatprep.subr.mxu0 0.0
    %1329 = vmatpush1.msra.mxu0 0.0
    %1330 = vmatprep.subr.mxu0 0.0
    %1331 = vmatpush1.msra.mxu0 0.0
    %1332 = vmatprep.subr.mxu0 0.0
    %1333 = vmatpush1.msra.mxu0 0.0
    %1334 = vmatprep.subr.mxu0 0.0
    %1335 = vmatpush1.msra.mxu0 0.0
    %1336 = vmatprep.subr.mxu0 0.0
    %1337 = vmatpush1.msra.mxu0 0.0
    %1338 = vmatprep.subr.mxu0 0.0
    %1339 = vmatpush1.msra.mxu0 0.0
    %1340 = vmatprep.mubr.f32.mxu0 0.0
    %1341 = vmatmul.mubr.f32.gmra.mrb[0].mxu0 %v1199
    %v1342 = vpop.f32.mrb[0].mxu0
    %v1343 = vadd.f32 0.0, %v1342
    %v1344 = vpop.f32.mrb[0].mxu0
    %v1345 = vadd.f32 0.0, %v1344
    %1346 = vdwg.mxu0
    %v1347 = vadd.f32 %v1201, %v1272
    %v1348 = vadd.f32 %v1202, %v1274
    %v1349 = vadd.f32 %v1203, %v1343
    %v1350 = vadd.f32 %v1204, %v1345
    %v1351 = vmul.f32 %v1347, 0.5
    %v1352 = vtanh.pop %v1351
    %v1353 = vadd.f32 %v1352, 1.0
    %v1354 = vmul.f32 %v1353, 0.5
    %v1355 = vmul.f32 %v1348, 0.5
    %v1356 = vtanh.pop %v1355
    %v1357 = vadd.f32 %v1356, 1.0
    %v1358 = vmul.f32 %v1357, 0.5
    %v1359 = vtanh.pop %v1349
    %v1360 = vmul.f32 %v1350, 0.5
    %v1361 = vtanh.pop %v1360
    %v1362 = vadd.f32 %v1361, 1.0
    %v1363 = vmul.f32 %v1362, 0.5
    %v1364 = vmul.f32 %v1358, %v1198
    %v1365 = vmul.f32 %v1354, %v1359
    %v1366 = vadd.f32 %v1364, %v1365
    %v1367 = vtanh.pop %v1366
    %v1368 = vmul.f32 %v1363, %v1367
    %s1369 = sadd.s32 %s125, 6
    %v1370 = vstv %s1369
    %vm1371 = vcmp.gt.s32.totalorder %v124, %v1370
    %v1372 = vsel %vm1371, 1, 0
    %1373 = vset.pattern.permute.xlu0 0
    %1374 = vperm.xlu0 %1373, %v1372
    %v1375 = vpop.permute.xlu0 %1374
    %vm1376 = vcmp.eq.s32.totalorder %v1375, 1
    %v1377 = vsel %vm1376, %v1366, %v1198
    %v1378 = vsel %vm1376, %v1368, %v1199
    %s1379 = scalar_lea.vmem [#allocation4], 224
    %v1380 = vld [vmem:[%s1379] sm:$0xff]
    %v1381 = vld [vmem:[%s1379 + $0x8] sm:$0xff]
    %v1382 = vld [vmem:[%s1379 + $0x10] sm:$0xff]
    %v1383 = vld [vmem:[%s1379 + $0x18] sm:$0xff]
    %1384 = vmatprep.subr.mxu0 %v61
    %1385 = vmatpush1.msra.mxu0 %v60
    %1386 = vmatprep.subr.mxu0 %v65
    %1387 = vmatpush1.msra.mxu0 %v64
    %1388 = vmatprep.subr.mxu0 %v69
    %1389 = vmatpush1.msra.mxu0 %v68
    %1390 = vmatprep.subr.mxu0 %v73
    %1391 = vmatpush1.msra.mxu0 %v72
    %1392 = vmatprep.subr.mxu0 %v77
    %1393 = vmatpush1.msra.mxu0 %v76
    %1394 = vmatprep.subr.mxu0 %v81
    %1395 = vmatpush1.msra.mxu0 %v80
    %1396 = vmatprep.subr.mxu0 %v85
    %1397 = vmatpush1.msra.mxu0 %v84
    %1398 = vmatprep.subr.mxu0 %v89
    %1399 = vmatpush1.msra.mxu0 %v88
    %1400 = vmatprep.subr.mxu0 %v93
    %1401 = vmatpush1.msra.mxu0 %v92
    %1402 = vmatprep.subr.mxu0 %v97
    %1403 = vmatpush1.msra.mxu0 %v96
    %1404 = vmatprep.subr.mxu0 %v101
    %1405 = vmatpush1.msra.mxu0 %v100
    %1406 = vmatprep.subr.mxu0 %v105
    %1407 = vmatpush1.msra.mxu0 %v104
    %1408 = vmatprep.subr.mxu0 %v109
    %1409 = vmatpush1.msra.mxu0 %v108
    %1410 = vmatprep.subr.mxu0 %v113
    %1411 = vmatpush1.msra.mxu0 %v112
    %1412 = vmatprep.subr.mxu0 %v117
    %1413 = vmatpush1.msra.mxu0 %v116
    %1414 = vmatprep.subr.mxu0 %v121
    %1415 = vmatpush1.msra.mxu0 %v120
    %1416 = vmatprep.subr.mxu0 0.0
    %1417 = vmatpush1.msra.mxu0 0.0
    %1418 = vmatprep.subr.mxu0 0.0
    %1419 = vmatpush1.msra.mxu0 0.0
    %1420 = vmatprep.subr.mxu0 0.0
    %1421 = vmatpush1.msra.mxu0 0.0
    %1422 = vmatprep.subr.mxu0 0.0
    %1423 = vmatpush1.msra.mxu0 0.0
    %1424 = vmatprep.subr.mxu0 0.0
    %1425 = vmatpush1.msra.mxu0 0.0
    %1426 = vmatprep.subr.mxu0 0.0
    %1427 = vmatpush1.msra.mxu0 0.0
    %1428 = vmatprep.subr.mxu0 0.0
    %1429 = vmatpush1.msra.mxu0 0.0
    %1430 = vmatprep.subr.mxu0 0.0
    %1431 = vmatpush1.msra.mxu0 0.0
    %1432 = vmatprep.subr.mxu0 0.0
    %1433 = vmatpush1.msra.mxu0 0.0
    %1434 = vmatprep.subr.mxu0 0.0
    %1435 = vmatpush1.msra.mxu0 0.0
    %1436 = vmatprep.subr.mxu0 0.0
    %1437 = vmatpush1.msra.mxu0 0.0
    %1438 = vmatprep.subr.mxu0 0.0
    %1439 = vmatpush1.msra.mxu0 0.0
    %1440 = vmatprep.subr.mxu0 0.0
    %1441 = vmatpush1.msra.mxu0 0.0
    %1442 = vmatprep.subr.mxu0 0.0
    %1443 = vmatpush1.msra.mxu0 0.0
    %1444 = vmatprep.subr.mxu0 0.0
    %1445 = vmatpush1.msra.mxu0 0.0
    %1446 = vmatprep.subr.mxu0 0.0
    %1447 = vmatpush1.msra.mxu0 0.0
    %1448 = vmatprep.mubr.f32.mxu0 0.0
    %1449 = vmatmul.mubr.f32.gmra.mrb[0].mxu0 %v1378
    %v1450 = vpop.f32.mrb[0].mxu0
    %v1451 = vadd.f32 0.0, %v1450
    %v1452 = vpop.f32.mrb[0].mxu0
    %v1453 = vadd.f32 0.0, %v1452
    %1454 = vdwg.mxu0
    %1455 = vmatprep.subr.mxu0 %v63
    %1456 = vmatpush1.msra.mxu0 %v62
    %1457 = vmatprep.subr.mxu0 %v67
    %1458 = vmatpush1.msra.mxu0 %v66
    %1459 = vmatprep.subr.mxu0 %v71
    %1460 = vmatpush1.msra.mxu0 %v70
    %1461 = vmatprep.subr.mxu0 %v75
    %1462 = vmatpush1.msra.mxu0 %v74
    %1463 = vmatprep.subr.mxu0 %v79
    %1464 = vmatpush1.msra.mxu0 %v78
    %1465 = vmatprep.subr.mxu0 %v83
    %1466 = vmatpush1.msra.mxu0 %v82
    %1467 = vmatprep.subr.mxu0 %v87
    %1468 = vmatpush1.msra.mxu0 %v86
    %1469 = vmatprep.subr.mxu0 %v91
    %1470 = vmatpush1.msra.mxu0 %v90
    %1471 = vmatprep.subr.mxu0 %v95
    %1472 = vmatpush1.msra.mxu0 %v94
    %1473 = vmatprep.subr.mxu0 %v99
    %1474 = vmatpush1.msra.mxu0 %v98
    %1475 = vmatprep.subr.mxu0 %v103
    %1476 = vmatpush1.msra.mxu0 %v102
    %1477 = vmatprep.subr.mxu0 %v107
    %1478 = vmatpush1.msra.mxu0 %v106
    %1479 = vmatprep.subr.mxu0 %v111
    %1480 = vmatpush1.msra.mxu0 %v110
    %1481 = vmatprep.subr.mxu0 %v115
    %1482 = vmatpush1.msra.mxu0 %v114
    %1483 = vmatprep.subr.mxu0 %v119
    %1484 = vmatpush1.msra.mxu0 %v118
    %1485 = vmatprep.subr.mxu0 %v123
    %1486 = vmatpush1.msra.mxu0 %v122
    %1487 = vmatprep.subr.mxu0 0.0
    %1488 = vmatpush1.msra.mxu0 0.0
    %1489 = vmatprep.subr.mxu0 0.0
    %1490 = vmatpush1.msra.mxu0 0.0
    %1491 = vmatprep.subr.mxu0 0.0
    %1492 = vmatpush1.msra.mxu0 0.0
    %1493 = vmatprep.subr.mxu0 0.0
    %1494 = vmatpush1.msra.mxu0 0.0
    %1495 = vmatprep.subr.mxu0 0.0
    %1496 = vmatpush1.msra.mxu0 0.0
    %1497 = vmatprep.subr.mxu0 0.0
    %1498 = vmatpush1.msra.mxu0 0.0
    %1499 = vmatprep.subr.mxu0 0.0
    %1500 = vmatpush1.msra.mxu0 0.0
    %1501 = vmatprep.subr.mxu0 0.0
    %1502 = vmatpush1.msra.mxu0 0.0
    %1503 = vmatprep.subr.mxu0 0.0
    %1504 = vmatpush1.msra.mxu0 0.0
    %1505 = vmatprep.subr.mxu0 0.0
    %1506 = vmatpush1.msra.mxu0 0.0
    %1507 = vmatprep.subr.mxu0 0.0
    %1508 = vmatpush1.msra.mxu0 0.0
    %1509 = vmatprep.subr.mxu0 0.0
    %1510 = vmatpush1.msra.mxu0 0.0
    %1511 = vmatprep.subr.mxu0 0.0
    %1512 = vmatpush1.msra.mxu0 0.0
    %1513 = vmatprep.subr.mxu0 0.0
    %1514 = vmatpush1.msra.mxu0 0.0
    %1515 = vmatprep.subr.mxu0 0.0
    %1516 = vmatpush1.msra.mxu0 0.0
    %1517 = vmatprep.subr.mxu0 0.0
    %1518 = vmatpush1.msra.mxu0 0.0
    %1519 = vmatprep.mubr.f32.mxu0 0.0
    %1520 = vmatmul.mubr.f32.gmra.mrb[0].mxu0 %v1378
    %v1521 = vpop.f32.mrb[0].mxu0
    %v1522 = vadd.f32 0.0, %v1521
    %v1523 = vpop.f32.mrb[0].mxu0
    %v1524 = vadd.f32 0.0, %v1523
    %1525 = vdwg.mxu0
    %v1526 = vadd.f32 %v1380, %v1451
    %v1527 = vadd.f32 %v1381, %v1453
    %v1528 = vadd.f32 %v1382, %v1522
    %v1529 = vadd.f32 %v1383, %v1524
    %v1530 = vmul.f32 %v1526, 0.5
    %v1531 = vtanh.pop %v1530
    %v1532 = vadd.f32 %v1531, 1.0
    %v1533 = vmul.f32 %v1532, 0.5
    %v1534 = vmul.f32 %v1527, 0.5
    %v1535 = vtanh.pop %v1534
    %v1536 = vadd.f32 %v1535, 1.0
    %v1537 = vmul.f32 %v1536, 0.5
    %v1538 = vtanh.pop %v1528
    %v1539 = vmul.f32 %v1529, 0.5
    %v1540 = vtanh.pop %v1539
    %v1541 = vadd.f32 %v1540, 1.0
    %v1542 = vmul.f32 %v1541, 0.5
    %v1543 = vmul.f32 %v1537, %v1377
    %v1544 = vmul.f32 %v1533, %v1538
    %v1545 = vadd.f32 %v1543, %v1544
    %v1546 = vtanh.pop %v1545
    %v1547 = vmul.f32 %v1542, %v1546
    %s1548 = sadd.s32 %s125, 7
    %v1549 = vstv %s1548
    %vm1550 = vcmp.gt.s32.totalorder %v124, %v1549
    %v1551 = vsel %vm1550, 1, 0
    %1552 = vset.pattern.permute.xlu0 0
    %1553 = vperm.xlu0 %1552, %v1551
    %v1554 = vpop.permute.xlu0 %1553
    %vm1555 = vcmp.eq.s32.totalorder %v1554, 1
    %v1556 = vsel %vm1555, %v1545, %v1377
    %v1557 = vsel %vm1555, %v1547, %v1378
    %1558 = vst [vmem:[#allocation2] sm:$0xff] %v1557
    %1559 = vst [vmem:[#allocation3] sm:$0xff] %v1556
    %1560 = vst [vmem:[#allocation10] sm:$0xff] %v1557
    // Predicated region
    $region30: #{lstm_forward_pallas.3} parent=1 // pred_check
      _
    $region31: #{lstm_forward_pallas.3} parent=1 // pred_check_branch
      %1562 = sbr.rel (0) target = $region33
    $region32: #{lstm_forward_pallas.3} parent=1 // pred_region
      %s1564 = ssub.s32 128, 128
      %1565 = vsyncadd [#allocation6], %s1564
      %s1567 = sshll.u32 [#allocation10], 4
      %s1568 = int_to_ptr.vmem [resolvable:$true] %s1567
      %1570 = dma.vmem_to_hbm [thread:$0]  %s1568, 128, %s3, [#allocation6]
    $region33: #{lstm_forward_pallas.3} parent=1 // pred_fallthru
      _
    // Predicated region
    $region34: #{lstm_forward_pallas.3} parent=1 // pred_check
      _
    $region35: #{lstm_forward_pallas.3} parent=1 // pred_check_branch
      %1572 = sbr.rel (0) target = $region37
    $region36: #{lstm_forward_pallas.3} parent=1 // pred_region
      %1573 = dma.done [#allocation6], 128
    $region37: #{lstm_forward_pallas.3} parent=1 // pred_fallthru
      _
    %1574 = vsyncpa [#allocation5], 1
    %1575 = vsyncpa [#allocation8], 1
    %1576 = vsyncpa [#allocation6], 1

</llo_original>
